<compile_context>
chip_gen: v6e
topology: v6e:2x2x1
jax: 0.10.0
libtpu: 0.0.40
codegen_flags: <defaults>
</compile_context>

<pallas_src>
import functools

import jax
import jax.numpy as jnp
from jax import lax
from jax.experimental import pallas as pl
from jax.experimental.pallas import tpu as pltpu


# ---- "opt" hyper-parameters (fixed, deterministic) -------------------------
OT_METHOD = "cos"     # compute_similarity path implemented in the kernel
OT_GAMMA = 1.0
OT_EPS = 1e-6
OT_ITER = 20
OT_POWER = 2          # integer power so pow() is well defined on negative cos
S_DIM = 64
T_DIM = 64
FEAT_DIM = 32
F_NORMALIZE_EPS = 1e-12   # torch F.normalize clamp


def _otloss_kernel(ft_ref, fs_ref, loss_ref, p_ref, m_ref, *,
                   ot_power, gamma, ot_eps, maxiters,
                   early_break, approx_recip, mxu_dtype, unroll):
    ft = ft_ref[0].astype(jnp.float32)          # (n, d)
    fs = fs_ref[0].astype(jnp.float32)          # (n, d)

    # ---- cosine similarity (cross block of cos_sim(cat(ft, fs))) ----------
    ft_norm = jnp.sqrt(jnp.sum(ft * ft, axis=1, keepdims=True))
    fs_norm = jnp.sqrt(jnp.sum(fs * fs, axis=1, keepdims=True))
    ft_n = ft / jnp.maximum(ft_norm, F_NORMALIZE_EPS)
    fs_n = fs / jnp.maximum(fs_norm, F_NORMALIZE_EPS)
    # Contract the feature dim of both operands directly (A @ B^T, no relayout
    # of fs_n).  Operands in bf16 by default (f32 accumulation on the MXU).
    M = lax.dot_general(ft_n.astype(mxu_dtype), fs_n.astype(mxu_dtype),
                        (((1,), (1,)), ((), ())),
                        preferred_element_type=jnp.float32)

    # ---- minmax_pow: X**p ; X -= rowmin ; X /= rowmax(shifted) ------------
    M = M ** ot_power
    M = M - jnp.min(M, axis=-1, keepdims=True)
    # Same divide-by-zero hazard as the torch reference when a row is constant.
    M = M / jnp.max(M, axis=-1, keepdims=True)
    m_ref[0] = M

    # ---- sinkhorn(1 - M): scaling-vector form ------------------------------
    H, W = M.shape
    r = 1.0 / H
    c = 1.0 / W
    # rowmax(M) == 1 exactly after the division above, so rowmin(1 - M) == 0 and
    # torch's exp(-gamma*(Mneg - rowmin(Mneg))) reduces to exp(-gamma*(1 - M)).
    K = jnp.exp(-gamma * (1.0 - M))
    # Hoisted once so BOTH per-iteration matvecs stream the NxN matrix as MXU
    # activations with a tiny (N,1) weight push — no NxN weight reload per step.
    K_T = jnp.transpose(K)

    def _recip(x):
        return pl.reciprocal(x, approx=True) if approx_recip else 1.0 / x

    def body(_, carry):
        u, v, done = carry
        # alpha = rowsum(diag(u_prev) K diag(v)) / u_prev  ==  K @ v
        alpha = jnp.dot(K, v, preferred_element_type=jnp.float32)     # (H,1)
        u = r * _recip(alpha)                                         # (H,1)
        s = jnp.dot(K_T, u, preferred_element_type=jnp.float32)       # (W,1)
        if early_break:
            # torch: beta = colsum(row-normalized P) = v * (K^T u); break BEFORE
            # the column update on convergence -> freeze v once done. u needs no
            # guard: with frozen v it recomputes to the identical value.
            conv = jnp.max(jnp.abs(v * s - c)) <= ot_eps
            done = jnp.logical_or(done, conv)
            v = jnp.where(done, v, c * _recip(s))
        else:
            v = c * _recip(s)
        return u, v, done

    u0 = jnp.ones((H, 1), jnp.float32)
    v0 = jnp.ones((W, 1), jnp.float32)
    u, v, _ = lax.fori_loop(0, maxiters, body, (u0, v0, jnp.bool_(False)),
                            unroll=unroll)

    # Materialize the plan once: P = diag(u) K diag(v).
    P = (u * K) * jnp.transpose(v)
    p_ref[0] = P

    # ---- loss_ot = sum(P * M) ----------------------------------------------
    loss_ref[...] = jnp.reshape(jnp.sum(P * M), (1, 1, 1))


def _vmem_capacity_bytes(default=64 * 2**20):
    """Physical VMEM of the current chip (falls back to the v7x minimum)."""
    try:
        info = pltpu.get_tpu_info()
    except Exception:
        return default
    for name in ("vmem_capacity_bytes", "vmem_size_bytes", "vmem_bytes"):
        val = getattr(info, name, None)
        if val:
            return int(val)
    return default


def ot_loss_batched(ft, fs, *, ot_power=OT_POWER, gamma=OT_GAMMA,
                    ot_eps=OT_EPS, maxiters=OT_ITER,
                    early_break=True, approx_recip=True,
                    mxu_dtype=jnp.bfloat16):
    """ft, fs: (B, N, D) float32. Returns (loss (B,), P (B,N,N), M (B,N,N))."""
    assert ft.shape == fs.shape and ft.ndim == 3
    B, n, d = ft.shape

    # Full unroll only while the body stays small enough for the vreg file.
    unroll = True if n <= 256 else 2

    kernel = functools.partial(
        _otloss_kernel, ot_power=ot_power, gamma=gamma, ot_eps=ot_eps,
        maxiters=maxiters, early_break=early_break, approx_recip=approx_recip,
        mxu_dtype=mxu_dtype, unroll=unroll)

    # Live NxN f32 buffers per grid step: M, K, K_T, P, one transient, plus
    # double-buffered P/M output windows  (~8-10 x N^2 x 4B).  With that count
    # the per-instance ceiling is roughly N ~ 1.2k on v7x (64 MiB) and
    # N ~ 1.7k on v5e/v6e (128 MiB); beyond that, tile the K construction.
    est_bytes = 10 * n * n * 4 + 4 * n * d * 4 + (2 << 20)
    cap = _vmem_capacity_bytes()
    vmem_limit = int(min(cap - (8 << 20), max(32 << 20, est_bytes)))
    vmem_limit = max(vmem_limit, 16 << 20)

    cost = pl.CostEstimate(
        flops=int(B * (2 * n * n * d + maxiters * 4 * n * n + 12 * n * n)),
        transcendentals=int(B * (n * n + maxiters * 2 * n)),
        bytes_accessed=int(B * (2 * n * d * 4 + 2 * n * n * 4 + 4)),
    )

    in_spec = pl.BlockSpec((1, n, d), lambda b: (b, 0, 0))
    pm_spec = pl.BlockSpec((1, n, n), lambda b: (b, 0, 0))
    loss_spec = pl.BlockSpec((1, 1, 1), lambda b: (b, 0, 0))

    loss, P, M = pl.pallas_call(
        kernel,
        grid=(B,),
        in_specs=[in_spec, in_spec],
        out_specs=(loss_spec, pm_spec, pm_spec),
        out_shape=(
            jax.ShapeDtypeStruct((B, 1, 1), jnp.float32),   # loss
            jax.ShapeDtypeStruct((B, n, n), jnp.float32),   # P
            jax.ShapeDtypeStruct((B, n, n), jnp.float32),   # M
        ),
        compiler_params=pltpu.CompilerParams(
            dimension_semantics=("parallel",),
            vmem_limit_bytes=vmem_limit),
        cost_estimate=cost,
    )(ft, fs)
    return loss[:, 0, 0], P, M


def ot_loss(ft, fs, **kwargs):
    """ft, fs: (N, D) float32. Returns (loss, P, M) like OTLoss.forward."""
    assert ft.shape == fs.shape and ft.ndim == 2
    loss, P, M = ot_loss_batched(ft[None], fs[None], **kwargs)
    return loss[0], P[0], M[0]


def make_embed_params(key, dim_in, dim_out):
    """Deterministic init of the (unused-in-forward) Embed linear layers."""
    kw, kb = jax.random.split(key)
    bound = 1.0 / jnp.sqrt(dim_in)
    w = jax.random.uniform(kw, (dim_out, dim_in), jnp.float32, -bound, bound)
    b = jax.random.uniform(kb, (dim_out,), jnp.float32, -bound, bound)
    return w, b


if __name__ == "__main__":
    key = jax.random.PRNGKey(0)
    k_ft, k_fs, k_es, k_et, k_b = jax.random.split(key, 5)

    # Module parameters (present in __init__, never used by forward()).
    embed_s_params = make_embed_params(k_es, S_DIM, FEAT_DIM)
    embed_t_params = make_embed_params(k_et, T_DIM, FEAT_DIM)

    # Single OT instance, matching OTLoss.forward(ft, fs): n=8 samples, D=32.
    n, d = 8, FEAT_DIM
    ft = jax.random.normal(k_ft, (n, d), jnp.float32)
    fs = jax.random.normal(k_fs, (n, d), jnp.float32)

    loss, P, M = ot_loss(ft, fs)
    jax.block_until_ready((loss, P, M))
    assert loss.shape == () and P.shape == (n, n) and M.shape == (n, n)
    assert bool(jnp.isfinite(loss))

    # Batched path: grid=(B,) with "parallel" semantics (keeps both v7x
    # TensorCores busy and amortizes per-call overhead).
    kb1, kb2 = jax.random.split(k_b)
    ftb = jax.random.normal(kb1, (2, n, d), jnp.float32)
    fsb = jax.random.normal(kb2, (2, n, d), jnp.float32)
    lb, Pb, Mb = ot_loss_batched(ftb, fsb)
    jax.block_until_ready((lb, Pb, Mb))
    assert lb.shape == (2,) and Pb.shape == (2, n, n) and Mb.shape == (2, n, n)

    print("KERNEL_OK")
</pallas_src>

<mosaic_0001>
module attributes {stable_mosaic.version = 11 : i64} {
  func.func @_otloss_kernel(%arg0: i32, %arg1: memref<1x8x32xf32, #tpu.memory_space<vmem>>, %arg2: memref<1x8x32xf32, #tpu.memory_space<vmem>>, %arg3: memref<1x1x1xf32, #tpu.memory_space<vmem>>, %arg4: memref<1x8x8xf32, #tpu.memory_space<vmem>>, %arg5: memref<1x8x8xf32, #tpu.memory_space<vmem>>) attributes {dimension_semantics = [#tpu.dimension_semantics<parallel>], iteration_bounds = array<i64: 1>, scalar_prefetch = 0 : i64, scratch_operands = 0 : i64, tpu.core_type = #tpu.core_type<tc>, window_params = [{transform_indices = @transform_0, window_bounds = array<i64: 1, 8, 32>}, {transform_indices = @transform_1, window_bounds = array<i64: 1, 8, 32>}, {transform_indices = @transform_2, window_bounds = array<i64: 1, 1, 1>}, {transform_indices = @transform_3, window_bounds = array<i64: 1, 8, 8>}, {transform_indices = @transform_4, window_bounds = array<i64: 1, 8, 8>}]} {
    %c0 = arith.constant 0 : index
    %c0_0 = arith.constant 0 : index
    %c0_1 = arith.constant 0 : index
    %0 = vector.load %arg1[%c0, %c0_0, %c0_1] : memref<1x8x32xf32, #tpu.memory_space<vmem>>, vector<1x8x32xf32>
    %1 = vector.shape_cast %0 : vector<1x8x32xf32> to vector<8x32xf32>
    %c0_2 = arith.constant 0 : index
    %c0_3 = arith.constant 0 : index
    %c0_4 = arith.constant 0 : index
    %2 = vector.load %arg2[%c0_2, %c0_3, %c0_4] : memref<1x8x32xf32, #tpu.memory_space<vmem>>, vector<1x8x32xf32>
    %3 = vector.shape_cast %2 : vector<1x8x32xf32> to vector<8x32xf32>
    %4 = arith.mulf %1, %1 : vector<8x32xf32>
    %cst = arith.constant dense<0.000000e+00> : vector<8xf32>
    %5 = vector.multi_reduction <add>, %4, %cst [1] : vector<8x32xf32> to vector<8xf32>
    %6 = vector.shape_cast %5 : vector<8xf32> to vector<8x1xf32>
    %7 = math.sqrt %6 : vector<8x1xf32>
    %8 = arith.mulf %3, %3 : vector<8x32xf32>
    %cst_5 = arith.constant dense<0.000000e+00> : vector<8xf32>
    %9 = vector.multi_reduction <add>, %8, %cst_5 [1] : vector<8x32xf32> to vector<8xf32>
    %10 = vector.shape_cast %9 : vector<8xf32> to vector<8x1xf32>
    %11 = math.sqrt %10 : vector<8x1xf32>
    %cst_6 = arith.constant 9.99999996E-13 : f32
    %12 = vector.broadcast %cst_6 : f32 to vector<8x1xf32>
    %13 = arith.maximumf %7, %12 : vector<8x1xf32>
    %14 = vector.broadcast %13 : vector<8x1xf32> to vector<8x32xf32>
    %15 = arith.divf %1, %14 : vector<8x32xf32>
    %cst_7 = arith.constant 9.99999996E-13 : f32
    %16 = vector.broadcast %cst_7 : f32 to vector<8x1xf32>
    %17 = arith.maximumf %11, %16 : vector<8x1xf32>
    %18 = vector.broadcast %17 : vector<8x1xf32> to vector<8x32xf32>
    %19 = arith.divf %3, %18 : vector<8x32xf32>
    %20 = arith.truncf %15 : vector<8x32xf32> to vector<8x32xbf16>
    %21 = arith.truncf %19 : vector<8x32xf32> to vector<8x32xbf16>
    %cst_8 = arith.constant dense<0.000000e+00> : vector<8x8xf32>
    %22 = tpu.matmul %20, %21, %cst_8 {dimension_numbers = #tpu.dot_dimension_numbers<[1], [1], [0], [0], [0, 0, 1, 0], [], []>} : vector<8x32xbf16>, vector<8x32xbf16>, vector<8x8xf32> -> vector<8x8xf32>
    %23 = arith.mulf %22, %22 : vector<8x8xf32>
    %cst_9 = arith.constant dense<0x7F800000> : vector<8xf32>
    %24 = vector.multi_reduction <minimumf>, %23, %cst_9 [1] : vector<8x8xf32> to vector<8xf32>
    %25 = vector.shape_cast %24 : vector<8xf32> to vector<8x1xf32>
    %26 = vector.broadcast %25 : vector<8x1xf32> to vector<8x8xf32>
    %27 = arith.subf %23, %26 : vector<8x8xf32>
    %cst_10 = arith.constant dense<0xFF800000> : vector<8xf32>
    %28 = vector.multi_reduction <maximumf>, %27, %cst_10 [1] : vector<8x8xf32> to vector<8xf32>
    %29 = vector.shape_cast %28 : vector<8xf32> to vector<8x1xf32>
    %30 = vector.broadcast %29 : vector<8x1xf32> to vector<8x8xf32>
    %31 = arith.divf %27, %30 : vector<8x8xf32>
    %c0_11 = arith.constant 0 : index
    %c0_12 = arith.constant 0 : index
    %c0_13 = arith.constant 0 : index
    %32 = vector.load %arg5[%c0_11, %c0_12, %c0_13] : memref<1x8x8xf32, #tpu.memory_space<vmem>>, vector<1x8x8xf32>
    %33 = vector.shape_cast %32 : vector<1x8x8xf32> to vector<8x8xf32>
    %34 = vector.shape_cast %31 : vector<8x8xf32> to vector<1x8x8xf32>
    tpu.vector_store %arg5[%c0_11, %c0_12, %c0_13], %34 {strides = array<i32>} : memref<1x8x8xf32, #tpu.memory_space<vmem>>, vector<1x8x8xf32>,
    %cst_14 = arith.constant 1.000000e+00 : f32
    %35 = vector.broadcast %cst_14 : f32 to vector<8x8xf32>
    %36 = arith.subf %35, %31 : vector<8x8xf32>
    %cst_15 = arith.constant -1.000000e+00 : f32
    %37 = vector.broadcast %cst_15 : f32 to vector<8x8xf32>
    %38 = arith.mulf %37, %36 : vector<8x8xf32>
    %39 = math.exp %38 : vector<8x8xf32>
    %40 = tpu.transpose %39, [1, 0] : vector<8x8xf32> -> vector<8x8xf32>
    %cst_16 = arith.constant 1.000000e+00 : f32
    %41 = vector.broadcast %cst_16 : f32 to vector<8x1xf32>
    %cst_17 = arith.constant 1.000000e+00 : f32
    %42 = vector.broadcast %cst_17 : f32 to vector<8x1xf32>
    %false = arith.constant false
    %c0_i32 = arith.constant 0 : i32
    %cst_18 = arith.constant dense<0.000000e+00> : vector<8x1xf32>
    %43 = tpu.matmul %39, %42, %cst_18 {dimension_numbers = #tpu.dot_dimension_numbers<[1], [0], [0], [1], [0, 0, 1, 1], [], []>} : vector<8x8xf32>, vector<8x1xf32>, vector<8x1xf32> -> vector<8x1xf32>
    %44 = tpu.reciprocal %43 {approx = true} : vector<8x1xf32> -> vector<8x1xf32>
    %cst_19 = arith.constant 1.250000e-01 : f32
    %45 = vector.broadcast %cst_19 : f32 to vector<8x1xf32>
    %46 = arith.mulf %45, %44 : vector<8x1xf32>
    %cst_20 = arith.constant dense<0.000000e+00> : vector<8x1xf32>
    %47 = tpu.matmul %40, %46, %cst_20 {dimension_numbers = #tpu.dot_dimension_numbers<[1], [0], [0], [1], [0, 0, 1, 1], [], []>} : vector<8x8xf32>, vector<8x1xf32>, vector<8x1xf32> -> vector<8x1xf32>
    %48 = arith.mulf %42, %47 : vector<8x1xf32>
    %cst_21 = arith.constant 1.250000e-01 : f32
    %49 = vector.broadcast %cst_21 : f32 to vector<8x1xf32>
    %50 = arith.subf %48, %49 : vector<8x1xf32>
    %51 = math.absf %50 : vector<8x1xf32>
    %52 = vector.shape_cast %51 : vector<8x1xf32> to vector<1x8x1xf32>
    %cst_22 = arith.constant dense<0xFF800000> : vector<1xf32>
    %53 = vector.multi_reduction <maximumf>, %52, %cst_22 [1, 2] : vector<1x8x1xf32> to vector<1xf32>
    %54 = vector.shape_cast %53 : vector<1xf32> to vector<1x1x1xf32>
    %55 = vector.extract %54[0, 0, 0] : f32 from vector<1x1x1xf32>
    %cst_23 = arith.constant 9.99999997E-7 : f32
    %56 = arith.cmpf ole, %55, %cst_23 : f32
    %57 = arith.ori %false, %56 : i1
    %58 = tpu.reciprocal %47 {approx = true} : vector<8x1xf32> -> vector<8x1xf32>
    %cst_24 = arith.constant 1.250000e-01 : f32
    %59 = vector.broadcast %cst_24 : f32 to vector<8x1xf32>
    %60 = arith.mulf %59, %58 : vector<8x1xf32>
    %61 = arith.select %57, %42, %60 : vector<8x1xf32>
    %c1_i32 = arith.constant 1 : i32
    %cst_25 = arith.constant dense<0.000000e+00> : vector<8x1xf32>
    %62 = tpu.matmul %39, %61, %cst_25 {dimension_numbers = #tpu.dot_dimension_numbers<[1], [0], [0], [1], [0, 0, 1, 1], [], []>} : vector<8x8xf32>, vector<8x1xf32>, vector<8x1xf32> -> vector<8x1xf32>
    %63 = tpu.reciprocal %62 {approx = true} : vector<8x1xf32> -> vector<8x1xf32>
    %cst_26 = arith.constant 1.250000e-01 : f32
    %64 = vector.broadcast %cst_26 : f32 to vector<8x1xf32>
    %65 = arith.mulf %64, %63 : vector<8x1xf32>
    %cst_27 = arith.constant dense<0.000000e+00> : vector<8x1xf32>
    %66 = tpu.matmul %40, %65, %cst_27 {dimension_numbers = #tpu.dot_dimension_numbers<[1], [0], [0], [1], [0, 0, 1, 1], [], []>} : vector<8x8xf32>, vector<8x1xf32>, vector<8x1xf32> -> vector<8x1xf32>
    %67 = arith.mulf %61, %66 : vector<8x1xf32>
    %cst_28 = arith.constant 1.250000e-01 : f32
    %68 = vector.broadcast %cst_28 : f32 to vector<8x1xf32>
    %69 = arith.subf %67, %68 : vector<8x1xf32>
    %70 = math.absf %69 : vector<8x1xf32>
    %71 = vector.shape_cast %70 : vector<8x1xf32> to vector<1x8x1xf32>
    %cst_29 = arith.constant dense<0xFF800000> : vector<1xf32>
    %72 = vector.multi_reduction <maximumf>, %71, %cst_29 [1, 2] : vector<1x8x1xf32> to vector<1xf32>
    %73 = vector.shape_cast %72 : vector<1xf32> to vector<1x1x1xf32>
    %74 = vector.extract %73[0, 0, 0] : f32 from vector<1x1x1xf32>
    %cst_30 = arith.constant 9.99999997E-7 : f32
    %75 = arith.cmpf ole, %74, %cst_30 : f32
    %76 = arith.ori %57, %75 : i1
    %77 = tpu.reciprocal %66 {approx = true} : vector<8x1xf32> -> vector<8x1xf32>
    %cst_31 = arith.constant 1.250000e-01 : f32
    %78 = vector.broadcast %cst_31 : f32 to vector<8x1xf32>
    %79 = arith.mulf %78, %77 : vector<8x1xf32>
    %80 = arith.select %76, %61, %79 : vector<8x1xf32>
    %c2_i32 = arith.constant 2 : i32
    %cst_32 = arith.constant dense<0.000000e+00> : vector<8x1xf32>
    %81 = tpu.matmul %39, %80, %cst_32 {dimension_numbers = #tpu.dot_dimension_numbers<[1], [0], [0], [1], [0, 0, 1, 1], [], []>} : vector<8x8xf32>, vector<8x1xf32>, vector<8x1xf32> -> vector<8x1xf32>
    %82 = tpu.reciprocal %81 {approx = true} : vector<8x1xf32> -> vector<8x1xf32>
    %cst_33 = arith.constant 1.250000e-01 : f32
    %83 = vector.broadcast %cst_33 : f32 to vector<8x1xf32>
    %84 = arith.mulf %83, %82 : vector<8x1xf32>
    %cst_34 = arith.constant dense<0.000000e+00> : vector<8x1xf32>
    %85 = tpu.matmul %40, %84, %cst_34 {dimension_numbers = #tpu.dot_dimension_numbers<[1], [0], [0], [1], [0, 0, 1, 1], [], []>} : vector<8x8xf32>, vector<8x1xf32>, vector<8x1xf32> -> vector<8x1xf32>
    %86 = arith.mulf %80, %85 : vector<8x1xf32>
    %cst_35 = arith.constant 1.250000e-01 : f32
    %87 = vector.broadcast %cst_35 : f32 to vector<8x1xf32>
    %88 = arith.subf %86, %87 : vector<8x1xf32>
    %89 = math.absf %88 : vector<8x1xf32>
    %90 = vector.shape_cast %89 : vector<8x1xf32> to vector<1x8x1xf32>
    %cst_36 = arith.constant dense<0xFF800000> : vector<1xf32>
    %91 = vector.multi_reduction <maximumf>, %90, %cst_36 [1, 2] : vector<1x8x1xf32> to vector<1xf32>
    %92 = vector.shape_cast %91 : vector<1xf32> to vector<1x1x1xf32>
    %93 = vector.extract %92[0, 0, 0] : f32 from vector<1x1x1xf32>
    %cst_37 = arith.constant 9.99999997E-7 : f32
    %94 = arith.cmpf ole, %93, %cst_37 : f32
    %95 = arith.ori %76, %94 : i1
    %96 = tpu.reciprocal %85 {approx = true} : vector<8x1xf32> -> vector<8x1xf32>
    %cst_38 = arith.constant 1.250000e-01 : f32
    %97 = vector.broadcast %cst_38 : f32 to vector<8x1xf32>
    %98 = arith.mulf %97, %96 : vector<8x1xf32>
    %99 = arith.select %95, %80, %98 : vector<8x1xf32>
    %c3_i32 = arith.constant 3 : i32
    %cst_39 = arith.constant dense<0.000000e+00> : vector<8x1xf32>
    %100 = tpu.matmul %39, %99, %cst_39 {dimension_numbers = #tpu.dot_dimension_numbers<[1], [0], [0], [1], [0, 0, 1, 1], [], []>} : vector<8x8xf32>, vector<8x1xf32>, vector<8x1xf32> -> vector<8x1xf32>
    %101 = tpu.reciprocal %100 {approx = true} : vector<8x1xf32> -> vector<8x1xf32>
    %cst_40 = arith.constant 1.250000e-01 : f32
    %102 = vector.broadcast %cst_40 : f32 to vector<8x1xf32>
    %103 = arith.mulf %102, %101 : vector<8x1xf32>
    %cst_41 = arith.constant dense<0.000000e+00> : vector<8x1xf32>
    %104 = tpu.matmul %40, %103, %cst_41 {dimension_numbers = #tpu.dot_dimension_numbers<[1], [0], [0], [1], [0, 0, 1, 1], [], []>} : vector<8x8xf32>, vector<8x1xf32>, vector<8x1xf32> -> vector<8x1xf32>
    %105 = arith.mulf %99, %104 : vector<8x1xf32>
    %cst_42 = arith.constant 1.250000e-01 : f32
    %106 = vector.broadcast %cst_42 : f32 to vector<8x1xf32>
    %107 = arith.subf %105, %106 : vector<8x1xf32>
    %108 = math.absf %107 : vector<8x1xf32>
    %109 = vector.shape_cast %108 : vector<8x1xf32> to vector<1x8x1xf32>
    %cst_43 = arith.constant dense<0xFF800000> : vector<1xf32>
    %110 = vector.multi_reduction <maximumf>, %109, %cst_43 [1, 2] : vector<1x8x1xf32> to vector<1xf32>
    %111 = vector.shape_cast %110 : vector<1xf32> to vector<1x1x1xf32>
    %112 = vector.extract %111[0, 0, 0] : f32 from vector<1x1x1xf32>
    %cst_44 = arith.constant 9.99999997E-7 : f32
    %113 = arith.cmpf ole, %112, %cst_44 : f32
    %114 = arith.ori %95, %113 : i1
    %115 = tpu.reciprocal %104 {approx = true} : vector<8x1xf32> -> vector<8x1xf32>
    %cst_45 = arith.constant 1.250000e-01 : f32
    %116 = vector.broadcast %cst_45 : f32 to vector<8x1xf32>
    %117 = arith.mulf %116, %115 : vector<8x1xf32>
    %118 = arith.select %114, %99, %117 : vector<8x1xf32>
    %c4_i32 = arith.constant 4 : i32
    %cst_46 = arith.constant dense<0.000000e+00> : vector<8x1xf32>
    %119 = tpu.matmul %39, %118, %cst_46 {dimension_numbers = #tpu.dot_dimension_numbers<[1], [0], [0], [1], [0, 0, 1, 1], [], []>} : vector<8x8xf32>, vector<8x1xf32>, vector<8x1xf32> -> vector<8x1xf32>
    %120 = tpu.reciprocal %119 {approx = true} : vector<8x1xf32> -> vector<8x1xf32>
    %cst_47 = arith.constant 1.250000e-01 : f32
    %121 = vector.broadcast %cst_47 : f32 to vector<8x1xf32>
    %122 = arith.mulf %121, %120 : vector<8x1xf32>
    %cst_48 = arith.constant dense<0.000000e+00> : vector<8x1xf32>
    %123 = tpu.matmul %40, %122, %cst_48 {dimension_numbers = #tpu.dot_dimension_numbers<[1], [0], [0], [1], [0, 0, 1, 1], [], []>} : vector<8x8xf32>, vector<8x1xf32>, vector<8x1xf32> -> vector<8x1xf32>
    %124 = arith.mulf %118, %123 : vector<8x1xf32>
    %cst_49 = arith.constant 1.250000e-01 : f32
    %125 = vector.broadcast %cst_49 : f32 to vector<8x1xf32>
    %126 = arith.subf %124, %125 : vector<8x1xf32>
    %127 = math.absf %126 : vector<8x1xf32>
    %128 = vector.shape_cast %127 : vector<8x1xf32> to vector<1x8x1xf32>
    %cst_50 = arith.constant dense<0xFF800000> : vector<1xf32>
    %129 = vector.multi_reduction <maximumf>, %128, %cst_50 [1, 2] : vector<1x8x1xf32> to vector<1xf32>
    %130 = vector.shape_cast %129 : vector<1xf32> to vector<1x1x1xf32>
    %131 = vector.extract %130[0, 0, 0] : f32 from vector<1x1x1xf32>
    %cst_51 = arith.constant 9.99999997E-7 : f32
    %132 = arith.cmpf ole, %131, %cst_51 : f32
    %133 = arith.ori %114, %132 : i1
    %134 = tpu.reciprocal %123 {approx = true} : vector<8x1xf32> -> vector<8x1xf32>
    %cst_52 = arith.constant 1.250000e-01 : f32
    %135 = vector.broadcast %cst_52 : f32 to vector<8x1xf32>
    %136 = arith.mulf %135, %134 : vector<8x1xf32>
    %137 = arith.select %133, %118, %136 : vector<8x1xf32>
    %c5_i32 = arith.constant 5 : i32
    %cst_53 = arith.constant dense<0.000000e+00> : vector<8x1xf32>
    %138 = tpu.matmul %39, %137, %cst_53 {dimension_numbers = #tpu.dot_dimension_numbers<[1], [0], [0], [1], [0, 0, 1, 1], [], []>} : vector<8x8xf32>, vector<8x1xf32>, vector<8x1xf32> -> vector<8x1xf32>
    %139 = tpu.reciprocal %138 {approx = true} : vector<8x1xf32> -> vector<8x1xf32>
    %cst_54 = arith.constant 1.250000e-01 : f32
    %140 = vector.broadcast %cst_54 : f32 to vector<8x1xf32>
    %141 = arith.mulf %140, %139 : vector<8x1xf32>
    %cst_55 = arith.constant dense<0.000000e+00> : vector<8x1xf32>
    %142 = tpu.matmul %40, %141, %cst_55 {dimension_numbers = #tpu.dot_dimension_numbers<[1], [0], [0], [1], [0, 0, 1, 1], [], []>} : vector<8x8xf32>, vector<8x1xf32>, vector<8x1xf32> -> vector<8x1xf32>
    %143 = arith.mulf %137, %142 : vector<8x1xf32>
    %cst_56 = arith.constant 1.250000e-01 : f32
    %144 = vector.broadcast %cst_56 : f32 to vector<8x1xf32>
    %145 = arith.subf %143, %144 : vector<8x1xf32>
    %146 = math.absf %145 : vector<8x1xf32>
    %147 = vector.shape_cast %146 : vector<8x1xf32> to vector<1x8x1xf32>
    %cst_57 = arith.constant dense<0xFF800000> : vector<1xf32>
    %148 = vector.multi_reduction <maximumf>, %147, %cst_57 [1, 2] : vector<1x8x1xf32> to vector<1xf32>
    %149 = vector.shape_cast %148 : vector<1xf32> to vector<1x1x1xf32>
    %150 = vector.extract %149[0, 0, 0] : f32 from vector<1x1x1xf32>
    %cst_58 = arith.constant 9.99999997E-7 : f32
    %151 = arith.cmpf ole, %150, %cst_58 : f32
    %152 = arith.ori %133, %151 : i1
    %153 = tpu.reciprocal %142 {approx = true} : vector<8x1xf32> -> vector<8x1xf32>
    %cst_59 = arith.constant 1.250000e-01 : f32
    %154 = vector.broadcast %cst_59 : f32 to vector<8x1xf32>
    %155 = arith.mulf %154, %153 : vector<8x1xf32>
    %156 = arith.select %152, %137, %155 : vector<8x1xf32>
    %c6_i32 = arith.constant 6 : i32
    %cst_60 = arith.constant dense<0.000000e+00> : vector<8x1xf32>
    %157 = tpu.matmul %39, %156, %cst_60 {dimension_numbers = #tpu.dot_dimension_numbers<[1], [0], [0], [1], [0, 0, 1, 1], [], []>} : vector<8x8xf32>, vector<8x1xf32>, vector<8x1xf32> -> vector<8x1xf32>
    %158 = tpu.reciprocal %157 {approx = true} : vector<8x1xf32> -> vector<8x1xf32>
    %cst_61 = arith.constant 1.250000e-01 : f32
    %159 = vector.broadcast %cst_61 : f32 to vector<8x1xf32>
    %160 = arith.mulf %159, %158 : vector<8x1xf32>
    %cst_62 = arith.constant dense<0.000000e+00> : vector<8x1xf32>
    %161 = tpu.matmul %40, %160, %cst_62 {dimension_numbers = #tpu.dot_dimension_numbers<[1], [0], [0], [1], [0, 0, 1, 1], [], []>} : vector<8x8xf32>, vector<8x1xf32>, vector<8x1xf32> -> vector<8x1xf32>
    %162 = arith.mulf %156, %161 : vector<8x1xf32>
    %cst_63 = arith.constant 1.250000e-01 : f32
    %163 = vector.broadcast %cst_63 : f32 to vector<8x1xf32>
    %164 = arith.subf %162, %163 : vector<8x1xf32>
    %165 = math.absf %164 : vector<8x1xf32>
    %166 = vector.shape_cast %165 : vector<8x1xf32> to vector<1x8x1xf32>
    %cst_64 = arith.constant dense<0xFF800000> : vector<1xf32>
    %167 = vector.multi_reduction <maximumf>, %166, %cst_64 [1, 2] : vector<1x8x1xf32> to vector<1xf32>
    %168 = vector.shape_cast %167 : vector<1xf32> to vector<1x1x1xf32>
    %169 = vector.extract %168[0, 0, 0] : f32 from vector<1x1x1xf32>
    %cst_65 = arith.constant 9.99999997E-7 : f32
    %170 = arith.cmpf ole, %169, %cst_65 : f32
    %171 = arith.ori %152, %170 : i1
    %172 = tpu.reciprocal %161 {approx = true} : vector<8x1xf32> -> vector<8x1xf32>
    %cst_66 = arith.constant 1.250000e-01 : f32
    %173 = vector.broadcast %cst_66 : f32 to vector<8x1xf32>
    %174 = arith.mulf %173, %172 : vector<8x1xf32>
    %175 = arith.select %171, %156, %174 : vector<8x1xf32>
    %c7_i32 = arith.constant 7 : i32
    %cst_67 = arith.constant dense<0.000000e+00> : vector<8x1xf32>
    %176 = tpu.matmul %39, %175, %cst_67 {dimension_numbers = #tpu.dot_dimension_numbers<[1], [0], [0], [1], [0, 0, 1, 1], [], []>} : vector<8x8xf32>, vector<8x1xf32>, vector<8x1xf32> -> vector<8x1xf32>
    %177 = tpu.reciprocal %176 {approx = true} : vector<8x1xf32> -> vector<8x1xf32>
    %cst_68 = arith.constant 1.250000e-01 : f32
    %178 = vector.broadcast %cst_68 : f32 to vector<8x1xf32>
    %179 = arith.mulf %178, %177 : vector<8x1xf32>
    %cst_69 = arith.constant dense<0.000000e+00> : vector<8x1xf32>
    %180 = tpu.matmul %40, %179, %cst_69 {dimension_numbers = #tpu.dot_dimension_numbers<[1], [0], [0], [1], [0, 0, 1, 1], [], []>} : vector<8x8xf32>, vector<8x1xf32>, vector<8x1xf32> -> vector<8x1xf32>
    %181 = arith.mulf %175, %180 : vector<8x1xf32>
    %cst_70 = arith.constant 1.250000e-01 : f32
    %182 = vector.broadcast %cst_70 : f32 to vector<8x1xf32>
    %183 = arith.subf %181, %182 : vector<8x1xf32>
    %184 = math.absf %183 : vector<8x1xf32>
    %185 = vector.shape_cast %184 : vector<8x1xf32> to vector<1x8x1xf32>
    %cst_71 = arith.constant dense<0xFF800000> : vector<1xf32>
    %186 = vector.multi_reduction <maximumf>, %185, %cst_71 [1, 2] : vector<1x8x1xf32> to vector<1xf32>
    %187 = vector.shape_cast %186 : vector<1xf32> to vector<1x1x1xf32>
    %188 = vector.extract %187[0, 0, 0] : f32 from vector<1x1x1xf32>
    %cst_72 = arith.constant 9.99999997E-7 : f32
    %189 = arith.cmpf ole, %188, %cst_72 : f32
    %190 = arith.ori %171, %189 : i1
    %191 = tpu.reciprocal %180 {approx = true} : vector<8x1xf32> -> vector<8x1xf32>
    %cst_73 = arith.constant 1.250000e-01 : f32
    %192 = vector.broadcast %cst_73 : f32 to vector<8x1xf32>
    %193 = arith.mulf %192, %191 : vector<8x1xf32>
    %194 = arith.select %190, %175, %193 : vector<8x1xf32>
    %c8_i32 = arith.constant 8 : i32
    %cst_74 = arith.constant dense<0.000000e+00> : vector<8x1xf32>
    %195 = tpu.matmul %39, %194, %cst_74 {dimension_numbers = #tpu.dot_dimension_numbers<[1], [0], [0], [1], [0, 0, 1, 1], [], []>} : vector<8x8xf32>, vector<8x1xf32>, vector<8x1xf32> -> vector<8x1xf32>
    %196 = tpu.reciprocal %195 {approx = true} : vector<8x1xf32> -> vector<8x1xf32>
    %cst_75 = arith.constant 1.250000e-01 : f32
    %197 = vector.broadcast %cst_75 : f32 to vector<8x1xf32>
    %198 = arith.mulf %197, %196 : vector<8x1xf32>
    %cst_76 = arith.constant dense<0.000000e+00> : vector<8x1xf32>
    %199 = tpu.matmul %40, %198, %cst_76 {dimension_numbers = #tpu.dot_dimension_numbers<[1], [0], [0], [1], [0, 0, 1, 1], [], []>} : vector<8x8xf32>, vector<8x1xf32>, vector<8x1xf32> -> vector<8x1xf32>
    %200 = arith.mulf %194, %199 : vector<8x1xf32>
    %cst_77 = arith.constant 1.250000e-01 : f32
    %201 = vector.broadcast %cst_77 : f32 to vector<8x1xf32>
    %202 = arith.subf %200, %201 : vector<8x1xf32>
    %203 = math.absf %202 : vector<8x1xf32>
    %204 = vector.shape_cast %203 : vector<8x1xf32> to vector<1x8x1xf32>
    %cst_78 = arith.constant dense<0xFF800000> : vector<1xf32>
    %205 = vector.multi_reduction <maximumf>, %204, %cst_78 [1, 2] : vector<1x8x1xf32> to vector<1xf32>
    %206 = vector.shape_cast %205 : vector<1xf32> to vector<1x1x1xf32>
    %207 = vector.extract %206[0, 0, 0] : f32 from vector<1x1x1xf32>
    %cst_79 = arith.constant 9.99999997E-7 : f32
    %208 = arith.cmpf ole, %207, %cst_79 : f32
    %209 = arith.ori %190, %208 : i1
    %210 = tpu.reciprocal %199 {approx = true} : vector<8x1xf32> -> vector<8x1xf32>
    %cst_80 = arith.constant 1.250000e-01 : f32
    %211 = vector.broadcast %cst_80 : f32 to vector<8x1xf32>
    %212 = arith.mulf %211, %210 : vector<8x1xf32>
    %213 = arith.select %209, %194, %212 : vector<8x1xf32>
    %c9_i32 = arith.constant 9 : i32
    %cst_81 = arith.constant dense<0.000000e+00> : vector<8x1xf32>
    %214 = tpu.matmul %39, %213, %cst_81 {dimension_numbers = #tpu.dot_dimension_numbers<[1], [0], [0], [1], [0, 0, 1, 1], [], []>} : vector<8x8xf32>, vector<8x1xf32>, vector<8x1xf32> -> vector<8x1xf32>
    %215 = tpu.reciprocal %214 {approx = true} : vector<8x1xf32> -> vector<8x1xf32>
    %cst_82 = arith.constant 1.250000e-01 : f32
    %216 = vector.broadcast %cst_82 : f32 to vector<8x1xf32>
    %217 = arith.mulf %216, %215 : vector<8x1xf32>
    %cst_83 = arith.constant dense<0.000000e+00> : vector<8x1xf32>
    %218 = tpu.matmul %40, %217, %cst_83 {dimension_numbers = #tpu.dot_dimension_numbers<[1], [0], [0], [1], [0, 0, 1, 1], [], []>} : vector<8x8xf32>, vector<8x1xf32>, vector<8x1xf32> -> vector<8x1xf32>
    %219 = arith.mulf %213, %218 : vector<8x1xf32>
    %cst_84 = arith.constant 1.250000e-01 : f32
    %220 = vector.broadcast %cst_84 : f32 to vector<8x1xf32>
    %221 = arith.subf %219, %220 : vector<8x1xf32>
    %222 = math.absf %221 : vector<8x1xf32>
    %223 = vector.shape_cast %222 : vector<8x1xf32> to vector<1x8x1xf32>
    %cst_85 = arith.constant dense<0xFF800000> : vector<1xf32>
    %224 = vector.multi_reduction <maximumf>, %223, %cst_85 [1, 2] : vector<1x8x1xf32> to vector<1xf32>
    %225 = vector.shape_cast %224 : vector<1xf32> to vector<1x1x1xf32>
    %226 = vector.extract %225[0, 0, 0] : f32 from vector<1x1x1xf32>
    %cst_86 = arith.constant 9.99999997E-7 : f32
    %227 = arith.cmpf ole, %226, %cst_86 : f32
    %228 = arith.ori %209, %227 : i1
    %229 = tpu.reciprocal %218 {approx = true} : vector<8x1xf32> -> vector<8x1xf32>
    %cst_87 = arith.constant 1.250000e-01 : f32
    %230 = vector.broadcast %cst_87 : f32 to vector<8x1xf32>
    %231 = arith.mulf %230, %229 : vector<8x1xf32>
    %232 = arith.select %228, %213, %231 : vector<8x1xf32>
    %c10_i32 = arith.constant 10 : i32
    %cst_88 = arith.constant dense<0.000000e+00> : vector<8x1xf32>
    %233 = tpu.matmul %39, %232, %cst_88 {dimension_numbers = #tpu.dot_dimension_numbers<[1], [0], [0], [1], [0, 0, 1, 1], [], []>} : vector<8x8xf32>, vector<8x1xf32>, vector<8x1xf32> -> vector<8x1xf32>
    %234 = tpu.reciprocal %233 {approx = true} : vector<8x1xf32> -> vector<8x1xf32>
    %cst_89 = arith.constant 1.250000e-01 : f32
    %235 = vector.broadcast %cst_89 : f32 to vector<8x1xf32>
    %236 = arith.mulf %235, %234 : vector<8x1xf32>
    %cst_90 = arith.constant dense<0.000000e+00> : vector<8x1xf32>
    %237 = tpu.matmul %40, %236, %cst_90 {dimension_numbers = #tpu.dot_dimension_numbers<[1], [0], [0], [1], [0, 0, 1, 1], [], []>} : vector<8x8xf32>, vector<8x1xf32>, vector<8x1xf32> -> vector<8x1xf32>
    %238 = arith.mulf %232, %237 : vector<8x1xf32>
    %cst_91 = arith.constant 1.250000e-01 : f32
    %239 = vector.broadcast %cst_91 : f32 to vector<8x1xf32>
    %240 = arith.subf %238, %239 : vector<8x1xf32>
    %241 = math.absf %240 : vector<8x1xf32>
    %242 = vector.shape_cast %241 : vector<8x1xf32> to vector<1x8x1xf32>
    %cst_92 = arith.constant dense<0xFF800000> : vector<1xf32>
    %243 = vector.multi_reduction <maximumf>, %242, %cst_92 [1, 2] : vector<1x8x1xf32> to vector<1xf32>
    %244 = vector.shape_cast %243 : vector<1xf32> to vector<1x1x1xf32>
    %245 = vector.extract %244[0, 0, 0] : f32 from vector<1x1x1xf32>
    %cst_93 = arith.constant 9.99999997E-7 : f32
    %246 = arith.cmpf ole, %245, %cst_93 : f32
    %247 = arith.ori %228, %246 : i1
    %248 = tpu.reciprocal %237 {approx = true} : vector<8x1xf32> -> vector<8x1xf32>
    %cst_94 = arith.constant 1.250000e-01 : f32
    %249 = vector.broadcast %cst_94 : f32 to vector<8x1xf32>
    %250 = arith.mulf %249, %248 : vector<8x1xf32>
    %251 = arith.select %247, %232, %250 : vector<8x1xf32>
    %c11_i32 = arith.constant 11 : i32
    %cst_95 = arith.constant dense<0.000000e+00> : vector<8x1xf32>
    %252 = tpu.matmul %39, %251, %cst_95 {dimension_numbers = #tpu.dot_dimension_numbers<[1], [0], [0], [1], [0, 0, 1, 1], [], []>} : vector<8x8xf32>, vector<8x1xf32>, vector<8x1xf32> -> vector<8x1xf32>
    %253 = tpu.reciprocal %252 {approx = true} : vector<8x1xf32> -> vector<8x1xf32>
    %cst_96 = arith.constant 1.250000e-01 : f32
    %254 = vector.broadcast %cst_96 : f32 to vector<8x1xf32>
    %255 = arith.mulf %254, %253 : vector<8x1xf32>
    %cst_97 = arith.constant dense<0.000000e+00> : vector<8x1xf32>
    %256 = tpu.matmul %40, %255, %cst_97 {dimension_numbers = #tpu.dot_dimension_numbers<[1], [0], [0], [1], [0, 0, 1, 1], [], []>} : vector<8x8xf32>, vector<8x1xf32>, vector<8x1xf32> -> vector<8x1xf32>
    %257 = arith.mulf %251, %256 : vector<8x1xf32>
    %cst_98 = arith.constant 1.250000e-01 : f32
    %258 = vector.broadcast %cst_98 : f32 to vector<8x1xf32>
    %259 = arith.subf %257, %258 : vector<8x1xf32>
    %260 = math.absf %259 : vector<8x1xf32>
    %261 = vector.shape_cast %260 : vector<8x1xf32> to vector<1x8x1xf32>
    %cst_99 = arith.constant dense<0xFF800000> : vector<1xf32>
    %262 = vector.multi_reduction <maximumf>, %261, %cst_99 [1, 2] : vector<1x8x1xf32> to vector<1xf32>
    %263 = vector.shape_cast %262 : vector<1xf32> to vector<1x1x1xf32>
    %264 = vector.extract %263[0, 0, 0] : f32 from vector<1x1x1xf32>
    %cst_100 = arith.constant 9.99999997E-7 : f32
    %265 = arith.cmpf ole, %264, %cst_100 : f32
    %266 = arith.ori %247, %265 : i1
    %267 = tpu.reciprocal %256 {approx = true} : vector<8x1xf32> -> vector<8x1xf32>
    %cst_101 = arith.constant 1.250000e-01 : f32
    %268 = vector.broadcast %cst_101 : f32 to vector<8x1xf32>
    %269 = arith.mulf %268, %267 : vector<8x1xf32>
    %270 = arith.select %266, %251, %269 : vector<8x1xf32>
    %c12_i32 = arith.constant 12 : i32
    %cst_102 = arith.constant dense<0.000000e+00> : vector<8x1xf32>
    %271 = tpu.matmul %39, %270, %cst_102 {dimension_numbers = #tpu.dot_dimension_numbers<[1], [0], [0], [1], [0, 0, 1, 1], [], []>} : vector<8x8xf32>, vector<8x1xf32>, vector<8x1xf32> -> vector<8x1xf32>
    %272 = tpu.reciprocal %271 {approx = true} : vector<8x1xf32> -> vector<8x1xf32>
    %cst_103 = arith.constant 1.250000e-01 : f32
    %273 = vector.broadcast %cst_103 : f32 to vector<8x1xf32>
    %274 = arith.mulf %273, %272 : vector<8x1xf32>
    %cst_104 = arith.constant dense<0.000000e+00> : vector<8x1xf32>
    %275 = tpu.matmul %40, %274, %cst_104 {dimension_numbers = #tpu.dot_dimension_numbers<[1], [0], [0], [1], [0, 0, 1, 1], [], []>} : vector<8x8xf32>, vector<8x1xf32>, vector<8x1xf32> -> vector<8x1xf32>
    %276 = arith.mulf %270, %275 : vector<8x1xf32>
    %cst_105 = arith.constant 1.250000e-01 : f32
    %277 = vector.broadcast %cst_105 : f32 to vector<8x1xf32>
    %278 = arith.subf %276, %277 : vector<8x1xf32>
    %279 = math.absf %278 : vector<8x1xf32>
    %280 = vector.shape_cast %279 : vector<8x1xf32> to vector<1x8x1xf32>
    %cst_106 = arith.constant dense<0xFF800000> : vector<1xf32>
    %281 = vector.multi_reduction <maximumf>, %280, %cst_106 [1, 2] : vector<1x8x1xf32> to vector<1xf32>
    %282 = vector.shape_cast %281 : vector<1xf32> to vector<1x1x1xf32>
    %283 = vector.extract %282[0, 0, 0] : f32 from vector<1x1x1xf32>
    %cst_107 = arith.constant 9.99999997E-7 : f32
    %284 = arith.cmpf ole, %283, %cst_107 : f32
    %285 = arith.ori %266, %284 : i1
    %286 = tpu.reciprocal %275 {approx = true} : vector<8x1xf32> -> vector<8x1xf32>
    %cst_108 = arith.constant 1.250000e-01 : f32
    %287 = vector.broadcast %cst_108 : f32 to vector<8x1xf32>
    %288 = arith.mulf %287, %286 : vector<8x1xf32>
    %289 = arith.select %285, %270, %288 : vector<8x1xf32>
    %c13_i32 = arith.constant 13 : i32
    %cst_109 = arith.constant dense<0.000000e+00> : vector<8x1xf32>
    %290 = tpu.matmul %39, %289, %cst_109 {dimension_numbers = #tpu.dot_dimension_numbers<[1], [0], [0], [1], [0, 0, 1, 1], [], []>} : vector<8x8xf32>, vector<8x1xf32>, vector<8x1xf32> -> vector<8x1xf32>
    %291 = tpu.reciprocal %290 {approx = true} : vector<8x1xf32> -> vector<8x1xf32>
    %cst_110 = arith.constant 1.250000e-01 : f32
    %292 = vector.broadcast %cst_110 : f32 to vector<8x1xf32>
    %293 = arith.mulf %292, %291 : vector<8x1xf32>
    %cst_111 = arith.constant dense<0.000000e+00> : vector<8x1xf32>
    %294 = tpu.matmul %40, %293, %cst_111 {dimension_numbers = #tpu.dot_dimension_numbers<[1], [0], [0], [1], [0, 0, 1, 1], [], []>} : vector<8x8xf32>, vector<8x1xf32>, vector<8x1xf32> -> vector<8x1xf32>
    %295 = arith.mulf %289, %294 : vector<8x1xf32>
    %cst_112 = arith.constant 1.250000e-01 : f32
    %296 = vector.broadcast %cst_112 : f32 to vector<8x1xf32>
    %297 = arith.subf %295, %296 : vector<8x1xf32>
    %298 = math.absf %297 : vector<8x1xf32>
    %299 = vector.shape_cast %298 : vector<8x1xf32> to vector<1x8x1xf32>
    %cst_113 = arith.constant dense<0xFF800000> : vector<1xf32>
    %300 = vector.multi_reduction <maximumf>, %299, %cst_113 [1, 2] : vector<1x8x1xf32> to vector<1xf32>
    %301 = vector.shape_cast %300 : vector<1xf32> to vector<1x1x1xf32>
    %302 = vector.extract %301[0, 0, 0] : f32 from vector<1x1x1xf32>
    %cst_114 = arith.constant 9.99999997E-7 : f32
    %303 = arith.cmpf ole, %302, %cst_114 : f32
    %304 = arith.ori %285, %303 : i1
    %305 = tpu.reciprocal %294 {approx = true} : vector<8x1xf32> -> vector<8x1xf32>
    %cst_115 = arith.constant 1.250000e-01 : f32
    %306 = vector.broadcast %cst_115 : f32 to vector<8x1xf32>
    %307 = arith.mulf %306, %305 : vector<8x1xf32>
    %308 = arith.select %304, %289, %307 : vector<8x1xf32>
    %c14_i32 = arith.constant 14 : i32
    %cst_116 = arith.constant dense<0.000000e+00> : vector<8x1xf32>
    %309 = tpu.matmul %39, %308, %cst_116 {dimension_numbers = #tpu.dot_dimension_numbers<[1], [0], [0], [1], [0, 0, 1, 1], [], []>} : vector<8x8xf32>, vector<8x1xf32>, vector<8x1xf32> -> vector<8x1xf32>
    %310 = tpu.reciprocal %309 {approx = true} : vector<8x1xf32> -> vector<8x1xf32>
    %cst_117 = arith.constant 1.250000e-01 : f32
    %311 = vector.broadcast %cst_117 : f32 to vector<8x1xf32>
    %312 = arith.mulf %311, %310 : vector<8x1xf32>
    %cst_118 = arith.constant dense<0.000000e+00> : vector<8x1xf32>
    %313 = tpu.matmul %40, %312, %cst_118 {dimension_numbers = #tpu.dot_dimension_numbers<[1], [0], [0], [1], [0, 0, 1, 1], [], []>} : vector<8x8xf32>, vector<8x1xf32>, vector<8x1xf32> -> vector<8x1xf32>
    %314 = arith.mulf %308, %313 : vector<8x1xf32>
    %cst_119 = arith.constant 1.250000e-01 : f32
    %315 = vector.broadcast %cst_119 : f32 to vector<8x1xf32>
    %316 = arith.subf %314, %315 : vector<8x1xf32>
    %317 = math.absf %316 : vector<8x1xf32>
    %318 = vector.shape_cast %317 : vector<8x1xf32> to vector<1x8x1xf32>
    %cst_120 = arith.constant dense<0xFF800000> : vector<1xf32>
    %319 = vector.multi_reduction <maximumf>, %318, %cst_120 [1, 2] : vector<1x8x1xf32> to vector<1xf32>
    %320 = vector.shape_cast %319 : vector<1xf32> to vector<1x1x1xf32>
    %321 = vector.extract %320[0, 0, 0] : f32 from vector<1x1x1xf32>
    %cst_121 = arith.constant 9.99999997E-7 : f32
    %322 = arith.cmpf ole, %321, %cst_121 : f32
    %323 = arith.ori %304, %322 : i1
    %324 = tpu.reciprocal %313 {approx = true} : vector<8x1xf32> -> vector<8x1xf32>
    %cst_122 = arith.constant 1.250000e-01 : f32
    %325 = vector.broadcast %cst_122 : f32 to vector<8x1xf32>
    %326 = arith.mulf %325, %324 : vector<8x1xf32>
    %327 = arith.select %323, %308, %326 : vector<8x1xf32>
    %c15_i32 = arith.constant 15 : i32
    %cst_123 = arith.constant dense<0.000000e+00> : vector<8x1xf32>
    %328 = tpu.matmul %39, %327, %cst_123 {dimension_numbers = #tpu.dot_dimension_numbers<[1], [0], [0], [1], [0, 0, 1, 1], [], []>} : vector<8x8xf32>, vector<8x1xf32>, vector<8x1xf32> -> vector<8x1xf32>
    %329 = tpu.reciprocal %328 {approx = true} : vector<8x1xf32> -> vector<8x1xf32>
    %cst_124 = arith.constant 1.250000e-01 : f32
    %330 = vector.broadcast %cst_124 : f32 to vector<8x1xf32>
    %331 = arith.mulf %330, %329 : vector<8x1xf32>
    %cst_125 = arith.constant dense<0.000000e+00> : vector<8x1xf32>
    %332 = tpu.matmul %40, %331, %cst_125 {dimension_numbers = #tpu.dot_dimension_numbers<[1], [0], [0], [1], [0, 0, 1, 1], [], []>} : vector<8x8xf32>, vector<8x1xf32>, vector<8x1xf32> -> vector<8x1xf32>
    %333 = arith.mulf %327, %332 : vector<8x1xf32>
    %cst_126 = arith.constant 1.250000e-01 : f32
    %334 = vector.broadcast %cst_126 : f32 to vector<8x1xf32>
    %335 = arith.subf %333, %334 : vector<8x1xf32>
    %336 = math.absf %335 : vector<8x1xf32>
    %337 = vector.shape_cast %336 : vector<8x1xf32> to vector<1x8x1xf32>
    %cst_127 = arith.constant dense<0xFF800000> : vector<1xf32>
    %338 = vector.multi_reduction <maximumf>, %337, %cst_127 [1, 2] : vector<1x8x1xf32> to vector<1xf32>
    %339 = vector.shape_cast %338 : vector<1xf32> to vector<1x1x1xf32>
    %340 = vector.extract %339[0, 0, 0] : f32 from vector<1x1x1xf32>
    %cst_128 = arith.constant 9.99999997E-7 : f32
    %341 = arith.cmpf ole, %340, %cst_128 : f32
    %342 = arith.ori %323, %341 : i1
    %343 = tpu.reciprocal %332 {approx = true} : vector<8x1xf32> -> vector<8x1xf32>
    %cst_129 = arith.constant 1.250000e-01 : f32
    %344 = vector.broadcast %cst_129 : f32 to vector<8x1xf32>
    %345 = arith.mulf %344, %343 : vector<8x1xf32>
    %346 = arith.select %342, %327, %345 : vector<8x1xf32>
    %c16_i32 = arith.constant 16 : i32
    %cst_130 = arith.constant dense<0.000000e+00> : vector<8x1xf32>
    %347 = tpu.matmul %39, %346, %cst_130 {dimension_numbers = #tpu.dot_dimension_numbers<[1], [0], [0], [1], [0, 0, 1, 1], [], []>} : vector<8x8xf32>, vector<8x1xf32>, vector<8x1xf32> -> vector<8x1xf32>
    %348 = tpu.reciprocal %347 {approx = true} : vector<8x1xf32> -> vector<8x1xf32>
    %cst_131 = arith.constant 1.250000e-01 : f32
    %349 = vector.broadcast %cst_131 : f32 to vector<8x1xf32>
    %350 = arith.mulf %349, %348 : vector<8x1xf32>
    %cst_132 = arith.constant dense<0.000000e+00> : vector<8x1xf32>
    %351 = tpu.matmul %40, %350, %cst_132 {dimension_numbers = #tpu.dot_dimension_numbers<[1], [0], [0], [1], [0, 0, 1, 1], [], []>} : vector<8x8xf32>, vector<8x1xf32>, vector<8x1xf32> -> vector<8x1xf32>
    %352 = arith.mulf %346, %351 : vector<8x1xf32>
    %cst_133 = arith.constant 1.250000e-01 : f32
    %353 = vector.broadcast %cst_133 : f32 to vector<8x1xf32>
    %354 = arith.subf %352, %353 : vector<8x1xf32>
    %355 = math.absf %354 : vector<8x1xf32>
    %356 = vector.shape_cast %355 : vector<8x1xf32> to vector<1x8x1xf32>
    %cst_134 = arith.constant dense<0xFF800000> : vector<1xf32>
    %357 = vector.multi_reduction <maximumf>, %356, %cst_134 [1, 2] : vector<1x8x1xf32> to vector<1xf32>
    %358 = vector.shape_cast %357 : vector<1xf32> to vector<1x1x1xf32>
    %359 = vector.extract %358[0, 0, 0] : f32 from vector<1x1x1xf32>
    %cst_135 = arith.constant 9.99999997E-7 : f32
    %360 = arith.cmpf ole, %359, %cst_135 : f32
    %361 = arith.ori %342, %360 : i1
    %362 = tpu.reciprocal %351 {approx = true} : vector<8x1xf32> -> vector<8x1xf32>
    %cst_136 = arith.constant 1.250000e-01 : f32
    %363 = vector.broadcast %cst_136 : f32 to vector<8x1xf32>
    %364 = arith.mulf %363, %362 : vector<8x1xf32>
    %365 = arith.select %361, %346, %364 : vector<8x1xf32>
    %c17_i32 = arith.constant 17 : i32
    %cst_137 = arith.constant dense<0.000000e+00> : vector<8x1xf32>
    %366 = tpu.matmul %39, %365, %cst_137 {dimension_numbers = #tpu.dot_dimension_numbers<[1], [0], [0], [1], [0, 0, 1, 1], [], []>} : vector<8x8xf32>, vector<8x1xf32>, vector<8x1xf32> -> vector<8x1xf32>
    %367 = tpu.reciprocal %366 {approx = true} : vector<8x1xf32> -> vector<8x1xf32>
    %cst_138 = arith.constant 1.250000e-01 : f32
    %368 = vector.broadcast %cst_138 : f32 to vector<8x1xf32>
    %369 = arith.mulf %368, %367 : vector<8x1xf32>
    %cst_139 = arith.constant dense<0.000000e+00> : vector<8x1xf32>
    %370 = tpu.matmul %40, %369, %cst_139 {dimension_numbers = #tpu.dot_dimension_numbers<[1], [0], [0], [1], [0, 0, 1, 1], [], []>} : vector<8x8xf32>, vector<8x1xf32>, vector<8x1xf32> -> vector<8x1xf32>
    %371 = arith.mulf %365, %370 : vector<8x1xf32>
    %cst_140 = arith.constant 1.250000e-01 : f32
    %372 = vector.broadcast %cst_140 : f32 to vector<8x1xf32>
    %373 = arith.subf %371, %372 : vector<8x1xf32>
    %374 = math.absf %373 : vector<8x1xf32>
    %375 = vector.shape_cast %374 : vector<8x1xf32> to vector<1x8x1xf32>
    %cst_141 = arith.constant dense<0xFF800000> : vector<1xf32>
    %376 = vector.multi_reduction <maximumf>, %375, %cst_141 [1, 2] : vector<1x8x1xf32> to vector<1xf32>
    %377 = vector.shape_cast %376 : vector<1xf32> to vector<1x1x1xf32>
    %378 = vector.extract %377[0, 0, 0] : f32 from vector<1x1x1xf32>
    %cst_142 = arith.constant 9.99999997E-7 : f32
    %379 = arith.cmpf ole, %378, %cst_142 : f32
    %380 = arith.ori %361, %379 : i1
    %381 = tpu.reciprocal %370 {approx = true} : vector<8x1xf32> -> vector<8x1xf32>
    %cst_143 = arith.constant 1.250000e-01 : f32
    %382 = vector.broadcast %cst_143 : f32 to vector<8x1xf32>
    %383 = arith.mulf %382, %381 : vector<8x1xf32>
    %384 = arith.select %380, %365, %383 : vector<8x1xf32>
    %c18_i32 = arith.constant 18 : i32
    %cst_144 = arith.constant dense<0.000000e+00> : vector<8x1xf32>
    %385 = tpu.matmul %39, %384, %cst_144 {dimension_numbers = #tpu.dot_dimension_numbers<[1], [0], [0], [1], [0, 0, 1, 1], [], []>} : vector<8x8xf32>, vector<8x1xf32>, vector<8x1xf32> -> vector<8x1xf32>
    %386 = tpu.reciprocal %385 {approx = true} : vector<8x1xf32> -> vector<8x1xf32>
    %cst_145 = arith.constant 1.250000e-01 : f32
    %387 = vector.broadcast %cst_145 : f32 to vector<8x1xf32>
    %388 = arith.mulf %387, %386 : vector<8x1xf32>
    %cst_146 = arith.constant dense<0.000000e+00> : vector<8x1xf32>
    %389 = tpu.matmul %40, %388, %cst_146 {dimension_numbers = #tpu.dot_dimension_numbers<[1], [0], [0], [1], [0, 0, 1, 1], [], []>} : vector<8x8xf32>, vector<8x1xf32>, vector<8x1xf32> -> vector<8x1xf32>
    %390 = arith.mulf %384, %389 : vector<8x1xf32>
    %cst_147 = arith.constant 1.250000e-01 : f32
    %391 = vector.broadcast %cst_147 : f32 to vector<8x1xf32>
    %392 = arith.subf %390, %391 : vector<8x1xf32>
    %393 = math.absf %392 : vector<8x1xf32>
    %394 = vector.shape_cast %393 : vector<8x1xf32> to vector<1x8x1xf32>
    %cst_148 = arith.constant dense<0xFF800000> : vector<1xf32>
    %395 = vector.multi_reduction <maximumf>, %394, %cst_148 [1, 2] : vector<1x8x1xf32> to vector<1xf32>
    %396 = vector.shape_cast %395 : vector<1xf32> to vector<1x1x1xf32>
    %397 = vector.extract %396[0, 0, 0] : f32 from vector<1x1x1xf32>
    %cst_149 = arith.constant 9.99999997E-7 : f32
    %398 = arith.cmpf ole, %397, %cst_149 : f32
    %399 = arith.ori %380, %398 : i1
    %400 = tpu.reciprocal %389 {approx = true} : vector<8x1xf32> -> vector<8x1xf32>
    %cst_150 = arith.constant 1.250000e-01 : f32
    %401 = vector.broadcast %cst_150 : f32 to vector<8x1xf32>
    %402 = arith.mulf %401, %400 : vector<8x1xf32>
    %403 = arith.select %399, %384, %402 : vector<8x1xf32>
    %c19_i32 = arith.constant 19 : i32
    %cst_151 = arith.constant dense<0.000000e+00> : vector<8x1xf32>
    %404 = tpu.matmul %39, %403, %cst_151 {dimension_numbers = #tpu.dot_dimension_numbers<[1], [0], [0], [1], [0, 0, 1, 1], [], []>} : vector<8x8xf32>, vector<8x1xf32>, vector<8x1xf32> -> vector<8x1xf32>
    %405 = tpu.reciprocal %404 {approx = true} : vector<8x1xf32> -> vector<8x1xf32>
    %cst_152 = arith.constant 1.250000e-01 : f32
    %406 = vector.broadcast %cst_152 : f32 to vector<8x1xf32>
    %407 = arith.mulf %406, %405 : vector<8x1xf32>
    %cst_153 = arith.constant dense<0.000000e+00> : vector<8x1xf32>
    %408 = tpu.matmul %40, %407, %cst_153 {dimension_numbers = #tpu.dot_dimension_numbers<[1], [0], [0], [1], [0, 0, 1, 1], [], []>} : vector<8x8xf32>, vector<8x1xf32>, vector<8x1xf32> -> vector<8x1xf32>
    %409 = arith.mulf %403, %408 : vector<8x1xf32>
    %cst_154 = arith.constant 1.250000e-01 : f32
    %410 = vector.broadcast %cst_154 : f32 to vector<8x1xf32>
    %411 = arith.subf %409, %410 : vector<8x1xf32>
    %412 = math.absf %411 : vector<8x1xf32>
    %413 = vector.shape_cast %412 : vector<8x1xf32> to vector<1x8x1xf32>
    %cst_155 = arith.constant dense<0xFF800000> : vector<1xf32>
    %414 = vector.multi_reduction <maximumf>, %413, %cst_155 [1, 2] : vector<1x8x1xf32> to vector<1xf32>
    %415 = vector.shape_cast %414 : vector<1xf32> to vector<1x1x1xf32>
    %416 = vector.extract %415[0, 0, 0] : f32 from vector<1x1x1xf32>
    %cst_156 = arith.constant 9.99999997E-7 : f32
    %417 = arith.cmpf ole, %416, %cst_156 : f32
    %418 = arith.ori %399, %417 : i1
    %419 = tpu.reciprocal %408 {approx = true} : vector<8x1xf32> -> vector<8x1xf32>
    %cst_157 = arith.constant 1.250000e-01 : f32
    %420 = vector.broadcast %cst_157 : f32 to vector<8x1xf32>
    %421 = arith.mulf %420, %419 : vector<8x1xf32>
    %422 = arith.select %418, %403, %421 : vector<8x1xf32>
    %423 = vector.broadcast %407 : vector<8x1xf32> to vector<8x8xf32>
    %424 = arith.mulf %423, %39 : vector<8x8xf32>
    %425 = tpu.transpose %422, [1, 0] : vector<8x1xf32> -> vector<1x8xf32>
    %426 = vector.broadcast %425 : vector<1x8xf32> to vector<8x8xf32>
    %427 = arith.mulf %424, %426 : vector<8x8xf32>
    %c0_158 = arith.constant 0 : index
    %c0_159 = arith.constant 0 : index
    %c0_160 = arith.constant 0 : index
    %428 = vector.load %arg4[%c0_158, %c0_159, %c0_160] : memref<1x8x8xf32, #tpu.memory_space<vmem>>, vector<1x8x8xf32>
    %429 = vector.shape_cast %428 : vector<1x8x8xf32> to vector<8x8xf32>
    %430 = vector.shape_cast %427 : vector<8x8xf32> to vector<1x8x8xf32>
    tpu.vector_store %arg4[%c0_158, %c0_159, %c0_160], %430 {strides = array<i32>} : memref<1x8x8xf32, #tpu.memory_space<vmem>>, vector<1x8x8xf32>,
    %431 = arith.mulf %427, %31 : vector<8x8xf32>
    %432 = vector.shape_cast %431 : vector<8x8xf32> to vector<1x8x8xf32>
    %cst_161 = arith.constant dense<0.000000e+00> : vector<1xf32>
    %433 = vector.multi_reduction <add>, %432, %cst_161 [1, 2] : vector<1x8x8xf32> to vector<1xf32>
    %434 = vector.shape_cast %433 : vector<1xf32> to vector<1x1x1xf32>
    %435 = vector.extract %434[0, 0, 0] : f32 from vector<1x1x1xf32>
    %436 = vector.broadcast %435 : f32 to vector<1x1x1xf32>
    %c0_162 = arith.constant 0 : index
    %c0_163 = arith.constant 0 : index
    %c0_164 = arith.constant 0 : index
    %437 = vector.load %arg3[%c0_162, %c0_163, %c0_164] : memref<1x1x1xf32, #tpu.memory_space<vmem>>, vector<1x1x1xf32>
    tpu.vector_store %arg3[%c0_162, %c0_163, %c0_164], %436 {strides = array<i32>} : memref<1x1x1xf32, #tpu.memory_space<vmem>>, vector<1x1x1xf32>,
    return
  }
  func.func @transform_0(%arg0: i32) -> (i32, i32, i32) {
    %c0_i32 = arith.constant 0 : i32
    %c0_i32_0 = arith.constant 0 : i32
    %c0_i32_1 = arith.constant 0 : i32
    return %arg0, %c0_i32, %c0_i32_0 : i32, i32, i32
  }
  func.func @transform_1(%arg0: i32) -> (i32, i32, i32) {
    %c0_i32 = arith.constant 0 : i32
    %c0_i32_0 = arith.constant 0 : i32
    %c0_i32_1 = arith.constant 0 : i32
    return %arg0, %c0_i32, %c0_i32_0 : i32, i32, i32
  }
  func.func @transform_2(%arg0: i32) -> (i32, i32, i32) {
    %c0_i32 = arith.constant 0 : i32
    %c0_i32_0 = arith.constant 0 : i32
    %c0_i32_1 = arith.constant 0 : i32
    return %arg0, %c0_i32, %c0_i32_0 : i32, i32, i32
  }
  func.func @transform_3(%arg0: i32) -> (i32, i32, i32) {
    %c0_i32 = arith.constant 0 : i32
    %c0_i32_0 = arith.constant 0 : i32
    %c0_i32_1 = arith.constant 0 : i32
    return %arg0, %c0_i32, %c0_i32_0 : i32, i32, i32
  }
  func.func @transform_4(%arg0: i32) -> (i32, i32, i32) {
    %c0_i32 = arith.constant 0 : i32
    %c0_i32_0 = arith.constant 0 : i32
    %c0_i32_1 = arith.constant 0 : i32
    return %arg0, %c0_i32, %c0_i32_0 : i32, i32, i32
  }
}

</mosaic_0001>

<llo_original>
// kernel: tpu_custom_call.1
$region0: #{tpu_custom_call.1}
  #allocation0 [shape = 'u32[]', space=smem, size = 0x4, offset = 0x4, fixed_abs, tag = 'smem constant byte address 0x4 - core index']
  #allocation1 [shape = 'u32[144,128]{1,0:T(1,128)}', space=vmem, size = 0x12000, scoped, tag = 'internal scratch']
  %s0 = inlined_call_operand.hbm [shape: f32[1,8,32], index: 0, kind: input, shape index: {}]
  %s1 = inlined_call_operand.hbm [shape: f32[1,8,32], index: 1, kind: input, shape index: {}]
  %s2 = inlined_call_operand.hbm [shape: f32[1,1,1], index: 2, kind: output, shape index: {0}]
  %s3 = inlined_call_operand.hbm [shape: f32[1,8,8], index: 3, kind: output, shape index: {1}]
  %s4 = inlined_call_operand.hbm [shape: f32[1,8,8], index: 4, kind: output, shape index: {2}]
  %5 = xla_tuple %s2, %s3, %s4
  %s6 = sld [smem:[#allocation0]]
  $region42: #{tpu_custom_call.1} parent=0
    _
  %s8 = ssub.s32 1, %s6
  %s9 = scalar_select 0, %s8, %s6
  $region1: #{tpu_custom_call.1} parent=0
    #allocation2 [shape = 'u8[4096]{0}', space=vmem, size = 0x1000, scoped, tag = 'input window, operand 0, single buffered']
    #allocation3 [shape = 's32[1]{0}', space=sflag, size = 0x4, scoped, tag = 'scoped memory for tpu_custom_call.1']
    #allocation4 [shape = 's32[1]{0}', space=sflag, size = 0x4, scoped, tag = 'scoped memory for tpu_custom_call.1']
    #allocation5 [shape = 'u8[4096]{0}', space=vmem, size = 0x1000, scoped, tag = 'input window, operand 1, single buffered']
    #allocation6 [shape = 's32[1]{0}', space=sflag, size = 0x4, scoped, tag = 'scoped memory for tpu_custom_call.1']
    #allocation7 [shape = 'u8[512]{0}', space=vmem, size = 0x400, scoped, tag = 'output window, operand 0, single buffered']
    #allocation8 [shape = 'u8[4096]{0}', space=vmem, size = 0x1000, scoped, tag = 'output window, operand 1, single buffered']
    #allocation9 [shape = 's32[1]{0}', space=sflag, size = 0x4, scoped, tag = 'scoped memory for tpu_custom_call.1']
    #allocation10 [shape = 'u8[4096]{0}', space=vmem, size = 0x1000, scoped, tag = 'output window, operand 2, single buffered']
    %10 = vsyncpa [#allocation3], 0
    %11 = vsyncpa [#allocation6], 0
    %12 = vsyncpa [#allocation4], 0
    %13 = vsyncpa [#allocation9], 0
    // Predicated region
    $region2: #{tpu_custom_call.1} parent=1 // pred_check
      _
    $region3: #{tpu_custom_call.1} parent=1 // pred_check_branch
      %15 = sbr.rel (0) target = $region5
    $region4: #{tpu_custom_call.1} parent=1 // pred_region
      %s17 = ssub.s32 128, 128
      %18 = vsyncadd [#allocation3], %s17
      %s20 = sshll.u32 [#allocation2], 4
      %s21 = int_to_ptr.vmem [resolvable:$true] %s20
      %23 = dma.hbm_to_vmem [thread:$0]  %s0, 128, %s21, [#allocation3]
    $region5: #{tpu_custom_call.1} parent=1 // pred_fallthru
      _
    // Predicated region
    $region6: #{tpu_custom_call.1} parent=1 // pred_check
      _
    $region7: #{tpu_custom_call.1} parent=1 // pred_check_branch
      %25 = sbr.rel (0) target = $region9
    $region8: #{tpu_custom_call.1} parent=1 // pred_region
      %s27 = ssub.s32 128, 128
      %28 = vsyncadd [#allocation6], %s27
      %s30 = sshll.u32 [#allocation5], 4
      %s31 = int_to_ptr.vmem [resolvable:$true] %s30
      %33 = dma.hbm_to_vmem [thread:$0]  %s1, 128, %s31, [#allocation6]
    $region9: #{tpu_custom_call.1} parent=1 // pred_fallthru
      _
    // Predicated region
    $region10: #{tpu_custom_call.1} parent=1 // pred_check
      _
    $region11: #{tpu_custom_call.1} parent=1 // pred_check_branch
      %35 = sbr.rel (0) target = $region13
    $region12: #{tpu_custom_call.1} parent=1 // pred_region
      %36 = dma.done [#allocation3], 128
    $region13: #{tpu_custom_call.1} parent=1 // pred_fallthru
      _
    // Predicated region
    $region14: #{tpu_custom_call.1} parent=1 // pred_check
      _
    $region15: #{tpu_custom_call.1} parent=1 // pred_check_branch
      %38 = sbr.rel (0) target = $region17
    $region16: #{tpu_custom_call.1} parent=1 // pred_region
      %39 = dma.done [#allocation6], 128
    $region17: #{tpu_custom_call.1} parent=1 // pred_fallthru
      _
    %v41 = vld [vmem:[#allocation2] sm:$0xff]
    %v42 = vld [vmem:[#allocation5] sm:$0xff]
    %v43 = vmul.f32 %v41, %v41
    %vm44 = vcmask 261120
    %v45 = vsel %vm44, %v43, 0.0
    %46 = vadd.xlane.f32.xlu0 %v45
    %v47 = vpop.xlane.xlu0 %46
    %v48 = vrsqrt.pop %v47
    %v49 = vmul.f32 %v47, %v48
    %vm50 = vcmp.eq.f32.partialorder %v47, inf
    %v51 = vsel %vm50, %v47, %v49
    %vm52 = vcmp.eq.f32.partialorder %v47, 0.0
    %v53 = vand.u32 %v47, 2147483648
    %v54 = vsel %vm52, %v53, %v51
    %v55 = vmul.f32 %v42, %v42
    %v56 = vsel %vm44, %v55, 0.0
    %57 = vadd.xlane.f32.xlu0 %v56
    %v58 = vpop.xlane.xlu0 %57
    %v59 = vrsqrt.pop %v58
    %v60 = vmul.f32 %v58, %v59
    %vm61 = vcmp.eq.f32.partialorder %v58, inf
    %v62 = vsel %vm61, %v58, %v60
    %vm63 = vcmp.eq.f32.partialorder %v58, 0.0
    %v64 = vand.u32 %v58, 2147483648
    %v65 = vsel %vm63, %v64, %v62
    %v66 = vmax.f32 %v54, 1e-12
    %v67 = vrcp.pop %v66
    %v68 = vmul.f32 %v41, %v67
    %v69 = vmax.f32 %v65, 1e-12
    %v70 = vrcp.pop %v69
    %v71 = vmul.f32 %v42, %v70
    %v72 = vpack.c.bf16 %v68, %v68
    %v73 = vpack.c.bf16 %v71, %v71
    %v75 = vsel %vm44, %v72, 0
    %v78 = vsel %vm44, %v73, 0
    %80 = vmatprep.subr.bf16.mxu0 0
    %81 = vmatpush1.bf16.xpose.msra.mxu0 0
    %82 = vmatprep.subr.bf16.mxu0 0
    %83 = vmatpush1.bf16.xpose.msra.mxu0 0
    %84 = vmatprep.subr.bf16.mxu0 0
    %85 = vmatpush1.bf16.xpose.msra.mxu0 0
    %86 = vmatprep.subr.bf16.mxu0 0
    %87 = vmatpush1.bf16.xpose.msra.mxu0 0
    %88 = vmatprep.subr.bf16.mxu0 0
    %89 = vmatpush1.bf16.xpose.msra.mxu0 0
    %90 = vmatprep.subr.bf16.mxu0 0
    %91 = vmatpush1.bf16.xpose.msra.mxu0 0
    %92 = vmatprep.subr.bf16.mxu0 0
    %93 = vmatpush1.bf16.xpose.msra.mxu0 0
    %94 = vmatprep.subr.bf16.mxu0 0
    %95 = vmatpush1.bf16.xpose.msra.mxu0 %v78
    %96 = vmatprep.subr.bf16.mxu0 0
    %97 = vmatpush2.bf16.xpose.msra.mxu0 0
    %98 = vmatprep.subr.bf16.mxu0 0
    %99 = vmatpush2.bf16.xpose.msra.mxu0 0
    %100 = vmatprep.subr.bf16.mxu0 0
    %101 = vmatpush2.bf16.xpose.msra.mxu0 0
    %102 = vmatprep.subr.bf16.mxu0 0
    %103 = vmatpush2.bf16.xpose.msra.mxu0 0
    %104 = vmatprep.subr.bf16.mxu0 0
    %105 = vmatpush2.bf16.xpose.msra.mxu0 0
    %106 = vmatprep.subr.bf16.mxu0 0
    %107 = vmatpush2.bf16.xpose.msra.mxu0 0
    %108 = vmatprep.subr.bf16.mxu0 0
    %109 = vmatpush2.bf16.xpose.msra.mxu0 0
    %110 = vmatprep.subr.bf16.mxu0 0
    %111 = vmatpush2.bf16.xpose.msra.mxu0 0
    %112 = vmatprep.mubr.bf16.mxu0 0
    %113 = vmatmul.mubr.bf16.gmra.mxu0 %v75
    %v114 = vpop.f32.mrf.mxu0
    %v115 = vadd.f32 0.0, %v114
    %v116 = vpop.f32.mrf.mxu0
    %v117 = vpop.f32.mrf.mxu0
    %v118 = vpop.f32.mrf.mxu0
    %119 = vdwg.mxu0
    %v120 = vmul.f32 %v115, %v115
    %vm121 = vcmask 64512
    %v122 = vsel %vm121, %v120, inf
    %123 = vmin.xlane.f32.xlu0 %v122
    %v124 = vpop.xlane.xlu0 %123
    %v125 = vsub.f32 %v120, %v124
    %v126 = vsel %vm121, %v125, -inf
    %127 = vmax.xlane.f32.xlu0 %v126
    %v128 = vpop.xlane.xlu0 %127
    %v129 = vrcp.pop %v128
    %v130 = vmul.f32 %v125, %v129
    %131 = vst.msk [vmem:[#allocation10] sm:$0xff] %vm121, %v130
    %v132 = vsub.f32 1.0, %v130
    %v133 = vmul.f32 %v132, -1.0
    %v134 = vmul.f32 %v133, 1.442695
    %v135 = vpow.pop %v134
    %136 = vxpose.xlu0.b32.start [1/16] %v135, 128
    %137 = vxpose.xlu0.b32.cont [2/16] 0.0, 128
    %138 = vxpose.xlu0.b32.cont [3/16] 0.0, 128
    %139 = vxpose.xlu0.b32.cont [4/16] 0.0, 128
    %140 = vxpose.xlu0.b32.cont [5/16] 0.0, 128
    %141 = vxpose.xlu0.b32.cont [6/16] 0.0, 128
    %142 = vxpose.xlu0.b32.cont [7/16] 0.0, 128
    %143 = vxpose.xlu0.b32.cont [8/16] 0.0, 128
    %144 = vxpose.xlu0.b32.cont [9/16] 0.0, 128
    %145 = vxpose.xlu0.b32.cont [10/16] 0.0, 128
    %146 = vxpose.xlu0.b32.cont [11/16] 0.0, 128
    %147 = vxpose.xlu0.b32.cont [12/16] 0.0, 128
    %148 = vxpose.xlu0.b32.cont [13/16] 0.0, 128
    %149 = vxpose.xlu0.b32.cont [14/16] 0.0, 128
    %150 = vxpose.xlu0.b32.cont [15/16] 0.0, 128
    %151 = vxpose.xlu0.b32.end [16/16] 0.0, 128
    %v152 = vpop.trf.xlu0
    %v153 = vpop.trf.xlu0
    %v154 = vpop.trf.xlu0
    %v155 = vpop.trf.xlu0
    %v156 = vpop.trf.xlu0
    %v157 = vpop.trf.xlu0
    %v158 = vpop.trf.xlu0
    %v159 = vpop.trf.xlu0
    %v160 = vpop.trf.xlu0
    %v161 = vpop.trf.xlu0
    %v162 = vpop.trf.xlu0
    %v163 = vpop.trf.xlu0
    %v164 = vpop.trf.xlu0
    %v165 = vpop.trf.xlu0
    %v166 = vpop.trf.xlu0
    %v167 = vpop.trf.xlu0
    %v169 = vsel %vm121, %v135, 0
    %171 = vmatprep.subr.mxu0 0.0
    %172 = vmatpush1.msra.mxu0 0.0
    %173 = vmatprep.subr.mxu0 0.0
    %174 = vmatpush1.msra.mxu0 0.0
    %175 = vmatprep.subr.mxu0 0.0
    %176 = vmatpush1.msra.mxu0 0.0
    %177 = vmatprep.subr.mxu0 0.0
    %178 = vmatpush1.msra.mxu0 0.0
    %179 = vmatprep.subr.mxu0 0.0
    %180 = vmatpush1.msra.mxu0 0.0
    %181 = vmatprep.subr.mxu0 0.0
    %182 = vmatpush1.msra.mxu0 0.0
    %183 = vmatprep.subr.mxu0 0.0
    %184 = vmatpush1.msra.mxu0 0.0
    %185 = vmatprep.subr.mxu0 0.0
    %186 = vmatpush1.msra.mxu0 0.0
    %187 = vmatprep.subr.mxu0 0.0
    %188 = vmatpush1.msra.mxu0 0.0
    %189 = vmatprep.subr.mxu0 0.0
    %190 = vmatpush1.msra.mxu0 0.0
    %191 = vmatprep.subr.mxu0 0.0
    %192 = vmatpush1.msra.mxu0 0.0
    %193 = vmatprep.subr.mxu0 0.0
    %194 = vmatpush1.msra.mxu0 0.0
    %195 = vmatprep.subr.mxu0 0.0
    %196 = vmatpush1.msra.mxu0 0.0
    %197 = vmatprep.subr.mxu0 0.0
    %198 = vmatpush1.msra.mxu0 0.0
    %199 = vmatprep.subr.mxu0 0.0
    %200 = vmatpush1.msra.mxu0 0.0
    %201 = vmatprep.subr.mxu0 0.0
    %202 = vmatpush1.msra.mxu0 1.0
    %203 = vmatprep.subr.mxu0 0.0
    %204 = vmatpush2.msra.mxu0 0.0
    %205 = vmatprep.subr.mxu0 0.0
    %206 = vmatpush2.msra.mxu0 0.0
    %207 = vmatprep.subr.mxu0 0.0
    %208 = vmatpush2.msra.mxu0 0.0
    %209 = vmatprep.subr.mxu0 0.0
    %210 = vmatpush2.msra.mxu0 0.0
    %211 = vmatprep.subr.mxu0 0.0
    %212 = vmatpush2.msra.mxu0 0.0
    %213 = vmatprep.subr.mxu0 0.0
    %214 = vmatpush2.msra.mxu0 0.0
    %215 = vmatprep.subr.mxu0 0.0
    %216 = vmatpush2.msra.mxu0 0.0
    %217 = vmatprep.subr.mxu0 0.0
    %218 = vmatpush2.msra.mxu0 0.0
    %219 = vmatprep.subr.mxu0 0.0
    %220 = vmatpush2.msra.mxu0 0.0
    %221 = vmatprep.subr.mxu0 0.0
    %222 = vmatpush2.msra.mxu0 0.0
    %223 = vmatprep.subr.mxu0 0.0
    %224 = vmatpush2.msra.mxu0 0.0
    %225 = vmatprep.subr.mxu0 0.0
    %226 = vmatpush2.msra.mxu0 0.0
    %227 = vmatprep.subr.mxu0 0.0
    %228 = vmatpush2.msra.mxu0 0.0
    %229 = vmatprep.subr.mxu0 0.0
    %230 = vmatpush2.msra.mxu0 0.0
    %231 = vmatprep.subr.mxu0 0.0
    %232 = vmatpush2.msra.mxu0 0.0
    %233 = vmatprep.subr.mxu0 0.0
    %234 = vmatpush2.msra.mxu0 0.0
    %235 = vmatprep.mubr.f32.mxu0 0.0
    %236 = vmatmul.mubr.f32.gmra.mxu0 %v169
    %v237 = vpop.f32.mrf.mxu0
    %v238 = vadd.f32 0.0, %v237
    %v239 = vpop.f32.mrf.mxu0
    %240 = vdwg.mxu0
    %v241 = vrcp.pop %v238
    %v242 = vmul.f32 %v241, 0.125
    %v244 = vsel %vm121, %v152, 0
    %246 = vmatprep.subr.mxu0 0.0
    %247 = vmatpush1.msra.mxu0 0.0
    %248 = vmatprep.subr.mxu0 0.0
    %249 = vmatpush1.msra.mxu0 0.0
    %250 = vmatprep.subr.mxu0 0.0
    %251 = vmatpush1.msra.mxu0 0.0
    %252 = vmatprep.subr.mxu0 0.0
    %253 = vmatpush1.msra.mxu0 0.0
    %254 = vmatprep.subr.mxu0 0.0
    %255 = vmatpush1.msra.mxu0 0.0
    %256 = vmatprep.subr.mxu0 0.0
    %257 = vmatpush1.msra.mxu0 0.0
    %258 = vmatprep.subr.mxu0 0.0
    %259 = vmatpush1.msra.mxu0 0.0
    %260 = vmatprep.subr.mxu0 0.0
    %261 = vmatpush1.msra.mxu0 0.0
    %262 = vmatprep.subr.mxu0 0.0
    %263 = vmatpush1.msra.mxu0 0.0
    %264 = vmatprep.subr.mxu0 0.0
    %265 = vmatpush1.msra.mxu0 0.0
    %266 = vmatprep.subr.mxu0 0.0
    %267 = vmatpush1.msra.mxu0 0.0
    %268 = vmatprep.subr.mxu0 0.0
    %269 = vmatpush1.msra.mxu0 0.0
    %270 = vmatprep.subr.mxu0 0.0
    %271 = vmatpush1.msra.mxu0 0.0
    %272 = vmatprep.subr.mxu0 0.0
    %273 = vmatpush1.msra.mxu0 0.0
    %274 = vmatprep.subr.mxu0 0.0
    %275 = vmatpush1.msra.mxu0 0.0
    %276 = vmatprep.subr.mxu0 0.0
    %277 = vmatpush1.msra.mxu0 %v242
    %278 = vmatprep.subr.mxu0 0.0
    %279 = vmatpush2.msra.mxu0 0.0
    %280 = vmatprep.subr.mxu0 0.0
    %281 = vmatpush2.msra.mxu0 0.0
    %282 = vmatprep.subr.mxu0 0.0
    %283 = vmatpush2.msra.mxu0 0.0
    %284 = vmatprep.subr.mxu0 0.0
    %285 = vmatpush2.msra.mxu0 0.0
    %286 = vmatprep.subr.mxu0 0.0
    %287 = vmatpush2.msra.mxu0 0.0
    %288 = vmatprep.subr.mxu0 0.0
    %289 = vmatpush2.msra.mxu0 0.0
    %290 = vmatprep.subr.mxu0 0.0
    %291 = vmatpush2.msra.mxu0 0.0
    %292 = vmatprep.subr.mxu0 0.0
    %293 = vmatpush2.msra.mxu0 0.0
    %294 = vmatprep.subr.mxu0 0.0
    %295 = vmatpush2.msra.mxu0 0.0
    %296 = vmatprep.subr.mxu0 0.0
    %297 = vmatpush2.msra.mxu0 0.0
    %298 = vmatprep.subr.mxu0 0.0
    %299 = vmatpush2.msra.mxu0 0.0
    %300 = vmatprep.subr.mxu0 0.0
    %301 = vmatpush2.msra.mxu0 0.0
    %302 = vmatprep.subr.mxu0 0.0
    %303 = vmatpush2.msra.mxu0 0.0
    %304 = vmatprep.subr.mxu0 0.0
    %305 = vmatpush2.msra.mxu0 0.0
    %306 = vmatprep.subr.mxu0 0.0
    %307 = vmatpush2.msra.mxu0 0.0
    %308 = vmatprep.subr.mxu0 0.0
    %309 = vmatpush2.msra.mxu0 0.0
    %310 = vmatprep.mubr.f32.mxu0 0.0
    %311 = vmatmul.mubr.f32.gmra.mxu0 %v244
    %v312 = vpop.f32.mrf.mxu0
    %v313 = vadd.f32 0.0, %v312
    %v314 = vpop.f32.mrf.mxu0
    %315 = vdwg.mxu0
    %v316 = vsub.f32 %v313, 0.125
    %v317 = vand.u32 2147483647, %v316
    %vm318 = vcmask 7168
    %v319 = vsel %vm318, %v317, -inf
    %320 = vmax.xlane.f32.xlu0 %v319
    %v321 = vpop.xlane.xlu0 %320
    %v322 = vrot.slane %v321, 4
    %v323 = vmax.f32 %v321, %v322
    %v324 = vrot.slane %v323, 2
    %v325 = vmax.f32 %v323, %v324
    %v326 = vrot.slane %v325, 1
    %v327 = vmax.f32 %v325, %v326
    %s328 = vtos %v327
    %p329 = scmp.le.f32.partialorder %s328, 1e-06
    %v330 = vrcp.pop %v313
    %v331 = vmul.f32 %v330, 0.125
    %s332 = scalar_select %p329, 1, 0
    %v333 = vstv %s332
    %vm334 = vcmp.eq.s32.totalorder %v333, 1
    %v335 = vsel %vm334, 1.0, %v331
    %336 = vmatprep.subr.mxu0 0.0
    %337 = vmatpush1.msra.mxu0 0.0
    %338 = vmatprep.subr.mxu0 0.0
    %339 = vmatpush1.msra.mxu0 0.0
    %340 = vmatprep.subr.mxu0 0.0
    %341 = vmatpush1.msra.mxu0 0.0
    %342 = vmatprep.subr.mxu0 0.0
    %343 = vmatpush1.msra.mxu0 0.0
    %344 = vmatprep.subr.mxu0 0.0
    %345 = vmatpush1.msra.mxu0 0.0
    %346 = vmatprep.subr.mxu0 0.0
    %347 = vmatpush1.msra.mxu0 0.0
    %348 = vmatprep.subr.mxu0 0.0
    %349 = vmatpush1.msra.mxu0 0.0
    %350 = vmatprep.subr.mxu0 0.0
    %351 = vmatpush1.msra.mxu0 0.0
    %352 = vmatprep.subr.mxu0 0.0
    %353 = vmatpush1.msra.mxu0 0.0
    %354 = vmatprep.subr.mxu0 0.0
    %355 = vmatpush1.msra.mxu0 0.0
    %356 = vmatprep.subr.mxu0 0.0
    %357 = vmatpush1.msra.mxu0 0.0
    %358 = vmatprep.subr.mxu0 0.0
    %359 = vmatpush1.msra.mxu0 0.0
    %360 = vmatprep.subr.mxu0 0.0
    %361 = vmatpush1.msra.mxu0 0.0
    %362 = vmatprep.subr.mxu0 0.0
    %363 = vmatpush1.msra.mxu0 0.0
    %364 = vmatprep.subr.mxu0 0.0
    %365 = vmatpush1.msra.mxu0 0.0
    %366 = vmatprep.subr.mxu0 0.0
    %367 = vmatpush1.msra.mxu0 %v335
    %368 = vmatprep.subr.mxu0 0.0
    %369 = vmatpush2.msra.mxu0 0.0
    %370 = vmatprep.subr.mxu0 0.0
    %371 = vmatpush2.msra.mxu0 0.0
    %372 = vmatprep.subr.mxu0 0.0
    %373 = vmatpush2.msra.mxu0 0.0
    %374 = vmatprep.subr.mxu0 0.0
    %375 = vmatpush2.msra.mxu0 0.0
    %376 = vmatprep.subr.mxu0 0.0
    %377 = vmatpush2.msra.mxu0 0.0
    %378 = vmatprep.subr.mxu0 0.0
    %379 = vmatpush2.msra.mxu0 0.0
    %380 = vmatprep.subr.mxu0 0.0
    %381 = vmatpush2.msra.mxu0 0.0
    %382 = vmatprep.subr.mxu0 0.0
    %383 = vmatpush2.msra.mxu0 0.0
    %384 = vmatprep.subr.mxu0 0.0
    %385 = vmatpush2.msra.mxu0 0.0
    %386 = vmatprep.subr.mxu0 0.0
    %387 = vmatpush2.msra.mxu0 0.0
    %388 = vmatprep.subr.mxu0 0.0
    %389 = vmatpush2.msra.mxu0 0.0
    %390 = vmatprep.subr.mxu0 0.0
    %391 = vmatpush2.msra.mxu0 0.0
    %392 = vmatprep.subr.mxu0 0.0
    %393 = vmatpush2.msra.mxu0 0.0
    %394 = vmatprep.subr.mxu0 0.0
    %395 = vmatpush2.msra.mxu0 0.0
    %396 = vmatprep.subr.mxu0 0.0
    %397 = vmatpush2.msra.mxu0 0.0
    %398 = vmatprep.subr.mxu0 0.0
    %399 = vmatpush2.msra.mxu0 0.0
    %400 = vmatprep.mubr.f32.mxu0 0.0
    %401 = vmatmul.mubr.f32.gmra.mxu0 %v169
    %v402 = vpop.f32.mrf.mxu0
    %v403 = vadd.f32 0.0, %v402
    %v404 = vpop.f32.mrf.mxu0
    %405 = vdwg.mxu0
    %v406 = vrcp.pop %v403
    %v407 = vmul.f32 %v406, 0.125
    %408 = vmatprep.subr.mxu0 0.0
    %409 = vmatpush1.msra.mxu0 0.0
    %410 = vmatprep.subr.mxu0 0.0
    %411 = vmatpush1.msra.mxu0 0.0
    %412 = vmatprep.subr.mxu0 0.0
    %413 = vmatpush1.msra.mxu0 0.0
    %414 = vmatprep.subr.mxu0 0.0
    %415 = vmatpush1.msra.mxu0 0.0
    %416 = vmatprep.subr.mxu0 0.0
    %417 = vmatpush1.msra.mxu0 0.0
    %418 = vmatprep.subr.mxu0 0.0
    %419 = vmatpush1.msra.mxu0 0.0
    %420 = vmatprep.subr.mxu0 0.0
    %421 = vmatpush1.msra.mxu0 0.0
    %422 = vmatprep.subr.mxu0 0.0
    %423 = vmatpush1.msra.mxu0 0.0
    %424 = vmatprep.subr.mxu0 0.0
    %425 = vmatpush1.msra.mxu0 0.0
    %426 = vmatprep.subr.mxu0 0.0
    %427 = vmatpush1.msra.mxu0 0.0
    %428 = vmatprep.subr.mxu0 0.0
    %429 = vmatpush1.msra.mxu0 0.0
    %430 = vmatprep.subr.mxu0 0.0
    %431 = vmatpush1.msra.mxu0 0.0
    %432 = vmatprep.subr.mxu0 0.0
    %433 = vmatpush1.msra.mxu0 0.0
    %434 = vmatprep.subr.mxu0 0.0
    %435 = vmatpush1.msra.mxu0 0.0
    %436 = vmatprep.subr.mxu0 0.0
    %437 = vmatpush1.msra.mxu0 0.0
    %438 = vmatprep.subr.mxu0 0.0
    %439 = vmatpush1.msra.mxu0 %v407
    %440 = vmatprep.subr.mxu0 0.0
    %441 = vmatpush2.msra.mxu0 0.0
    %442 = vmatprep.subr.mxu0 0.0
    %443 = vmatpush2.msra.mxu0 0.0
    %444 = vmatprep.subr.mxu0 0.0
    %445 = vmatpush2.msra.mxu0 0.0
    %446 = vmatprep.subr.mxu0 0.0
    %447 = vmatpush2.msra.mxu0 0.0
    %448 = vmatprep.subr.mxu0 0.0
    %449 = vmatpush2.msra.mxu0 0.0
    %450 = vmatprep.subr.mxu0 0.0
    %451 = vmatpush2.msra.mxu0 0.0
    %452 = vmatprep.subr.mxu0 0.0
    %453 = vmatpush2.msra.mxu0 0.0
    %454 = vmatprep.subr.mxu0 0.0
    %455 = vmatpush2.msra.mxu0 0.0
    %456 = vmatprep.subr.mxu0 0.0
    %457 = vmatpush2.msra.mxu0 0.0
    %458 = vmatprep.subr.mxu0 0.0
    %459 = vmatpush2.msra.mxu0 0.0
    %460 = vmatprep.subr.mxu0 0.0
    %461 = vmatpush2.msra.mxu0 0.0
    %462 = vmatprep.subr.mxu0 0.0
    %463 = vmatpush2.msra.mxu0 0.0
    %464 = vmatprep.subr.mxu0 0.0
    %465 = vmatpush2.msra.mxu0 0.0
    %466 = vmatprep.subr.mxu0 0.0
    %467 = vmatpush2.msra.mxu0 0.0
    %468 = vmatprep.subr.mxu0 0.0
    %469 = vmatpush2.msra.mxu0 0.0
    %470 = vmatprep.subr.mxu0 0.0
    %471 = vmatpush2.msra.mxu0 0.0
    %472 = vmatprep.mubr.f32.mxu0 0.0
    %473 = vmatmul.mubr.f32.gmra.mxu0 %v244
    %v474 = vpop.f32.mrf.mxu0
    %v475 = vadd.f32 0.0, %v474
    %v476 = vpop.f32.mrf.mxu0
    %477 = vdwg.mxu0
    %v478 = vmul.f32 %v335, %v475
    %v479 = vsub.f32 %v478, 0.125
    %v480 = vand.u32 2147483647, %v479
    %v481 = vsel %vm318, %v480, -inf
    %482 = vmax.xlane.f32.xlu0 %v481
    %v483 = vpop.xlane.xlu0 %482
    %v484 = vrot.slane %v483, 4
    %v485 = vmax.f32 %v483, %v484
    %v486 = vrot.slane %v485, 2
    %v487 = vmax.f32 %v485, %v486
    %v488 = vrot.slane %v487, 1
    %v489 = vmax.f32 %v487, %v488
    %s490 = vtos %v489
    %p491 = scmp.le.f32.partialorder %s490, 1e-06
    %p492 = por %p329, %p491
    %v493 = vrcp.pop %v475
    %v494 = vmul.f32 %v493, 0.125
    %s495 = scalar_select %p492, 1, 0
    %v496 = vstv %s495
    %vm497 = vcmp.eq.s32.totalorder %v496, 1
    %v498 = vsel %vm497, %v335, %v494
    %499 = vmatprep.subr.mxu0 0.0
    %500 = vmatpush1.msra.mxu0 0.0
    %501 = vmatprep.subr.mxu0 0.0
    %502 = vmatpush1.msra.mxu0 0.0
    %503 = vmatprep.subr.mxu0 0.0
    %504 = vmatpush1.msra.mxu0 0.0
    %505 = vmatprep.subr.mxu0 0.0
    %506 = vmatpush1.msra.mxu0 0.0
    %507 = vmatprep.subr.mxu0 0.0
    %508 = vmatpush1.msra.mxu0 0.0
    %509 = vmatprep.subr.mxu0 0.0
    %510 = vmatpush1.msra.mxu0 0.0
    %511 = vmatprep.subr.mxu0 0.0
    %512 = vmatpush1.msra.mxu0 0.0
    %513 = vmatprep.subr.mxu0 0.0
    %514 = vmatpush1.msra.mxu0 0.0
    %515 = vmatprep.subr.mxu0 0.0
    %516 = vmatpush1.msra.mxu0 0.0
    %517 = vmatprep.subr.mxu0 0.0
    %518 = vmatpush1.msra.mxu0 0.0
    %519 = vmatprep.subr.mxu0 0.0
    %520 = vmatpush1.msra.mxu0 0.0
    %521 = vmatprep.subr.mxu0 0.0
    %522 = vmatpush1.msra.mxu0 0.0
    %523 = vmatprep.subr.mxu0 0.0
    %524 = vmatpush1.msra.mxu0 0.0
    %525 = vmatprep.subr.mxu0 0.0
    %526 = vmatpush1.msra.mxu0 0.0
    %527 = vmatprep.subr.mxu0 0.0
    %528 = vmatpush1.msra.mxu0 0.0
    %529 = vmatprep.subr.mxu0 0.0
    %530 = vmatpush1.msra.mxu0 %v498
    %531 = vmatprep.subr.mxu0 0.0
    %532 = vmatpush2.msra.mxu0 0.0
    %533 = vmatprep.subr.mxu0 0.0
    %534 = vmatpush2.msra.mxu0 0.0
    %535 = vmatprep.subr.mxu0 0.0
    %536 = vmatpush2.msra.mxu0 0.0
    %537 = vmatprep.subr.mxu0 0.0
    %538 = vmatpush2.msra.mxu0 0.0
    %539 = vmatprep.subr.mxu0 0.0
    %540 = vmatpush2.msra.mxu0 0.0
    %541 = vmatprep.subr.mxu0 0.0
    %542 = vmatpush2.msra.mxu0 0.0
    %543 = vmatprep.subr.mxu0 0.0
    %544 = vmatpush2.msra.mxu0 0.0
    %545 = vmatprep.subr.mxu0 0.0
    %546 = vmatpush2.msra.mxu0 0.0
    %547 = vmatprep.subr.mxu0 0.0
    %548 = vmatpush2.msra.mxu0 0.0
    %549 = vmatprep.subr.mxu0 0.0
    %550 = vmatpush2.msra.mxu0 0.0
    %551 = vmatprep.subr.mxu0 0.0
    %552 = vmatpush2.msra.mxu0 0.0
    %553 = vmatprep.subr.mxu0 0.0
    %554 = vmatpush2.msra.mxu0 0.0
    %555 = vmatprep.subr.mxu0 0.0
    %556 = vmatpush2.msra.mxu0 0.0
    %557 = vmatprep.subr.mxu0 0.0
    %558 = vmatpush2.msra.mxu0 0.0
    %559 = vmatprep.subr.mxu0 0.0
    %560 = vmatpush2.msra.mxu0 0.0
    %561 = vmatprep.subr.mxu0 0.0
    %562 = vmatpush2.msra.mxu0 0.0
    %563 = vmatprep.mubr.f32.mxu0 0.0
    %564 = vmatmul.mubr.f32.gmra.mxu0 %v169
    %v565 = vpop.f32.mrf.mxu0
    %v566 = vadd.f32 0.0, %v565
    %v567 = vpop.f32.mrf.mxu0
    %568 = vdwg.mxu0
    %v569 = vrcp.pop %v566
    %v570 = vmul.f32 %v569, 0.125
    %571 = vmatprep.subr.mxu0 0.0
    %572 = vmatpush1.msra.mxu0 0.0
    %573 = vmatprep.subr.mxu0 0.0
    %574 = vmatpush1.msra.mxu0 0.0
    %575 = vmatprep.subr.mxu0 0.0
    %576 = vmatpush1.msra.mxu0 0.0
    %577 = vmatprep.subr.mxu0 0.0
    %578 = vmatpush1.msra.mxu0 0.0
    %579 = vmatprep.subr.mxu0 0.0
    %580 = vmatpush1.msra.mxu0 0.0
    %581 = vmatprep.subr.mxu0 0.0
    %582 = vmatpush1.msra.mxu0 0.0
    %583 = vmatprep.subr.mxu0 0.0
    %584 = vmatpush1.msra.mxu0 0.0
    %585 = vmatprep.subr.mxu0 0.0
    %586 = vmatpush1.msra.mxu0 0.0
    %587 = vmatprep.subr.mxu0 0.0
    %588 = vmatpush1.msra.mxu0 0.0
    %589 = vmatprep.subr.mxu0 0.0
    %590 = vmatpush1.msra.mxu0 0.0
    %591 = vmatprep.subr.mxu0 0.0
    %592 = vmatpush1.msra.mxu0 0.0
    %593 = vmatprep.subr.mxu0 0.0
    %594 = vmatpush1.msra.mxu0 0.0
    %595 = vmatprep.subr.mxu0 0.0
    %596 = vmatpush1.msra.mxu0 0.0
    %597 = vmatprep.subr.mxu0 0.0
    %598 = vmatpush1.msra.mxu0 0.0
    %599 = vmatprep.subr.mxu0 0.0
    %600 = vmatpush1.msra.mxu0 0.0
    %601 = vmatprep.subr.mxu0 0.0
    %602 = vmatpush1.msra.mxu0 %v570
    %603 = vmatprep.subr.mxu0 0.0
    %604 = vmatpush2.msra.mxu0 0.0
    %605 = vmatprep.subr.mxu0 0.0
    %606 = vmatpush2.msra.mxu0 0.0
    %607 = vmatprep.subr.mxu0 0.0
    %608 = vmatpush2.msra.mxu0 0.0
    %609 = vmatprep.subr.mxu0 0.0
    %610 = vmatpush2.msra.mxu0 0.0
    %611 = vmatprep.subr.mxu0 0.0
    %612 = vmatpush2.msra.mxu0 0.0
    %613 = vmatprep.subr.mxu0 0.0
    %614 = vmatpush2.msra.mxu0 0.0
    %615 = vmatprep.subr.mxu0 0.0
    %616 = vmatpush2.msra.mxu0 0.0
    %617 = vmatprep.subr.mxu0 0.0
    %618 = vmatpush2.msra.mxu0 0.0
    %619 = vmatprep.subr.mxu0 0.0
    %620 = vmatpush2.msra.mxu0 0.0
    %621 = vmatprep.subr.mxu0 0.0
    %622 = vmatpush2.msra.mxu0 0.0
    %623 = vmatprep.subr.mxu0 0.0
    %624 = vmatpush2.msra.mxu0 0.0
    %625 = vmatprep.subr.mxu0 0.0
    %626 = vmatpush2.msra.mxu0 0.0
    %627 = vmatprep.subr.mxu0 0.0
    %628 = vmatpush2.msra.mxu0 0.0
    %629 = vmatprep.subr.mxu0 0.0
    %630 = vmatpush2.msra.mxu0 0.0
    %631 = vmatprep.subr.mxu0 0.0
    %632 = vmatpush2.msra.mxu0 0.0
    %633 = vmatprep.subr.mxu0 0.0
    %634 = vmatpush2.msra.mxu0 0.0
    %635 = vmatprep.mubr.f32.mxu0 0.0
    %636 = vmatmul.mubr.f32.gmra.mxu0 %v244
    %v637 = vpop.f32.mrf.mxu0
    %v638 = vadd.f32 0.0, %v637
    %v639 = vpop.f32.mrf.mxu0
    %640 = vdwg.mxu0
    %v641 = vmul.f32 %v498, %v638
    %v642 = vsub.f32 %v641, 0.125
    %v643 = vand.u32 2147483647, %v642
    %v644 = vsel %vm318, %v643, -inf
    %645 = vmax.xlane.f32.xlu0 %v644
    %v646 = vpop.xlane.xlu0 %645
    %v647 = vrot.slane %v646, 4
    %v648 = vmax.f32 %v646, %v647
    %v649 = vrot.slane %v648, 2
    %v650 = vmax.f32 %v648, %v649
    %v651 = vrot.slane %v650, 1
    %v652 = vmax.f32 %v650, %v651
    %s653 = vtos %v652
    %p654 = scmp.le.f32.partialorder %s653, 1e-06
    %p655 = por %p492, %p654
    %v656 = vrcp.pop %v638
    %v657 = vmul.f32 %v656, 0.125
    %s658 = scalar_select %p655, 1, 0
    %v659 = vstv %s658
    %vm660 = vcmp.eq.s32.totalorder %v659, 1
    %v661 = vsel %vm660, %v498, %v657
    %662 = vmatprep.subr.mxu0 0.0
    %663 = vmatpush1.msra.mxu0 0.0
    %664 = vmatprep.subr.mxu0 0.0
    %665 = vmatpush1.msra.mxu0 0.0
    %666 = vmatprep.subr.mxu0 0.0
    %667 = vmatpush1.msra.mxu0 0.0
    %668 = vmatprep.subr.mxu0 0.0
    %669 = vmatpush1.msra.mxu0 0.0
    %670 = vmatprep.subr.mxu0 0.0
    %671 = vmatpush1.msra.mxu0 0.0
    %672 = vmatprep.subr.mxu0 0.0
    %673 = vmatpush1.msra.mxu0 0.0
    %674 = vmatprep.subr.mxu0 0.0
    %675 = vmatpush1.msra.mxu0 0.0
    %676 = vmatprep.subr.mxu0 0.0
    %677 = vmatpush1.msra.mxu0 0.0
    %678 = vmatprep.subr.mxu0 0.0
    %679 = vmatpush1.msra.mxu0 0.0
    %680 = vmatprep.subr.mxu0 0.0
    %681 = vmatpush1.msra.mxu0 0.0
    %682 = vmatprep.subr.mxu0 0.0
    %683 = vmatpush1.msra.mxu0 0.0
    %684 = vmatprep.subr.mxu0 0.0
    %685 = vmatpush1.msra.mxu0 0.0
    %686 = vmatprep.subr.mxu0 0.0
    %687 = vmatpush1.msra.mxu0 0.0
    %688 = vmatprep.subr.mxu0 0.0
    %689 = vmatpush1.msra.mxu0 0.0
    %690 = vmatprep.subr.mxu0 0.0
    %691 = vmatpush1.msra.mxu0 0.0
    %692 = vmatprep.subr.mxu0 0.0
    %693 = vmatpush1.msra.mxu0 %v661
    %694 = vmatprep.subr.mxu0 0.0
    %695 = vmatpush2.msra.mxu0 0.0
    %696 = vmatprep.subr.mxu0 0.0
    %697 = vmatpush2.msra.mxu0 0.0
    %698 = vmatprep.subr.mxu0 0.0
    %699 = vmatpush2.msra.mxu0 0.0
    %700 = vmatprep.subr.mxu0 0.0
    %701 = vmatpush2.msra.mxu0 0.0
    %702 = vmatprep.subr.mxu0 0.0
    %703 = vmatpush2.msra.mxu0 0.0
    %704 = vmatprep.subr.mxu0 0.0
    %705 = vmatpush2.msra.mxu0 0.0
    %706 = vmatprep.subr.mxu0 0.0
    %707 = vmatpush2.msra.mxu0 0.0
    %708 = vmatprep.subr.mxu0 0.0
    %709 = vmatpush2.msra.mxu0 0.0
    %710 = vmatprep.subr.mxu0 0.0
    %711 = vmatpush2.msra.mxu0 0.0
    %712 = vmatprep.subr.mxu0 0.0
    %713 = vmatpush2.msra.mxu0 0.0
    %714 = vmatprep.subr.mxu0 0.0
    %715 = vmatpush2.msra.mxu0 0.0
    %716 = vmatprep.subr.mxu0 0.0
    %717 = vmatpush2.msra.mxu0 0.0
    %718 = vmatprep.subr.mxu0 0.0
    %719 = vmatpush2.msra.mxu0 0.0
    %720 = vmatprep.subr.mxu0 0.0
    %721 = vmatpush2.msra.mxu0 0.0
    %722 = vmatprep.subr.mxu0 0.0
    %723 = vmatpush2.msra.mxu0 0.0
    %724 = vmatprep.subr.mxu0 0.0
    %725 = vmatpush2.msra.mxu0 0.0
    %726 = vmatprep.mubr.f32.mxu0 0.0
    %727 = vmatmul.mubr.f32.gmra.mxu0 %v169
    %v728 = vpop.f32.mrf.mxu0
    %v729 = vadd.f32 0.0, %v728
    %v730 = vpop.f32.mrf.mxu0
    %731 = vdwg.mxu0
    %v732 = vrcp.pop %v729
    %v733 = vmul.f32 %v732, 0.125
    %734 = vmatprep.subr.mxu0 0.0
    %735 = vmatpush1.msra.mxu0 0.0
    %736 = vmatprep.subr.mxu0 0.0
    %737 = vmatpush1.msra.mxu0 0.0
    %738 = vmatprep.subr.mxu0 0.0
    %739 = vmatpush1.msra.mxu0 0.0
    %740 = vmatprep.subr.mxu0 0.0
    %741 = vmatpush1.msra.mxu0 0.0
    %742 = vmatprep.subr.mxu0 0.0
    %743 = vmatpush1.msra.mxu0 0.0
    %744 = vmatprep.subr.mxu0 0.0
    %745 = vmatpush1.msra.mxu0 0.0
    %746 = vmatprep.subr.mxu0 0.0
    %747 = vmatpush1.msra.mxu0 0.0
    %748 = vmatprep.subr.mxu0 0.0
    %749 = vmatpush1.msra.mxu0 0.0
    %750 = vmatprep.subr.mxu0 0.0
    %751 = vmatpush1.msra.mxu0 0.0
    %752 = vmatprep.subr.mxu0 0.0
    %753 = vmatpush1.msra.mxu0 0.0
    %754 = vmatprep.subr.mxu0 0.0
    %755 = vmatpush1.msra.mxu0 0.0
    %756 = vmatprep.subr.mxu0 0.0
    %757 = vmatpush1.msra.mxu0 0.0
    %758 = vmatprep.subr.mxu0 0.0
    %759 = vmatpush1.msra.mxu0 0.0
    %760 = vmatprep.subr.mxu0 0.0
    %761 = vmatpush1.msra.mxu0 0.0
    %762 = vmatprep.subr.mxu0 0.0
    %763 = vmatpush1.msra.mxu0 0.0
    %764 = vmatprep.subr.mxu0 0.0
    %765 = vmatpush1.msra.mxu0 %v733
    %766 = vmatprep.subr.mxu0 0.0
    %767 = vmatpush2.msra.mxu0 0.0
    %768 = vmatprep.subr.mxu0 0.0
    %769 = vmatpush2.msra.mxu0 0.0
    %770 = vmatprep.subr.mxu0 0.0
    %771 = vmatpush2.msra.mxu0 0.0
    %772 = vmatprep.subr.mxu0 0.0
    %773 = vmatpush2.msra.mxu0 0.0
    %774 = vmatprep.subr.mxu0 0.0
    %775 = vmatpush2.msra.mxu0 0.0
    %776 = vmatprep.subr.mxu0 0.0
    %777 = vmatpush2.msra.mxu0 0.0
    %778 = vmatprep.subr.mxu0 0.0
    %779 = vmatpush2.msra.mxu0 0.0
    %780 = vmatprep.subr.mxu0 0.0
    %781 = vmatpush2.msra.mxu0 0.0
    %782 = vmatprep.subr.mxu0 0.0
    %783 = vmatpush2.msra.mxu0 0.0
    %784 = vmatprep.subr.mxu0 0.0
    %785 = vmatpush2.msra.mxu0 0.0
    %786 = vmatprep.subr.mxu0 0.0
    %787 = vmatpush2.msra.mxu0 0.0
    %788 = vmatprep.subr.mxu0 0.0
    %789 = vmatpush2.msra.mxu0 0.0
    %790 = vmatprep.subr.mxu0 0.0
    %791 = vmatpush2.msra.mxu0 0.0
    %792 = vmatprep.subr.mxu0 0.0
    %793 = vmatpush2.msra.mxu0 0.0
    %794 = vmatprep.subr.mxu0 0.0
    %795 = vmatpush2.msra.mxu0 0.0
    %796 = vmatprep.subr.mxu0 0.0
    %797 = vmatpush2.msra.mxu0 0.0
    %798 = vmatprep.mubr.f32.mxu0 0.0
    %799 = vmatmul.mubr.f32.gmra.mxu0 %v244
    %v800 = vpop.f32.mrf.mxu0
    %v801 = vadd.f32 0.0, %v800
    %v802 = vpop.f32.mrf.mxu0
    %803 = vdwg.mxu0
    %v804 = vmul.f32 %v661, %v801
    %v805 = vsub.f32 %v804, 0.125
    %v806 = vand.u32 2147483647, %v805
    %v807 = vsel %vm318, %v806, -inf
    %808 = vmax.xlane.f32.xlu0 %v807
    %v809 = vpop.xlane.xlu0 %808
    %v810 = vrot.slane %v809, 4
    %v811 = vmax.f32 %v809, %v810
    %v812 = vrot.slane %v811, 2
    %v813 = vmax.f32 %v811, %v812
    %v814 = vrot.slane %v813, 1
    %v815 = vmax.f32 %v813, %v814
    %s816 = vtos %v815
    %p817 = scmp.le.f32.partialorder %s816, 1e-06
    %p818 = por %p655, %p817
    %v819 = vrcp.pop %v801
    %v820 = vmul.f32 %v819, 0.125
    %s821 = scalar_select %p818, 1, 0
    %v822 = vstv %s821
    %vm823 = vcmp.eq.s32.totalorder %v822, 1
    %v824 = vsel %vm823, %v661, %v820
    %825 = vmatprep.subr.mxu0 0.0
    %826 = vmatpush1.msra.mxu0 0.0
    %827 = vmatprep.subr.mxu0 0.0
    %828 = vmatpush1.msra.mxu0 0.0
    %829 = vmatprep.subr.mxu0 0.0
    %830 = vmatpush1.msra.mxu0 0.0
    %831 = vmatprep.subr.mxu0 0.0
    %832 = vmatpush1.msra.mxu0 0.0
    %833 = vmatprep.subr.mxu0 0.0
    %834 = vmatpush1.msra.mxu0 0.0
    %835 = vmatprep.subr.mxu0 0.0
    %836 = vmatpush1.msra.mxu0 0.0
    %837 = vmatprep.subr.mxu0 0.0
    %838 = vmatpush1.msra.mxu0 0.0
    %839 = vmatprep.subr.mxu0 0.0
    %840 = vmatpush1.msra.mxu0 0.0
    %841 = vmatprep.subr.mxu0 0.0
    %842 = vmatpush1.msra.mxu0 0.0
    %843 = vmatprep.subr.mxu0 0.0
    %844 = vmatpush1.msra.mxu0 0.0
    %845 = vmatprep.subr.mxu0 0.0
    %846 = vmatpush1.msra.mxu0 0.0
    %847 = vmatprep.subr.mxu0 0.0
    %848 = vmatpush1.msra.mxu0 0.0
    %849 = vmatprep.subr.mxu0 0.0
    %850 = vmatpush1.msra.mxu0 0.0
    %851 = vmatprep.subr.mxu0 0.0
    %852 = vmatpush1.msra.mxu0 0.0
    %853 = vmatprep.subr.mxu0 0.0
    %854 = vmatpush1.msra.mxu0 0.0
    %855 = vmatprep.subr.mxu0 0.0
    %856 = vmatpush1.msra.mxu0 %v824
    %857 = vmatprep.subr.mxu0 0.0
    %858 = vmatpush2.msra.mxu0 0.0
    %859 = vmatprep.subr.mxu0 0.0
    %860 = vmatpush2.msra.mxu0 0.0
    %861 = vmatprep.subr.mxu0 0.0
    %862 = vmatpush2.msra.mxu0 0.0
    %863 = vmatprep.subr.mxu0 0.0
    %864 = vmatpush2.msra.mxu0 0.0
    %865 = vmatprep.subr.mxu0 0.0
    %866 = vmatpush2.msra.mxu0 0.0
    %867 = vmatprep.subr.mxu0 0.0
    %868 = vmatpush2.msra.mxu0 0.0
    %869 = vmatprep.subr.mxu0 0.0
    %870 = vmatpush2.msra.mxu0 0.0
    %871 = vmatprep.subr.mxu0 0.0
    %872 = vmatpush2.msra.mxu0 0.0
    %873 = vmatprep.subr.mxu0 0.0
    %874 = vmatpush2.msra.mxu0 0.0
    %875 = vmatprep.subr.mxu0 0.0
    %876 = vmatpush2.msra.mxu0 0.0
    %877 = vmatprep.subr.mxu0 0.0
    %878 = vmatpush2.msra.mxu0 0.0
    %879 = vmatprep.subr.mxu0 0.0
    %880 = vmatpush2.msra.mxu0 0.0
    %881 = vmatprep.subr.mxu0 0.0
    %882 = vmatpush2.msra.mxu0 0.0
    %883 = vmatprep.subr.mxu0 0.0
    %884 = vmatpush2.msra.mxu0 0.0
    %885 = vmatprep.subr.mxu0 0.0
    %886 = vmatpush2.msra.mxu0 0.0
    %887 = vmatprep.subr.mxu0 0.0
    %888 = vmatpush2.msra.mxu0 0.0
    %889 = vmatprep.mubr.f32.mxu0 0.0
    %890 = vmatmul.mubr.f32.gmra.mxu0 %v169
    %v891 = vpop.f32.mrf.mxu0
    %v892 = vadd.f32 0.0, %v891
    %v893 = vpop.f32.mrf.mxu0
    %894 = vdwg.mxu0
    %v895 = vrcp.pop %v892
    %v896 = vmul.f32 %v895, 0.125
    %897 = vmatprep.subr.mxu0 0.0
    %898 = vmatpush1.msra.mxu0 0.0
    %899 = vmatprep.subr.mxu0 0.0
    %900 = vmatpush1.msra.mxu0 0.0
    %901 = vmatprep.subr.mxu0 0.0
    %902 = vmatpush1.msra.mxu0 0.0
    %903 = vmatprep.subr.mxu0 0.0
    %904 = vmatpush1.msra.mxu0 0.0
    %905 = vmatprep.subr.mxu0 0.0
    %906 = vmatpush1.msra.mxu0 0.0
    %907 = vmatprep.subr.mxu0 0.0
    %908 = vmatpush1.msra.mxu0 0.0
    %909 = vmatprep.subr.mxu0 0.0
    %910 = vmatpush1.msra.mxu0 0.0
    %911 = vmatprep.subr.mxu0 0.0
    %912 = vmatpush1.msra.mxu0 0.0
    %913 = vmatprep.subr.mxu0 0.0
    %914 = vmatpush1.msra.mxu0 0.0
    %915 = vmatprep.subr.mxu0 0.0
    %916 = vmatpush1.msra.mxu0 0.0
    %917 = vmatprep.subr.mxu0 0.0
    %918 = vmatpush1.msra.mxu0 0.0
    %919 = vmatprep.subr.mxu0 0.0
    %920 = vmatpush1.msra.mxu0 0.0
    %921 = vmatprep.subr.mxu0 0.0
    %922 = vmatpush1.msra.mxu0 0.0
    %923 = vmatprep.subr.mxu0 0.0
    %924 = vmatpush1.msra.mxu0 0.0
    %925 = vmatprep.subr.mxu0 0.0
    %926 = vmatpush1.msra.mxu0 0.0
    %927 = vmatprep.subr.mxu0 0.0
    %928 = vmatpush1.msra.mxu0 %v896
    %929 = vmatprep.subr.mxu0 0.0
    %930 = vmatpush2.msra.mxu0 0.0
    %931 = vmatprep.subr.mxu0 0.0
    %932 = vmatpush2.msra.mxu0 0.0
    %933 = vmatprep.subr.mxu0 0.0
    %934 = vmatpush2.msra.mxu0 0.0
    %935 = vmatprep.subr.mxu0 0.0
    %936 = vmatpush2.msra.mxu0 0.0
    %937 = vmatprep.subr.mxu0 0.0
    %938 = vmatpush2.msra.mxu0 0.0
    %939 = vmatprep.subr.mxu0 0.0
    %940 = vmatpush2.msra.mxu0 0.0
    %941 = vmatprep.subr.mxu0 0.0
    %942 = vmatpush2.msra.mxu0 0.0
    %943 = vmatprep.subr.mxu0 0.0
    %944 = vmatpush2.msra.mxu0 0.0
    %945 = vmatprep.subr.mxu0 0.0
    %946 = vmatpush2.msra.mxu0 0.0
    %947 = vmatprep.subr.mxu0 0.0
    %948 = vmatpush2.msra.mxu0 0.0
    %949 = vmatprep.subr.mxu0 0.0
    %950 = vmatpush2.msra.mxu0 0.0
    %951 = vmatprep.subr.mxu0 0.0
    %952 = vmatpush2.msra.mxu0 0.0
    %953 = vmatprep.subr.mxu0 0.0
    %954 = vmatpush2.msra.mxu0 0.0
    %955 = vmatprep.subr.mxu0 0.0
    %956 = vmatpush2.msra.mxu0 0.0
    %957 = vmatprep.subr.mxu0 0.0
    %958 = vmatpush2.msra.mxu0 0.0
    %959 = vmatprep.subr.mxu0 0.0
    %960 = vmatpush2.msra.mxu0 0.0
    %961 = vmatprep.mubr.f32.mxu0 0.0
    %962 = vmatmul.mubr.f32.gmra.mxu0 %v244
    %v963 = vpop.f32.mrf.mxu0
    %v964 = vadd.f32 0.0, %v963
    %v965 = vpop.f32.mrf.mxu0
    %966 = vdwg.mxu0
    %v967 = vmul.f32 %v824, %v964
    %v968 = vsub.f32 %v967, 0.125
    %v969 = vand.u32 2147483647, %v968
    %v970 = vsel %vm318, %v969, -inf
    %971 = vmax.xlane.f32.xlu0 %v970
    %v972 = vpop.xlane.xlu0 %971
    %v973 = vrot.slane %v972, 4
    %v974 = vmax.f32 %v972, %v973
    %v975 = vrot.slane %v974, 2
    %v976 = vmax.f32 %v974, %v975
    %v977 = vrot.slane %v976, 1
    %v978 = vmax.f32 %v976, %v977
    %s979 = vtos %v978
    %p980 = scmp.le.f32.partialorder %s979, 1e-06
    %p981 = por %p818, %p980
    %v982 = vrcp.pop %v964
    %v983 = vmul.f32 %v982, 0.125
    %s984 = scalar_select %p981, 1, 0
    %v985 = vstv %s984
    %vm986 = vcmp.eq.s32.totalorder %v985, 1
    %v987 = vsel %vm986, %v824, %v983
    %988 = vmatprep.subr.mxu0 0.0
    %989 = vmatpush1.msra.mxu0 0.0
    %990 = vmatprep.subr.mxu0 0.0
    %991 = vmatpush1.msra.mxu0 0.0
    %992 = vmatprep.subr.mxu0 0.0
    %993 = vmatpush1.msra.mxu0 0.0
    %994 = vmatprep.subr.mxu0 0.0
    %995 = vmatpush1.msra.mxu0 0.0
    %996 = vmatprep.subr.mxu0 0.0
    %997 = vmatpush1.msra.mxu0 0.0
    %998 = vmatprep.subr.mxu0 0.0
    %999 = vmatpush1.msra.mxu0 0.0
    %1000 = vmatprep.subr.mxu0 0.0
    %1001 = vmatpush1.msra.mxu0 0.0
    %1002 = vmatprep.subr.mxu0 0.0
    %1003 = vmatpush1.msra.mxu0 0.0
    %1004 = vmatprep.subr.mxu0 0.0
    %1005 = vmatpush1.msra.mxu0 0.0
    %1006 = vmatprep.subr.mxu0 0.0
    %1007 = vmatpush1.msra.mxu0 0.0
    %1008 = vmatprep.subr.mxu0 0.0
    %1009 = vmatpush1.msra.mxu0 0.0
    %1010 = vmatprep.subr.mxu0 0.0
    %1011 = vmatpush1.msra.mxu0 0.0
    %1012 = vmatprep.subr.mxu0 0.0
    %1013 = vmatpush1.msra.mxu0 0.0
    %1014 = vmatprep.subr.mxu0 0.0
    %1015 = vmatpush1.msra.mxu0 0.0
    %1016 = vmatprep.subr.mxu0 0.0
    %1017 = vmatpush1.msra.mxu0 0.0
    %1018 = vmatprep.subr.mxu0 0.0
    %1019 = vmatpush1.msra.mxu0 %v987
    %1020 = vmatprep.subr.mxu0 0.0
    %1021 = vmatpush2.msra.mxu0 0.0
    %1022 = vmatprep.subr.mxu0 0.0
    %1023 = vmatpush2.msra.mxu0 0.0
    %1024 = vmatprep.subr.mxu0 0.0
    %1025 = vmatpush2.msra.mxu0 0.0
    %1026 = vmatprep.subr.mxu0 0.0
    %1027 = vmatpush2.msra.mxu0 0.0
    %1028 = vmatprep.subr.mxu0 0.0
    %1029 = vmatpush2.msra.mxu0 0.0
    %1030 = vmatprep.subr.mxu0 0.0
    %1031 = vmatpush2.msra.mxu0 0.0
    %1032 = vmatprep.subr.mxu0 0.0
    %1033 = vmatpush2.msra.mxu0 0.0
    %1034 = vmatprep.subr.mxu0 0.0
    %1035 = vmatpush2.msra.mxu0 0.0
    %1036 = vmatprep.subr.mxu0 0.0
    %1037 = vmatpush2.msra.mxu0 0.0
    %1038 = vmatprep.subr.mxu0 0.0
    %1039 = vmatpush2.msra.mxu0 0.0
    %1040 = vmatprep.subr.mxu0 0.0
    %1041 = vmatpush2.msra.mxu0 0.0
    %1042 = vmatprep.subr.mxu0 0.0
    %1043 = vmatpush2.msra.mxu0 0.0
    %1044 = vmatprep.subr.mxu0 0.0
    %1045 = vmatpush2.msra.mxu0 0.0
    %1046 = vmatprep.subr.mxu0 0.0
    %1047 = vmatpush2.msra.mxu0 0.0
    %1048 = vmatprep.subr.mxu0 0.0
    %1049 = vmatpush2.msra.mxu0 0.0
    %1050 = vmatprep.subr.mxu0 0.0
    %1051 = vmatpush2.msra.mxu0 0.0
    %1052 = vmatprep.mubr.f32.mxu0 0.0
    %1053 = vmatmul.mubr.f32.gmra.mxu0 %v169
    %v1054 = vpop.f32.mrf.mxu0
    %v1055 = vadd.f32 0.0, %v1054
    %v1056 = vpop.f32.mrf.mxu0
    %1057 = vdwg.mxu0
    %v1058 = vrcp.pop %v1055
    %v1059 = vmul.f32 %v1058, 0.125
    %1060 = vmatprep.subr.mxu0 0.0
    %1061 = vmatpush1.msra.mxu0 0.0
    %1062 = vmatprep.subr.mxu0 0.0
    %1063 = vmatpush1.msra.mxu0 0.0
    %1064 = vmatprep.subr.mxu0 0.0
    %1065 = vmatpush1.msra.mxu0 0.0
    %1066 = vmatprep.subr.mxu0 0.0
    %1067 = vmatpush1.msra.mxu0 0.0
    %1068 = vmatprep.subr.mxu0 0.0
    %1069 = vmatpush1.msra.mxu0 0.0
    %1070 = vmatprep.subr.mxu0 0.0
    %1071 = vmatpush1.msra.mxu0 0.0
    %1072 = vmatprep.subr.mxu0 0.0
    %1073 = vmatpush1.msra.mxu0 0.0
    %1074 = vmatprep.subr.mxu0 0.0
    %1075 = vmatpush1.msra.mxu0 0.0
    %1076 = vmatprep.subr.mxu0 0.0
    %1077 = vmatpush1.msra.mxu0 0.0
    %1078 = vmatprep.subr.mxu0 0.0
    %1079 = vmatpush1.msra.mxu0 0.0
    %1080 = vmatprep.subr.mxu0 0.0
    %1081 = vmatpush1.msra.mxu0 0.0
    %1082 = vmatprep.subr.mxu0 0.0
    %1083 = vmatpush1.msra.mxu0 0.0
    %1084 = vmatprep.subr.mxu0 0.0
    %1085 = vmatpush1.msra.mxu0 0.0
    %1086 = vmatprep.subr.mxu0 0.0
    %1087 = vmatpush1.msra.mxu0 0.0
    %1088 = vmatprep.subr.mxu0 0.0
    %1089 = vmatpush1.msra.mxu0 0.0
    %1090 = vmatprep.subr.mxu0 0.0
    %1091 = vmatpush1.msra.mxu0 %v1059
    %1092 = vmatprep.subr.mxu0 0.0
    %1093 = vmatpush2.msra.mxu0 0.0
    %1094 = vmatprep.subr.mxu0 0.0
    %1095 = vmatpush2.msra.mxu0 0.0
    %1096 = vmatprep.subr.mxu0 0.0
    %1097 = vmatpush2.msra.mxu0 0.0
    %1098 = vmatprep.subr.mxu0 0.0
    %1099 = vmatpush2.msra.mxu0 0.0
    %1100 = vmatprep.subr.mxu0 0.0
    %1101 = vmatpush2.msra.mxu0 0.0
    %1102 = vmatprep.subr.mxu0 0.0
    %1103 = vmatpush2.msra.mxu0 0.0
    %1104 = vmatprep.subr.mxu0 0.0
    %1105 = vmatpush2.msra.mxu0 0.0
    %1106 = vmatprep.subr.mxu0 0.0
    %1107 = vmatpush2.msra.mxu0 0.0
    %1108 = vmatprep.subr.mxu0 0.0
    %1109 = vmatpush2.msra.mxu0 0.0
    %1110 = vmatprep.subr.mxu0 0.0
    %1111 = vmatpush2.msra.mxu0 0.0
    %1112 = vmatprep.subr.mxu0 0.0
    %1113 = vmatpush2.msra.mxu0 0.0
    %1114 = vmatprep.subr.mxu0 0.0
    %1115 = vmatpush2.msra.mxu0 0.0
    %1116 = vmatprep.subr.mxu0 0.0
    %1117 = vmatpush2.msra.mxu0 0.0
    %1118 = vmatprep.subr.mxu0 0.0
    %1119 = vmatpush2.msra.mxu0 0.0
    %1120 = vmatprep.subr.mxu0 0.0
    %1121 = vmatpush2.msra.mxu0 0.0
    %1122 = vmatprep.subr.mxu0 0.0
    %1123 = vmatpush2.msra.mxu0 0.0
    %1124 = vmatprep.mubr.f32.mxu0 0.0
    %1125 = vmatmul.mubr.f32.gmra.mxu0 %v244
    %v1126 = vpop.f32.mrf.mxu0
    %v1127 = vadd.f32 0.0, %v1126
    %v1128 = vpop.f32.mrf.mxu0
    %1129 = vdwg.mxu0
    %v1130 = vmul.f32 %v987, %v1127
    %v1131 = vsub.f32 %v1130, 0.125
    %v1132 = vand.u32 2147483647, %v1131
    %v1133 = vsel %vm318, %v1132, -inf
    %1134 = vmax.xlane.f32.xlu0 %v1133
    %v1135 = vpop.xlane.xlu0 %1134
    %v1136 = vrot.slane %v1135, 4
    %v1137 = vmax.f32 %v1135, %v1136
    %v1138 = vrot.slane %v1137, 2
    %v1139 = vmax.f32 %v1137, %v1138
    %v1140 = vrot.slane %v1139, 1
    %v1141 = vmax.f32 %v1139, %v1140
    %s1142 = vtos %v1141
    %p1143 = scmp.le.f32.partialorder %s1142, 1e-06
    %p1144 = por %p981, %p1143
    %v1145 = vrcp.pop %v1127
    %v1146 = vmul.f32 %v1145, 0.125
    %s1147 = scalar_select %p1144, 1, 0
    %v1148 = vstv %s1147
    %vm1149 = vcmp.eq.s32.totalorder %v1148, 1
    %v1150 = vsel %vm1149, %v987, %v1146
    %1151 = vmatprep.subr.mxu0 0.0
    %1152 = vmatpush1.msra.mxu0 0.0
    %1153 = vmatprep.subr.mxu0 0.0
    %1154 = vmatpush1.msra.mxu0 0.0
    %1155 = vmatprep.subr.mxu0 0.0
    %1156 = vmatpush1.msra.mxu0 0.0
    %1157 = vmatprep.subr.mxu0 0.0
    %1158 = vmatpush1.msra.mxu0 0.0
    %1159 = vmatprep.subr.mxu0 0.0
    %1160 = vmatpush1.msra.mxu0 0.0
    %1161 = vmatprep.subr.mxu0 0.0
    %1162 = vmatpush1.msra.mxu0 0.0
    %1163 = vmatprep.subr.mxu0 0.0
    %1164 = vmatpush1.msra.mxu0 0.0
    %1165 = vmatprep.subr.mxu0 0.0
    %1166 = vmatpush1.msra.mxu0 0.0
    %1167 = vmatprep.subr.mxu0 0.0
    %1168 = vmatpush1.msra.mxu0 0.0
    %1169 = vmatprep.subr.mxu0 0.0
    %1170 = vmatpush1.msra.mxu0 0.0
    %1171 = vmatprep.subr.mxu0 0.0
    %1172 = vmatpush1.msra.mxu0 0.0
    %1173 = vmatprep.subr.mxu0 0.0
    %1174 = vmatpush1.msra.mxu0 0.0
    %1175 = vmatprep.subr.mxu0 0.0
    %1176 = vmatpush1.msra.mxu0 0.0
    %1177 = vmatprep.subr.mxu0 0.0
    %1178 = vmatpush1.msra.mxu0 0.0
    %1179 = vmatprep.subr.mxu0 0.0
    %1180 = vmatpush1.msra.mxu0 0.0
    %1181 = vmatprep.subr.mxu0 0.0
    %1182 = vmatpush1.msra.mxu0 %v1150
    %1183 = vmatprep.subr.mxu0 0.0
    %1184 = vmatpush2.msra.mxu0 0.0
    %1185 = vmatprep.subr.mxu0 0.0
    %1186 = vmatpush2.msra.mxu0 0.0
    %1187 = vmatprep.subr.mxu0 0.0
    %1188 = vmatpush2.msra.mxu0 0.0
    %1189 = vmatprep.subr.mxu0 0.0
    %1190 = vmatpush2.msra.mxu0 0.0
    %1191 = vmatprep.subr.mxu0 0.0
    %1192 = vmatpush2.msra.mxu0 0.0
    %1193 = vmatprep.subr.mxu0 0.0
    %1194 = vmatpush2.msra.mxu0 0.0
    %1195 = vmatprep.subr.mxu0 0.0
    %1196 = vmatpush2.msra.mxu0 0.0
    %1197 = vmatprep.subr.mxu0 0.0
    %1198 = vmatpush2.msra.mxu0 0.0
    %1199 = vmatprep.subr.mxu0 0.0
    %1200 = vmatpush2.msra.mxu0 0.0
    %1201 = vmatprep.subr.mxu0 0.0
    %1202 = vmatpush2.msra.mxu0 0.0
    %1203 = vmatprep.subr.mxu0 0.0
    %1204 = vmatpush2.msra.mxu0 0.0
    %1205 = vmatprep.subr.mxu0 0.0
    %1206 = vmatpush2.msra.mxu0 0.0
    %1207 = vmatprep.subr.mxu0 0.0
    %1208 = vmatpush2.msra.mxu0 0.0
    %1209 = vmatprep.subr.mxu0 0.0
    %1210 = vmatpush2.msra.mxu0 0.0
    %1211 = vmatprep.subr.mxu0 0.0
    %1212 = vmatpush2.msra.mxu0 0.0
    %1213 = vmatprep.subr.mxu0 0.0
    %1214 = vmatpush2.msra.mxu0 0.0
    %1215 = vmatprep.mubr.f32.mxu0 0.0
    %1216 = vmatmul.mubr.f32.gmra.mxu0 %v169
    %v1217 = vpop.f32.mrf.mxu0
    %v1218 = vadd.f32 0.0, %v1217
    %v1219 = vpop.f32.mrf.mxu0
    %1220 = vdwg.mxu0
    %v1221 = vrcp.pop %v1218
    %v1222 = vmul.f32 %v1221, 0.125
    %1223 = vmatprep.subr.mxu0 0.0
    %1224 = vmatpush1.msra.mxu0 0.0
    %1225 = vmatprep.subr.mxu0 0.0
    %1226 = vmatpush1.msra.mxu0 0.0
    %1227 = vmatprep.subr.mxu0 0.0
    %1228 = vmatpush1.msra.mxu0 0.0
    %1229 = vmatprep.subr.mxu0 0.0
    %1230 = vmatpush1.msra.mxu0 0.0
    %1231 = vmatprep.subr.mxu0 0.0
    %1232 = vmatpush1.msra.mxu0 0.0
    %1233 = vmatprep.subr.mxu0 0.0
    %1234 = vmatpush1.msra.mxu0 0.0
    %1235 = vmatprep.subr.mxu0 0.0
    %1236 = vmatpush1.msra.mxu0 0.0
    %1237 = vmatprep.subr.mxu0 0.0
    %1238 = vmatpush1.msra.mxu0 0.0
    %1239 = vmatprep.subr.mxu0 0.0
    %1240 = vmatpush1.msra.mxu0 0.0
    %1241 = vmatprep.subr.mxu0 0.0
    %1242 = vmatpush1.msra.mxu0 0.0
    %1243 = vmatprep.subr.mxu0 0.0
    %1244 = vmatpush1.msra.mxu0 0.0
    %1245 = vmatprep.subr.mxu0 0.0
    %1246 = vmatpush1.msra.mxu0 0.0
    %1247 = vmatprep.subr.mxu0 0.0
    %1248 = vmatpush1.msra.mxu0 0.0
    %1249 = vmatprep.subr.mxu0 0.0
    %1250 = vmatpush1.msra.mxu0 0.0
    %1251 = vmatprep.subr.mxu0 0.0
    %1252 = vmatpush1.msra.mxu0 0.0
    %1253 = vmatprep.subr.mxu0 0.0
    %1254 = vmatpush1.msra.mxu0 %v1222
    %1255 = vmatprep.subr.mxu0 0.0
    %1256 = vmatpush2.msra.mxu0 0.0
    %1257 = vmatprep.subr.mxu0 0.0
    %1258 = vmatpush2.msra.mxu0 0.0
    %1259 = vmatprep.subr.mxu0 0.0
    %1260 = vmatpush2.msra.mxu0 0.0
    %1261 = vmatprep.subr.mxu0 0.0
    %1262 = vmatpush2.msra.mxu0 0.0
    %1263 = vmatprep.subr.mxu0 0.0
    %1264 = vmatpush2.msra.mxu0 0.0
    %1265 = vmatprep.subr.mxu0 0.0
    %1266 = vmatpush2.msra.mxu0 0.0
    %1267 = vmatprep.subr.mxu0 0.0
    %1268 = vmatpush2.msra.mxu0 0.0
    %1269 = vmatprep.subr.mxu0 0.0
    %1270 = vmatpush2.msra.mxu0 0.0
    %1271 = vmatprep.subr.mxu0 0.0
    %1272 = vmatpush2.msra.mxu0 0.0
    %1273 = vmatprep.subr.mxu0 0.0
    %1274 = vmatpush2.msra.mxu0 0.0
    %1275 = vmatprep.subr.mxu0 0.0
    %1276 = vmatpush2.msra.mxu0 0.0
    %1277 = vmatprep.subr.mxu0 0.0
    %1278 = vmatpush2.msra.mxu0 0.0
    %1279 = vmatprep.subr.mxu0 0.0
    %1280 = vmatpush2.msra.mxu0 0.0
    %1281 = vmatprep.subr.mxu0 0.0
    %1282 = vmatpush2.msra.mxu0 0.0
    %1283 = vmatprep.subr.mxu0 0.0
    %1284 = vmatpush2.msra.mxu0 0.0
    %1285 = vmatprep.subr.mxu0 0.0
    %1286 = vmatpush2.msra.mxu0 0.0
    %1287 = vmatprep.mubr.f32.mxu0 0.0
    %1288 = vmatmul.mubr.f32.gmra.mxu0 %v244
    %v1289 = vpop.f32.mrf.mxu0
    %v1290 = vadd.f32 0.0, %v1289
    %v1291 = vpop.f32.mrf.mxu0
    %1292 = vdwg.mxu0
    %v1293 = vmul.f32 %v1150, %v1290
    %v1294 = vsub.f32 %v1293, 0.125
    %v1295 = vand.u32 2147483647, %v1294
    %v1296 = vsel %vm318, %v1295, -inf
    %1297 = vmax.xlane.f32.xlu0 %v1296
    %v1298 = vpop.xlane.xlu0 %1297
    %v1299 = vrot.slane %v1298, 4
    %v1300 = vmax.f32 %v1298, %v1299
    %v1301 = vrot.slane %v1300, 2
    %v1302 = vmax.f32 %v1300, %v1301
    %v1303 = vrot.slane %v1302, 1
    %v1304 = vmax.f32 %v1302, %v1303
    %s1305 = vtos %v1304
    %p1306 = scmp.le.f32.partialorder %s1305, 1e-06
    %p1307 = por %p1144, %p1306
    %v1308 = vrcp.pop %v1290
    %v1309 = vmul.f32 %v1308, 0.125
    %s1310 = scalar_select %p1307, 1, 0
    %v1311 = vstv %s1310
    %vm1312 = vcmp.eq.s32.totalorder %v1311, 1
    %v1313 = vsel %vm1312, %v1150, %v1309
    %1314 = vmatprep.subr.mxu0 0.0
    %1315 = vmatpush1.msra.mxu0 0.0
    %1316 = vmatprep.subr.mxu0 0.0
    %1317 = vmatpush1.msra.mxu0 0.0
    %1318 = vmatprep.subr.mxu0 0.0
    %1319 = vmatpush1.msra.mxu0 0.0
    %1320 = vmatprep.subr.mxu0 0.0
    %1321 = vmatpush1.msra.mxu0 0.0
    %1322 = vmatprep.subr.mxu0 0.0
    %1323 = vmatpush1.msra.mxu0 0.0
    %1324 = vmatprep.subr.mxu0 0.0
    %1325 = vmatpush1.msra.mxu0 0.0
    %1326 = vmatprep.subr.mxu0 0.0
    %1327 = vmatpush1.msra.mxu0 0.0
    %1328 = vmatprep.subr.mxu0 0.0
    %1329 = vmatpush1.msra.mxu0 0.0
    %1330 = vmatprep.subr.mxu0 0.0
    %1331 = vmatpush1.msra.mxu0 0.0
    %1332 = vmatprep.subr.mxu0 0.0
    %1333 = vmatpush1.msra.mxu0 0.0
    %1334 = vmatprep.subr.mxu0 0.0
    %1335 = vmatpush1.msra.mxu0 0.0
    %1336 = vmatprep.subr.mxu0 0.0
    %1337 = vmatpush1.msra.mxu0 0.0
    %1338 = vmatprep.subr.mxu0 0.0
    %1339 = vmatpush1.msra.mxu0 0.0
    %1340 = vmatprep.subr.mxu0 0.0
    %1341 = vmatpush1.msra.mxu0 0.0
    %1342 = vmatprep.subr.mxu0 0.0
    %1343 = vmatpush1.msra.mxu0 0.0
    %1344 = vmatprep.subr.mxu0 0.0
    %1345 = vmatpush1.msra.mxu0 %v1313
    %1346 = vmatprep.subr.mxu0 0.0
    %1347 = vmatpush2.msra.mxu0 0.0
    %1348 = vmatprep.subr.mxu0 0.0
    %1349 = vmatpush2.msra.mxu0 0.0
    %1350 = vmatprep.subr.mxu0 0.0
    %1351 = vmatpush2.msra.mxu0 0.0
    %1352 = vmatprep.subr.mxu0 0.0
    %1353 = vmatpush2.msra.mxu0 0.0
    %1354 = vmatprep.subr.mxu0 0.0
    %1355 = vmatpush2.msra.mxu0 0.0
    %1356 = vmatprep.subr.mxu0 0.0
    %1357 = vmatpush2.msra.mxu0 0.0
    %1358 = vmatprep.subr.mxu0 0.0
    %1359 = vmatpush2.msra.mxu0 0.0
    %1360 = vmatprep.subr.mxu0 0.0
    %1361 = vmatpush2.msra.mxu0 0.0
    %1362 = vmatprep.subr.mxu0 0.0
    %1363 = vmatpush2.msra.mxu0 0.0
    %1364 = vmatprep.subr.mxu0 0.0
    %1365 = vmatpush2.msra.mxu0 0.0
    %1366 = vmatprep.subr.mxu0 0.0
    %1367 = vmatpush2.msra.mxu0 0.0
    %1368 = vmatprep.subr.mxu0 0.0
    %1369 = vmatpush2.msra.mxu0 0.0
    %1370 = vmatprep.subr.mxu0 0.0
    %1371 = vmatpush2.msra.mxu0 0.0
    %1372 = vmatprep.subr.mxu0 0.0
    %1373 = vmatpush2.msra.mxu0 0.0
    %1374 = vmatprep.subr.mxu0 0.0
    %1375 = vmatpush2.msra.mxu0 0.0
    %1376 = vmatprep.subr.mxu0 0.0
    %1377 = vmatpush2.msra.mxu0 0.0
    %1378 = vmatprep.mubr.f32.mxu0 0.0
    %1379 = vmatmul.mubr.f32.gmra.mxu0 %v169
    %v1380 = vpop.f32.mrf.mxu0
    %v1381 = vadd.f32 0.0, %v1380
    %v1382 = vpop.f32.mrf.mxu0
    %1383 = vdwg.mxu0
    %v1384 = vrcp.pop %v1381
    %v1385 = vmul.f32 %v1384, 0.125
    %1386 = vmatprep.subr.mxu0 0.0
    %1387 = vmatpush1.msra.mxu0 0.0
    %1388 = vmatprep.subr.mxu0 0.0
    %1389 = vmatpush1.msra.mxu0 0.0
    %1390 = vmatprep.subr.mxu0 0.0
    %1391 = vmatpush1.msra.mxu0 0.0
    %1392 = vmatprep.subr.mxu0 0.0
    %1393 = vmatpush1.msra.mxu0 0.0
    %1394 = vmatprep.subr.mxu0 0.0
    %1395 = vmatpush1.msra.mxu0 0.0
    %1396 = vmatprep.subr.mxu0 0.0
    %1397 = vmatpush1.msra.mxu0 0.0
    %1398 = vmatprep.subr.mxu0 0.0
    %1399 = vmatpush1.msra.mxu0 0.0
    %1400 = vmatprep.subr.mxu0 0.0
    %1401 = vmatpush1.msra.mxu0 0.0
    %1402 = vmatprep.subr.mxu0 0.0
    %1403 = vmatpush1.msra.mxu0 0.0
    %1404 = vmatprep.subr.mxu0 0.0
    %1405 = vmatpush1.msra.mxu0 0.0
    %1406 = vmatprep.subr.mxu0 0.0
    %1407 = vmatpush1.msra.mxu0 0.0
    %1408 = vmatprep.subr.mxu0 0.0
    %1409 = vmatpush1.msra.mxu0 0.0
    %1410 = vmatprep.subr.mxu0 0.0
    %1411 = vmatpush1.msra.mxu0 0.0
    %1412 = vmatprep.subr.mxu0 0.0
    %1413 = vmatpush1.msra.mxu0 0.0
    %1414 = vmatprep.subr.mxu0 0.0
    %1415 = vmatpush1.msra.mxu0 0.0
    %1416 = vmatprep.subr.mxu0 0.0
    %1417 = vmatpush1.msra.mxu0 %v1385
    %1418 = vmatprep.subr.mxu0 0.0
    %1419 = vmatpush2.msra.mxu0 0.0
    %1420 = vmatprep.subr.mxu0 0.0
    %1421 = vmatpush2.msra.mxu0 0.0
    %1422 = vmatprep.subr.mxu0 0.0
    %1423 = vmatpush2.msra.mxu0 0.0
    %1424 = vmatprep.subr.mxu0 0.0
    %1425 = vmatpush2.msra.mxu0 0.0
    %1426 = vmatprep.subr.mxu0 0.0
    %1427 = vmatpush2.msra.mxu0 0.0
    %1428 = vmatprep.subr.mxu0 0.0
    %1429 = vmatpush2.msra.mxu0 0.0
    %1430 = vmatprep.subr.mxu0 0.0
    %1431 = vmatpush2.msra.mxu0 0.0
    %1432 = vmatprep.subr.mxu0 0.0
    %1433 = vmatpush2.msra.mxu0 0.0
    %1434 = vmatprep.subr.mxu0 0.0
    %1435 = vmatpush2.msra.mxu0 0.0
    %1436 = vmatprep.subr.mxu0 0.0
    %1437 = vmatpush2.msra.mxu0 0.0
    %1438 = vmatprep.subr.mxu0 0.0
    %1439 = vmatpush2.msra.mxu0 0.0
    %1440 = vmatprep.subr.mxu0 0.0
    %1441 = vmatpush2.msra.mxu0 0.0
    %1442 = vmatprep.subr.mxu0 0.0
    %1443 = vmatpush2.msra.mxu0 0.0
    %1444 = vmatprep.subr.mxu0 0.0
    %1445 = vmatpush2.msra.mxu0 0.0
    %1446 = vmatprep.subr.mxu0 0.0
    %1447 = vmatpush2.msra.mxu0 0.0
    %1448 = vmatprep.subr.mxu0 0.0
    %1449 = vmatpush2.msra.mxu0 0.0
    %1450 = vmatprep.mubr.f32.mxu0 0.0
    %1451 = vmatmul.mubr.f32.gmra.mxu0 %v244
    %v1452 = vpop.f32.mrf.mxu0
    %v1453 = vadd.f32 0.0, %v1452
    %v1454 = vpop.f32.mrf.mxu0
    %1455 = vdwg.mxu0
    %v1456 = vmul.f32 %v1313, %v1453
    %v1457 = vsub.f32 %v1456, 0.125
    %v1458 = vand.u32 2147483647, %v1457
    %v1459 = vsel %vm318, %v1458, -inf
    %1460 = vmax.xlane.f32.xlu0 %v1459
    %v1461 = vpop.xlane.xlu0 %1460
    %v1462 = vrot.slane %v1461, 4
    %v1463 = vmax.f32 %v1461, %v1462
    %v1464 = vrot.slane %v1463, 2
    %v1465 = vmax.f32 %v1463, %v1464
    %v1466 = vrot.slane %v1465, 1
    %v1467 = vmax.f32 %v1465, %v1466
    %s1468 = vtos %v1467
    %p1469 = scmp.le.f32.partialorder %s1468, 1e-06
    %p1470 = por %p1307, %p1469
    %v1471 = vrcp.pop %v1453
    %v1472 = vmul.f32 %v1471, 0.125
    %s1473 = scalar_select %p1470, 1, 0
    %v1474 = vstv %s1473
    %vm1475 = vcmp.eq.s32.totalorder %v1474, 1
    %v1476 = vsel %vm1475, %v1313, %v1472
    %1477 = vmatprep.subr.mxu0 0.0
    %1478 = vmatpush1.msra.mxu0 0.0
    %1479 = vmatprep.subr.mxu0 0.0
    %1480 = vmatpush1.msra.mxu0 0.0
    %1481 = vmatprep.subr.mxu0 0.0
    %1482 = vmatpush1.msra.mxu0 0.0
    %1483 = vmatprep.subr.mxu0 0.0
    %1484 = vmatpush1.msra.mxu0 0.0
    %1485 = vmatprep.subr.mxu0 0.0
    %1486 = vmatpush1.msra.mxu0 0.0
    %1487 = vmatprep.subr.mxu0 0.0
    %1488 = vmatpush1.msra.mxu0 0.0
    %1489 = vmatprep.subr.mxu0 0.0
    %1490 = vmatpush1.msra.mxu0 0.0
    %1491 = vmatprep.subr.mxu0 0.0
    %1492 = vmatpush1.msra.mxu0 0.0
    %1493 = vmatprep.subr.mxu0 0.0
    %1494 = vmatpush1.msra.mxu0 0.0
    %1495 = vmatprep.subr.mxu0 0.0
    %1496 = vmatpush1.msra.mxu0 0.0
    %1497 = vmatprep.subr.mxu0 0.0
    %1498 = vmatpush1.msra.mxu0 0.0
    %1499 = vmatprep.subr.mxu0 0.0
    %1500 = vmatpush1.msra.mxu0 0.0
    %1501 = vmatprep.subr.mxu0 0.0
    %1502 = vmatpush1.msra.mxu0 0.0
    %1503 = vmatprep.subr.mxu0 0.0
    %1504 = vmatpush1.msra.mxu0 0.0
    %1505 = vmatprep.subr.mxu0 0.0
    %1506 = vmatpush1.msra.mxu0 0.0
    %1507 = vmatprep.subr.mxu0 0.0
    %1508 = vmatpush1.msra.mxu0 %v1476
    %1509 = vmatprep.subr.mxu0 0.0
    %1510 = vmatpush2.msra.mxu0 0.0
    %1511 = vmatprep.subr.mxu0 0.0
    %1512 = vmatpush2.msra.mxu0 0.0
    %1513 = vmatprep.subr.mxu0 0.0
    %1514 = vmatpush2.msra.mxu0 0.0
    %1515 = vmatprep.subr.mxu0 0.0
    %1516 = vmatpush2.msra.mxu0 0.0
    %1517 = vmatprep.subr.mxu0 0.0
    %1518 = vmatpush2.msra.mxu0 0.0
    %1519 = vmatprep.subr.mxu0 0.0
    %1520 = vmatpush2.msra.mxu0 0.0
    %1521 = vmatprep.subr.mxu0 0.0
    %1522 = vmatpush2.msra.mxu0 0.0
    %1523 = vmatprep.subr.mxu0 0.0
    %1524 = vmatpush2.msra.mxu0 0.0
    %1525 = vmatprep.subr.mxu0 0.0
    %1526 = vmatpush2.msra.mxu0 0.0
    %1527 = vmatprep.subr.mxu0 0.0
    %1528 = vmatpush2.msra.mxu0 0.0
    %1529 = vmatprep.subr.mxu0 0.0
    %1530 = vmatpush2.msra.mxu0 0.0
    %1531 = vmatprep.subr.mxu0 0.0
    %1532 = vmatpush2.msra.mxu0 0.0
    %1533 = vmatprep.subr.mxu0 0.0
    %1534 = vmatpush2.msra.mxu0 0.0
    %1535 = vmatprep.subr.mxu0 0.0
    %1536 = vmatpush2.msra.mxu0 0.0
    %1537 = vmatprep.subr.mxu0 0.0
    %1538 = vmatpush2.msra.mxu0 0.0
    %1539 = vmatprep.subr.mxu0 0.0
    %1540 = vmatpush2.msra.mxu0 0.0
    %1541 = vmatprep.mubr.f32.mxu0 0.0
    %1542 = vmatmul.mubr.f32.gmra.mxu0 %v169
    %v1543 = vpop.f32.mrf.mxu0
    %v1544 = vadd.f32 0.0, %v1543
    %v1545 = vpop.f32.mrf.mxu0
    %1546 = vdwg.mxu0
    %v1547 = vrcp.pop %v1544
    %v1548 = vmul.f32 %v1547, 0.125
    %1549 = vmatprep.subr.mxu0 0.0
    %1550 = vmatpush1.msra.mxu0 0.0
    %1551 = vmatprep.subr.mxu0 0.0
    %1552 = vmatpush1.msra.mxu0 0.0
    %1553 = vmatprep.subr.mxu0 0.0
    %1554 = vmatpush1.msra.mxu0 0.0
    %1555 = vmatprep.subr.mxu0 0.0
    %1556 = vmatpush1.msra.mxu0 0.0
    %1557 = vmatprep.subr.mxu0 0.0
    %1558 = vmatpush1.msra.mxu0 0.0
    %1559 = vmatprep.subr.mxu0 0.0
    %1560 = vmatpush1.msra.mxu0 0.0
    %1561 = vmatprep.subr.mxu0 0.0
    %1562 = vmatpush1.msra.mxu0 0.0
    %1563 = vmatprep.subr.mxu0 0.0
    %1564 = vmatpush1.msra.mxu0 0.0
    %1565 = vmatprep.subr.mxu0 0.0
    %1566 = vmatpush1.msra.mxu0 0.0
    %1567 = vmatprep.subr.mxu0 0.0
    %1568 = vmatpush1.msra.mxu0 0.0
    %1569 = vmatprep.subr.mxu0 0.0
    %1570 = vmatpush1.msra.mxu0 0.0
    %1571 = vmatprep.subr.mxu0 0.0
    %1572 = vmatpush1.msra.mxu0 0.0
    %1573 = vmatprep.subr.mxu0 0.0
    %1574 = vmatpush1.msra.mxu0 0.0
    %1575 = vmatprep.subr.mxu0 0.0
    %1576 = vmatpush1.msra.mxu0 0.0
    %1577 = vmatprep.subr.mxu0 0.0
    %1578 = vmatpush1.msra.mxu0 0.0
    %1579 = vmatprep.subr.mxu0 0.0
    %1580 = vmatpush1.msra.mxu0 %v1548
    %1581 = vmatprep.subr.mxu0 0.0
    %1582 = vmatpush2.msra.mxu0 0.0
    %1583 = vmatprep.subr.mxu0 0.0
    %1584 = vmatpush2.msra.mxu0 0.0
    %1585 = vmatprep.subr.mxu0 0.0
    %1586 = vmatpush2.msra.mxu0 0.0
    %1587 = vmatprep.subr.mxu0 0.0
    %1588 = vmatpush2.msra.mxu0 0.0
    %1589 = vmatprep.subr.mxu0 0.0
    %1590 = vmatpush2.msra.mxu0 0.0
    %1591 = vmatprep.subr.mxu0 0.0
    %1592 = vmatpush2.msra.mxu0 0.0
    %1593 = vmatprep.subr.mxu0 0.0
    %1594 = vmatpush2.msra.mxu0 0.0
    %1595 = vmatprep.subr.mxu0 0.0
    %1596 = vmatpush2.msra.mxu0 0.0
    %1597 = vmatprep.subr.mxu0 0.0
    %1598 = vmatpush2.msra.mxu0 0.0
    %1599 = vmatprep.subr.mxu0 0.0
    %1600 = vmatpush2.msra.mxu0 0.0
    %1601 = vmatprep.subr.mxu0 0.0
    %1602 = vmatpush2.msra.mxu0 0.0
    %1603 = vmatprep.subr.mxu0 0.0
    %1604 = vmatpush2.msra.mxu0 0.0
    %1605 = vmatprep.subr.mxu0 0.0
    %1606 = vmatpush2.msra.mxu0 0.0
    %1607 = vmatprep.subr.mxu0 0.0
    %1608 = vmatpush2.msra.mxu0 0.0
    %1609 = vmatprep.subr.mxu0 0.0
    %1610 = vmatpush2.msra.mxu0 0.0
    %1611 = vmatprep.subr.mxu0 0.0
    %1612 = vmatpush2.msra.mxu0 0.0
    %1613 = vmatprep.mubr.f32.mxu0 0.0
    %1614 = vmatmul.mubr.f32.gmra.mxu0 %v244
    %v1615 = vpop.f32.mrf.mxu0
    %v1616 = vadd.f32 0.0, %v1615
    %v1617 = vpop.f32.mrf.mxu0
    %1618 = vdwg.mxu0
    %v1619 = vmul.f32 %v1476, %v1616
    %v1620 = vsub.f32 %v1619, 0.125
    %v1621 = vand.u32 2147483647, %v1620
    %v1622 = vsel %vm318, %v1621, -inf
    %1623 = vmax.xlane.f32.xlu0 %v1622
    %v1624 = vpop.xlane.xlu0 %1623
    %v1625 = vrot.slane %v1624, 4
    %v1626 = vmax.f32 %v1624, %v1625
    %v1627 = vrot.slane %v1626, 2
    %v1628 = vmax.f32 %v1626, %v1627
    %v1629 = vrot.slane %v1628, 1
    %v1630 = vmax.f32 %v1628, %v1629
    %s1631 = vtos %v1630
    %p1632 = scmp.le.f32.partialorder %s1631, 1e-06
    %p1633 = por %p1470, %p1632
    %v1634 = vrcp.pop %v1616
    %v1635 = vmul.f32 %v1634, 0.125
    %s1636 = scalar_select %p1633, 1, 0
    %v1637 = vstv %s1636
    %vm1638 = vcmp.eq.s32.totalorder %v1637, 1
    %v1639 = vsel %vm1638, %v1476, %v1635
    %1640 = vmatprep.subr.mxu0 0.0
    %1641 = vmatpush1.msra.mxu0 0.0
    %1642 = vmatprep.subr.mxu0 0.0
    %1643 = vmatpush1.msra.mxu0 0.0
    %1644 = vmatprep.subr.mxu0 0.0
    %1645 = vmatpush1.msra.mxu0 0.0
    %1646 = vmatprep.subr.mxu0 0.0
    %1647 = vmatpush1.msra.mxu0 0.0
    %1648 = vmatprep.subr.mxu0 0.0
    %1649 = vmatpush1.msra.mxu0 0.0
    %1650 = vmatprep.subr.mxu0 0.0
    %1651 = vmatpush1.msra.mxu0 0.0
    %1652 = vmatprep.subr.mxu0 0.0
    %1653 = vmatpush1.msra.mxu0 0.0
    %1654 = vmatprep.subr.mxu0 0.0
    %1655 = vmatpush1.msra.mxu0 0.0
    %1656 = vmatprep.subr.mxu0 0.0
    %1657 = vmatpush1.msra.mxu0 0.0
    %1658 = vmatprep.subr.mxu0 0.0
    %1659 = vmatpush1.msra.mxu0 0.0
    %1660 = vmatprep.subr.mxu0 0.0
    %1661 = vmatpush1.msra.mxu0 0.0
    %1662 = vmatprep.subr.mxu0 0.0
    %1663 = vmatpush1.msra.mxu0 0.0
    %1664 = vmatprep.subr.mxu0 0.0
    %1665 = vmatpush1.msra.mxu0 0.0
    %1666 = vmatprep.subr.mxu0 0.0
    %1667 = vmatpush1.msra.mxu0 0.0
    %1668 = vmatprep.subr.mxu0 0.0
    %1669 = vmatpush1.msra.mxu0 0.0
    %1670 = vmatprep.subr.mxu0 0.0
    %1671 = vmatpush1.msra.mxu0 %v1639
    %1672 = vmatprep.subr.mxu0 0.0
    %1673 = vmatpush2.msra.mxu0 0.0
    %1674 = vmatprep.subr.mxu0 0.0
    %1675 = vmatpush2.msra.mxu0 0.0
    %1676 = vmatprep.subr.mxu0 0.0
    %1677 = vmatpush2.msra.mxu0 0.0
    %1678 = vmatprep.subr.mxu0 0.0
    %1679 = vmatpush2.msra.mxu0 0.0
    %1680 = vmatprep.subr.mxu0 0.0
    %1681 = vmatpush2.msra.mxu0 0.0
    %1682 = vmatprep.subr.mxu0 0.0
    %1683 = vmatpush2.msra.mxu0 0.0
    %1684 = vmatprep.subr.mxu0 0.0
    %1685 = vmatpush2.msra.mxu0 0.0
    %1686 = vmatprep.subr.mxu0 0.0
    %1687 = vmatpush2.msra.mxu0 0.0
    %1688 = vmatprep.subr.mxu0 0.0
    %1689 = vmatpush2.msra.mxu0 0.0
    %1690 = vmatprep.subr.mxu0 0.0
    %1691 = vmatpush2.msra.mxu0 0.0
    %1692 = vmatprep.subr.mxu0 0.0
    %1693 = vmatpush2.msra.mxu0 0.0
    %1694 = vmatprep.subr.mxu0 0.0
    %1695 = vmatpush2.msra.mxu0 0.0
    %1696 = vmatprep.subr.mxu0 0.0
    %1697 = vmatpush2.msra.mxu0 0.0
    %1698 = vmatprep.subr.mxu0 0.0
    %1699 = vmatpush2.msra.mxu0 0.0
    %1700 = vmatprep.subr.mxu0 0.0
    %1701 = vmatpush2.msra.mxu0 0.0
    %1702 = vmatprep.subr.mxu0 0.0
    %1703 = vmatpush2.msra.mxu0 0.0
    %1704 = vmatprep.mubr.f32.mxu0 0.0
    %1705 = vmatmul.mubr.f32.gmra.mxu0 %v169
    %v1706 = vpop.f32.mrf.mxu0
    %v1707 = vadd.f32 0.0, %v1706
    %v1708 = vpop.f32.mrf.mxu0
    %1709 = vdwg.mxu0
    %v1710 = vrcp.pop %v1707
    %v1711 = vmul.f32 %v1710, 0.125
    %1712 = vmatprep.subr.mxu0 0.0
    %1713 = vmatpush1.msra.mxu0 0.0
    %1714 = vmatprep.subr.mxu0 0.0
    %1715 = vmatpush1.msra.mxu0 0.0
    %1716 = vmatprep.subr.mxu0 0.0
    %1717 = vmatpush1.msra.mxu0 0.0
    %1718 = vmatprep.subr.mxu0 0.0
    %1719 = vmatpush1.msra.mxu0 0.0
    %1720 = vmatprep.subr.mxu0 0.0
    %1721 = vmatpush1.msra.mxu0 0.0
    %1722 = vmatprep.subr.mxu0 0.0
    %1723 = vmatpush1.msra.mxu0 0.0
    %1724 = vmatprep.subr.mxu0 0.0
    %1725 = vmatpush1.msra.mxu0 0.0
    %1726 = vmatprep.subr.mxu0 0.0
    %1727 = vmatpush1.msra.mxu0 0.0
    %1728 = vmatprep.subr.mxu0 0.0
    %1729 = vmatpush1.msra.mxu0 0.0
    %1730 = vmatprep.subr.mxu0 0.0
    %1731 = vmatpush1.msra.mxu0 0.0
    %1732 = vmatprep.subr.mxu0 0.0
    %1733 = vmatpush1.msra.mxu0 0.0
    %1734 = vmatprep.subr.mxu0 0.0
    %1735 = vmatpush1.msra.mxu0 0.0
    %1736 = vmatprep.subr.mxu0 0.0
    %1737 = vmatpush1.msra.mxu0 0.0
    %1738 = vmatprep.subr.mxu0 0.0
    %1739 = vmatpush1.msra.mxu0 0.0
    %1740 = vmatprep.subr.mxu0 0.0
    %1741 = vmatpush1.msra.mxu0 0.0
    %1742 = vmatprep.subr.mxu0 0.0
    %1743 = vmatpush1.msra.mxu0 %v1711
    %1744 = vmatprep.subr.mxu0 0.0
    %1745 = vmatpush2.msra.mxu0 0.0
    %1746 = vmatprep.subr.mxu0 0.0
    %1747 = vmatpush2.msra.mxu0 0.0
    %1748 = vmatprep.subr.mxu0 0.0
    %1749 = vmatpush2.msra.mxu0 0.0
    %1750 = vmatprep.subr.mxu0 0.0
    %1751 = vmatpush2.msra.mxu0 0.0
    %1752 = vmatprep.subr.mxu0 0.0
    %1753 = vmatpush2.msra.mxu0 0.0
    %1754 = vmatprep.subr.mxu0 0.0
    %1755 = vmatpush2.msra.mxu0 0.0
    %1756 = vmatprep.subr.mxu0 0.0
    %1757 = vmatpush2.msra.mxu0 0.0
    %1758 = vmatprep.subr.mxu0 0.0
    %1759 = vmatpush2.msra.mxu0 0.0
    %1760 = vmatprep.subr.mxu0 0.0
    %1761 = vmatpush2.msra.mxu0 0.0
    %1762 = vmatprep.subr.mxu0 0.0
    %1763 = vmatpush2.msra.mxu0 0.0
    %1764 = vmatprep.subr.mxu0 0.0
    %1765 = vmatpush2.msra.mxu0 0.0
    %1766 = vmatprep.subr.mxu0 0.0
    %1767 = vmatpush2.msra.mxu0 0.0
    %1768 = vmatprep.subr.mxu0 0.0
    %1769 = vmatpush2.msra.mxu0 0.0
    %1770 = vmatprep.subr.mxu0 0.0
    %1771 = vmatpush2.msra.mxu0 0.0
    %1772 = vmatprep.subr.mxu0 0.0
    %1773 = vmatpush2.msra.mxu0 0.0
    %1774 = vmatprep.subr.mxu0 0.0
    %1775 = vmatpush2.msra.mxu0 0.0
    %1776 = vmatprep.mubr.f32.mxu0 0.0
    %1777 = vmatmul.mubr.f32.gmra.mxu0 %v244
    %v1778 = vpop.f32.mrf.mxu0
    %v1779 = vadd.f32 0.0, %v1778
    %v1780 = vpop.f32.mrf.mxu0
    %1781 = vdwg.mxu0
    %v1782 = vmul.f32 %v1639, %v1779
    %v1783 = vsub.f32 %v1782, 0.125
    %v1784 = vand.u32 2147483647, %v1783
    %v1785 = vsel %vm318, %v1784, -inf
    %1786 = vmax.xlane.f32.xlu0 %v1785
    %v1787 = vpop.xlane.xlu0 %1786
    %v1788 = vrot.slane %v1787, 4
    %v1789 = vmax.f32 %v1787, %v1788
    %v1790 = vrot.slane %v1789, 2
    %v1791 = vmax.f32 %v1789, %v1790
    %v1792 = vrot.slane %v1791, 1
    %v1793 = vmax.f32 %v1791, %v1792
    %s1794 = vtos %v1793
    %p1795 = scmp.le.f32.partialorder %s1794, 1e-06
    %p1796 = por %p1633, %p1795
    %v1797 = vrcp.pop %v1779
    %v1798 = vmul.f32 %v1797, 0.125
    %s1799 = scalar_select %p1796, 1, 0
    %v1800 = vstv %s1799
    %vm1801 = vcmp.eq.s32.totalorder %v1800, 1
    %v1802 = vsel %vm1801, %v1639, %v1798
    %1803 = vmatprep.subr.mxu0 0.0
    %1804 = vmatpush1.msra.mxu0 0.0
    %1805 = vmatprep.subr.mxu0 0.0
    %1806 = vmatpush1.msra.mxu0 0.0
    %1807 = vmatprep.subr.mxu0 0.0
    %1808 = vmatpush1.msra.mxu0 0.0
    %1809 = vmatprep.subr.mxu0 0.0
    %1810 = vmatpush1.msra.mxu0 0.0
    %1811 = vmatprep.subr.mxu0 0.0
    %1812 = vmatpush1.msra.mxu0 0.0
    %1813 = vmatprep.subr.mxu0 0.0
    %1814 = vmatpush1.msra.mxu0 0.0
    %1815 = vmatprep.subr.mxu0 0.0
    %1816 = vmatpush1.msra.mxu0 0.0
    %1817 = vmatprep.subr.mxu0 0.0
    %1818 = vmatpush1.msra.mxu0 0.0
    %1819 = vmatprep.subr.mxu0 0.0
    %1820 = vmatpush1.msra.mxu0 0.0
    %1821 = vmatprep.subr.mxu0 0.0
    %1822 = vmatpush1.msra.mxu0 0.0
    %1823 = vmatprep.subr.mxu0 0.0
    %1824 = vmatpush1.msra.mxu0 0.0
    %1825 = vmatprep.subr.mxu0 0.0
    %1826 = vmatpush1.msra.mxu0 0.0
    %1827 = vmatprep.subr.mxu0 0.0
    %1828 = vmatpush1.msra.mxu0 0.0
    %1829 = vmatprep.subr.mxu0 0.0
    %1830 = vmatpush1.msra.mxu0 0.0
    %1831 = vmatprep.subr.mxu0 0.0
    %1832 = vmatpush1.msra.mxu0 0.0
    %1833 = vmatprep.subr.mxu0 0.0
    %1834 = vmatpush1.msra.mxu0 %v1802
    %1835 = vmatprep.subr.mxu0 0.0
    %1836 = vmatpush2.msra.mxu0 0.0
    %1837 = vmatprep.subr.mxu0 0.0
    %1838 = vmatpush2.msra.mxu0 0.0
    %1839 = vmatprep.subr.mxu0 0.0
    %1840 = vmatpush2.msra.mxu0 0.0
    %1841 = vmatprep.subr.mxu0 0.0
    %1842 = vmatpush2.msra.mxu0 0.0
    %1843 = vmatprep.subr.mxu0 0.0
    %1844 = vmatpush2.msra.mxu0 0.0
    %1845 = vmatprep.subr.mxu0 0.0
    %1846 = vmatpush2.msra.mxu0 0.0
    %1847 = vmatprep.subr.mxu0 0.0
    %1848 = vmatpush2.msra.mxu0 0.0
    %1849 = vmatprep.subr.mxu0 0.0
    %1850 = vmatpush2.msra.mxu0 0.0
    %1851 = vmatprep.subr.mxu0 0.0
    %1852 = vmatpush2.msra.mxu0 0.0
    %1853 = vmatprep.subr.mxu0 0.0
    %1854 = vmatpush2.msra.mxu0 0.0
    %1855 = vmatprep.subr.mxu0 0.0
    %1856 = vmatpush2.msra.mxu0 0.0
    %1857 = vmatprep.subr.mxu0 0.0
    %1858 = vmatpush2.msra.mxu0 0.0
    %1859 = vmatprep.subr.mxu0 0.0
    %1860 = vmatpush2.msra.mxu0 0.0
    %1861 = vmatprep.subr.mxu0 0.0
    %1862 = vmatpush2.msra.mxu0 0.0
    %1863 = vmatprep.subr.mxu0 0.0
    %1864 = vmatpush2.msra.mxu0 0.0
    %1865 = vmatprep.subr.mxu0 0.0
    %1866 = vmatpush2.msra.mxu0 0.0
    %1867 = vmatprep.mubr.f32.mxu0 0.0
    %1868 = vmatmul.mubr.f32.gmra.mxu0 %v169
    %v1869 = vpop.f32.mrf.mxu0
    %v1870 = vadd.f32 0.0, %v1869
    %v1871 = vpop.f32.mrf.mxu0
    %1872 = vdwg.mxu0
    %v1873 = vrcp.pop %v1870
    %v1874 = vmul.f32 %v1873, 0.125
    %1875 = vmatprep.subr.mxu0 0.0
    %1876 = vmatpush1.msra.mxu0 0.0
    %1877 = vmatprep.subr.mxu0 0.0
    %1878 = vmatpush1.msra.mxu0 0.0
    %1879 = vmatprep.subr.mxu0 0.0
    %1880 = vmatpush1.msra.mxu0 0.0
    %1881 = vmatprep.subr.mxu0 0.0
    %1882 = vmatpush1.msra.mxu0 0.0
    %1883 = vmatprep.subr.mxu0 0.0
    %1884 = vmatpush1.msra.mxu0 0.0
    %1885 = vmatprep.subr.mxu0 0.0
    %1886 = vmatpush1.msra.mxu0 0.0
    %1887 = vmatprep.subr.mxu0 0.0
    %1888 = vmatpush1.msra.mxu0 0.0
    %1889 = vmatprep.subr.mxu0 0.0
    %1890 = vmatpush1.msra.mxu0 0.0
    %1891 = vmatprep.subr.mxu0 0.0
    %1892 = vmatpush1.msra.mxu0 0.0
    %1893 = vmatprep.subr.mxu0 0.0
    %1894 = vmatpush1.msra.mxu0 0.0
    %1895 = vmatprep.subr.mxu0 0.0
    %1896 = vmatpush1.msra.mxu0 0.0
    %1897 = vmatprep.subr.mxu0 0.0
    %1898 = vmatpush1.msra.mxu0 0.0
    %1899 = vmatprep.subr.mxu0 0.0
    %1900 = vmatpush1.msra.mxu0 0.0
    %1901 = vmatprep.subr.mxu0 0.0
    %1902 = vmatpush1.msra.mxu0 0.0
    %1903 = vmatprep.subr.mxu0 0.0
    %1904 = vmatpush1.msra.mxu0 0.0
    %1905 = vmatprep.subr.mxu0 0.0
    %1906 = vmatpush1.msra.mxu0 %v1874
    %1907 = vmatprep.subr.mxu0 0.0
    %1908 = vmatpush2.msra.mxu0 0.0
    %1909 = vmatprep.subr.mxu0 0.0
    %1910 = vmatpush2.msra.mxu0 0.0
    %1911 = vmatprep.subr.mxu0 0.0
    %1912 = vmatpush2.msra.mxu0 0.0
    %1913 = vmatprep.subr.mxu0 0.0
    %1914 = vmatpush2.msra.mxu0 0.0
    %1915 = vmatprep.subr.mxu0 0.0
    %1916 = vmatpush2.msra.mxu0 0.0
    %1917 = vmatprep.subr.mxu0 0.0
    %1918 = vmatpush2.msra.mxu0 0.0
    %1919 = vmatprep.subr.mxu0 0.0
    %1920 = vmatpush2.msra.mxu0 0.0
    %1921 = vmatprep.subr.mxu0 0.0
    %1922 = vmatpush2.msra.mxu0 0.0
    %1923 = vmatprep.subr.mxu0 0.0
    %1924 = vmatpush2.msra.mxu0 0.0
    %1925 = vmatprep.subr.mxu0 0.0
    %1926 = vmatpush2.msra.mxu0 0.0
    %1927 = vmatprep.subr.mxu0 0.0
    %1928 = vmatpush2.msra.mxu0 0.0
    %1929 = vmatprep.subr.mxu0 0.0
    %1930 = vmatpush2.msra.mxu0 0.0
    %1931 = vmatprep.subr.mxu0 0.0
    %1932 = vmatpush2.msra.mxu0 0.0
    %1933 = vmatprep.subr.mxu0 0.0
    %1934 = vmatpush2.msra.mxu0 0.0
    %1935 = vmatprep.subr.mxu0 0.0
    %1936 = vmatpush2.msra.mxu0 0.0
    %1937 = vmatprep.subr.mxu0 0.0
    %1938 = vmatpush2.msra.mxu0 0.0
    %1939 = vmatprep.mubr.f32.mxu0 0.0
    %1940 = vmatmul.mubr.f32.gmra.mxu0 %v244
    %v1941 = vpop.f32.mrf.mxu0
    %v1942 = vadd.f32 0.0, %v1941
    %v1943 = vpop.f32.mrf.mxu0
    %1944 = vdwg.mxu0
    %v1945 = vmul.f32 %v1802, %v1942
    %v1946 = vsub.f32 %v1945, 0.125
    %v1947 = vand.u32 2147483647, %v1946
    %v1948 = vsel %vm318, %v1947, -inf
    %1949 = vmax.xlane.f32.xlu0 %v1948
    %v1950 = vpop.xlane.xlu0 %1949
    %v1951 = vrot.slane %v1950, 4
    %v1952 = vmax.f32 %v1950, %v1951
    %v1953 = vrot.slane %v1952, 2
    %v1954 = vmax.f32 %v1952, %v1953
    %v1955 = vrot.slane %v1954, 1
    %v1956 = vmax.f32 %v1954, %v1955
    %s1957 = vtos %v1956
    %p1958 = scmp.le.f32.partialorder %s1957, 1e-06
    %p1959 = por %p1796, %p1958
    %v1960 = vrcp.pop %v1942
    %v1961 = vmul.f32 %v1960, 0.125
    %s1962 = scalar_select %p1959, 1, 0
    %v1963 = vstv %s1962
    %vm1964 = vcmp.eq.s32.totalorder %v1963, 1
    %v1965 = vsel %vm1964, %v1802, %v1961
    %1966 = vmatprep.subr.mxu0 0.0
    %1967 = vmatpush1.msra.mxu0 0.0
    %1968 = vmatprep.subr.mxu0 0.0
    %1969 = vmatpush1.msra.mxu0 0.0
    %1970 = vmatprep.subr.mxu0 0.0
    %1971 = vmatpush1.msra.mxu0 0.0
    %1972 = vmatprep.subr.mxu0 0.0
    %1973 = vmatpush1.msra.mxu0 0.0
    %1974 = vmatprep.subr.mxu0 0.0
    %1975 = vmatpush1.msra.mxu0 0.0
    %1976 = vmatprep.subr.mxu0 0.0
    %1977 = vmatpush1.msra.mxu0 0.0
    %1978 = vmatprep.subr.mxu0 0.0
    %1979 = vmatpush1.msra.mxu0 0.0
    %1980 = vmatprep.subr.mxu0 0.0
    %1981 = vmatpush1.msra.mxu0 0.0
    %1982 = vmatprep.subr.mxu0 0.0
    %1983 = vmatpush1.msra.mxu0 0.0
    %1984 = vmatprep.subr.mxu0 0.0
    %1985 = vmatpush1.msra.mxu0 0.0
    %1986 = vmatprep.subr.mxu0 0.0
    %1987 = vmatpush1.msra.mxu0 0.0
    %1988 = vmatprep.subr.mxu0 0.0
    %1989 = vmatpush1.msra.mxu0 0.0
    %1990 = vmatprep.subr.mxu0 0.0
    %1991 = vmatpush1.msra.mxu0 0.0
    %1992 = vmatprep.subr.mxu0 0.0
    %1993 = vmatpush1.msra.mxu0 0.0
    %1994 = vmatprep.subr.mxu0 0.0
    %1995 = vmatpush1.msra.mxu0 0.0
    %1996 = vmatprep.subr.mxu0 0.0
    %1997 = vmatpush1.msra.mxu0 %v1965
    %1998 = vmatprep.subr.mxu0 0.0
    %1999 = vmatpush2.msra.mxu0 0.0
    %2000 = vmatprep.subr.mxu0 0.0
    %2001 = vmatpush2.msra.mxu0 0.0
    %2002 = vmatprep.subr.mxu0 0.0
    %2003 = vmatpush2.msra.mxu0 0.0
    %2004 = vmatprep.subr.mxu0 0.0
    %2005 = vmatpush2.msra.mxu0 0.0
    %2006 = vmatprep.subr.mxu0 0.0
    %2007 = vmatpush2.msra.mxu0 0.0
    %2008 = vmatprep.subr.mxu0 0.0
    %2009 = vmatpush2.msra.mxu0 0.0
    %2010 = vmatprep.subr.mxu0 0.0
    %2011 = vmatpush2.msra.mxu0 0.0
    %2012 = vmatprep.subr.mxu0 0.0
    %2013 = vmatpush2.msra.mxu0 0.0
    %2014 = vmatprep.subr.mxu0 0.0
    %2015 = vmatpush2.msra.mxu0 0.0
    %2016 = vmatprep.subr.mxu0 0.0
    %2017 = vmatpush2.msra.mxu0 0.0
    %2018 = vmatprep.subr.mxu0 0.0
    %2019 = vmatpush2.msra.mxu0 0.0
    %2020 = vmatprep.subr.mxu0 0.0
    %2021 = vmatpush2.msra.mxu0 0.0
    %2022 = vmatprep.subr.mxu0 0.0
    %2023 = vmatpush2.msra.mxu0 0.0
    %2024 = vmatprep.subr.mxu0 0.0
    %2025 = vmatpush2.msra.mxu0 0.0
    %2026 = vmatprep.subr.mxu0 0.0
    %2027 = vmatpush2.msra.mxu0 0.0
    %2028 = vmatprep.subr.mxu0 0.0
    %2029 = vmatpush2.msra.mxu0 0.0
    %2030 = vmatprep.mubr.f32.mxu0 0.0
    %2031 = vmatmul.mubr.f32.gmra.mxu0 %v169
    %v2032 = vpop.f32.mrf.mxu0
    %v2033 = vadd.f32 0.0, %v2032
    %v2034 = vpop.f32.mrf.mxu0
    %2035 = vdwg.mxu0
    %v2036 = vrcp.pop %v2033
    %v2037 = vmul.f32 %v2036, 0.125
    %2038 = vmatprep.subr.mxu0 0.0
    %2039 = vmatpush1.msra.mxu0 0.0
    %2040 = vmatprep.subr.mxu0 0.0
    %2041 = vmatpush1.msra.mxu0 0.0
    %2042 = vmatprep.subr.mxu0 0.0
    %2043 = vmatpush1.msra.mxu0 0.0
    %2044 = vmatprep.subr.mxu0 0.0
    %2045 = vmatpush1.msra.mxu0 0.0
    %2046 = vmatprep.subr.mxu0 0.0
    %2047 = vmatpush1.msra.mxu0 0.0
    %2048 = vmatprep.subr.mxu0 0.0
    %2049 = vmatpush1.msra.mxu0 0.0
    %2050 = vmatprep.subr.mxu0 0.0
    %2051 = vmatpush1.msra.mxu0 0.0
    %2052 = vmatprep.subr.mxu0 0.0
    %2053 = vmatpush1.msra.mxu0 0.0
    %2054 = vmatprep.subr.mxu0 0.0
    %2055 = vmatpush1.msra.mxu0 0.0
    %2056 = vmatprep.subr.mxu0 0.0
    %2057 = vmatpush1.msra.mxu0 0.0
    %2058 = vmatprep.subr.mxu0 0.0
    %2059 = vmatpush1.msra.mxu0 0.0
    %2060 = vmatprep.subr.mxu0 0.0
    %2061 = vmatpush1.msra.mxu0 0.0
    %2062 = vmatprep.subr.mxu0 0.0
    %2063 = vmatpush1.msra.mxu0 0.0
    %2064 = vmatprep.subr.mxu0 0.0
    %2065 = vmatpush1.msra.mxu0 0.0
    %2066 = vmatprep.subr.mxu0 0.0
    %2067 = vmatpush1.msra.mxu0 0.0
    %2068 = vmatprep.subr.mxu0 0.0
    %2069 = vmatpush1.msra.mxu0 %v2037
    %2070 = vmatprep.subr.mxu0 0.0
    %2071 = vmatpush2.msra.mxu0 0.0
    %2072 = vmatprep.subr.mxu0 0.0
    %2073 = vmatpush2.msra.mxu0 0.0
    %2074 = vmatprep.subr.mxu0 0.0
    %2075 = vmatpush2.msra.mxu0 0.0
    %2076 = vmatprep.subr.mxu0 0.0
    %2077 = vmatpush2.msra.mxu0 0.0
    %2078 = vmatprep.subr.mxu0 0.0
    %2079 = vmatpush2.msra.mxu0 0.0
    %2080 = vmatprep.subr.mxu0 0.0
    %2081 = vmatpush2.msra.mxu0 0.0
    %2082 = vmatprep.subr.mxu0 0.0
    %2083 = vmatpush2.msra.mxu0 0.0
    %2084 = vmatprep.subr.mxu0 0.0
    %2085 = vmatpush2.msra.mxu0 0.0
    %2086 = vmatprep.subr.mxu0 0.0
    %2087 = vmatpush2.msra.mxu0 0.0
    %2088 = vmatprep.subr.mxu0 0.0
    %2089 = vmatpush2.msra.mxu0 0.0
    %2090 = vmatprep.subr.mxu0 0.0
    %2091 = vmatpush2.msra.mxu0 0.0
    %2092 = vmatprep.subr.mxu0 0.0
    %2093 = vmatpush2.msra.mxu0 0.0
    %2094 = vmatprep.subr.mxu0 0.0
    %2095 = vmatpush2.msra.mxu0 0.0
    %2096 = vmatprep.subr.mxu0 0.0
    %2097 = vmatpush2.msra.mxu0 0.0
    %2098 = vmatprep.subr.mxu0 0.0
    %2099 = vmatpush2.msra.mxu0 0.0
    %2100 = vmatprep.subr.mxu0 0.0
    %2101 = vmatpush2.msra.mxu0 0.0
    %2102 = vmatprep.mubr.f32.mxu0 0.0
    %2103 = vmatmul.mubr.f32.gmra.mxu0 %v244
    %v2104 = vpop.f32.mrf.mxu0
    %v2105 = vadd.f32 0.0, %v2104
    %v2106 = vpop.f32.mrf.mxu0
    %2107 = vdwg.mxu0
    %v2108 = vmul.f32 %v1965, %v2105
    %v2109 = vsub.f32 %v2108, 0.125
    %v2110 = vand.u32 2147483647, %v2109
    %v2111 = vsel %vm318, %v2110, -inf
    %2112 = vmax.xlane.f32.xlu0 %v2111
    %v2113 = vpop.xlane.xlu0 %2112
    %v2114 = vrot.slane %v2113, 4
    %v2115 = vmax.f32 %v2113, %v2114
    %v2116 = vrot.slane %v2115, 2
    %v2117 = vmax.f32 %v2115, %v2116
    %v2118 = vrot.slane %v2117, 1
    %v2119 = vmax.f32 %v2117, %v2118
    %s2120 = vtos %v2119
    %p2121 = scmp.le.f32.partialorder %s2120, 1e-06
    %p2122 = por %p1959, %p2121
    %v2123 = vrcp.pop %v2105
    %v2124 = vmul.f32 %v2123, 0.125
    %s2125 = scalar_select %p2122, 1, 0
    %v2126 = vstv %s2125
    %vm2127 = vcmp.eq.s32.totalorder %v2126, 1
    %v2128 = vsel %vm2127, %v1965, %v2124
    %2129 = vmatprep.subr.mxu0 0.0
    %2130 = vmatpush1.msra.mxu0 0.0
    %2131 = vmatprep.subr.mxu0 0.0
    %2132 = vmatpush1.msra.mxu0 0.0
    %2133 = vmatprep.subr.mxu0 0.0
    %2134 = vmatpush1.msra.mxu0 0.0
    %2135 = vmatprep.subr.mxu0 0.0
    %2136 = vmatpush1.msra.mxu0 0.0
    %2137 = vmatprep.subr.mxu0 0.0
    %2138 = vmatpush1.msra.mxu0 0.0
    %2139 = vmatprep.subr.mxu0 0.0
    %2140 = vmatpush1.msra.mxu0 0.0
    %2141 = vmatprep.subr.mxu0 0.0
    %2142 = vmatpush1.msra.mxu0 0.0
    %2143 = vmatprep.subr.mxu0 0.0
    %2144 = vmatpush1.msra.mxu0 0.0
    %2145 = vmatprep.subr.mxu0 0.0
    %2146 = vmatpush1.msra.mxu0 0.0
    %2147 = vmatprep.subr.mxu0 0.0
    %2148 = vmatpush1.msra.mxu0 0.0
    %2149 = vmatprep.subr.mxu0 0.0
    %2150 = vmatpush1.msra.mxu0 0.0
    %2151 = vmatprep.subr.mxu0 0.0
    %2152 = vmatpush1.msra.mxu0 0.0
    %2153 = vmatprep.subr.mxu0 0.0
    %2154 = vmatpush1.msra.mxu0 0.0
    %2155 = vmatprep.subr.mxu0 0.0
    %2156 = vmatpush1.msra.mxu0 0.0
    %2157 = vmatprep.subr.mxu0 0.0
    %2158 = vmatpush1.msra.mxu0 0.0
    %2159 = vmatprep.subr.mxu0 0.0
    %2160 = vmatpush1.msra.mxu0 %v2128
    %2161 = vmatprep.subr.mxu0 0.0
    %2162 = vmatpush2.msra.mxu0 0.0
    %2163 = vmatprep.subr.mxu0 0.0
    %2164 = vmatpush2.msra.mxu0 0.0
    %2165 = vmatprep.subr.mxu0 0.0
    %2166 = vmatpush2.msra.mxu0 0.0
    %2167 = vmatprep.subr.mxu0 0.0
    %2168 = vmatpush2.msra.mxu0 0.0
    %2169 = vmatprep.subr.mxu0 0.0
    %2170 = vmatpush2.msra.mxu0 0.0
    %2171 = vmatprep.subr.mxu0 0.0
    %2172 = vmatpush2.msra.mxu0 0.0
    %2173 = vmatprep.subr.mxu0 0.0
    %2174 = vmatpush2.msra.mxu0 0.0
    %2175 = vmatprep.subr.mxu0 0.0
    %2176 = vmatpush2.msra.mxu0 0.0
    %2177 = vmatprep.subr.mxu0 0.0
    %2178 = vmatpush2.msra.mxu0 0.0
    %2179 = vmatprep.subr.mxu0 0.0
    %2180 = vmatpush2.msra.mxu0 0.0
    %2181 = vmatprep.subr.mxu0 0.0
    %2182 = vmatpush2.msra.mxu0 0.0
    %2183 = vmatprep.subr.mxu0 0.0
    %2184 = vmatpush2.msra.mxu0 0.0
    %2185 = vmatprep.subr.mxu0 0.0
    %2186 = vmatpush2.msra.mxu0 0.0
    %2187 = vmatprep.subr.mxu0 0.0
    %2188 = vmatpush2.msra.mxu0 0.0
    %2189 = vmatprep.subr.mxu0 0.0
    %2190 = vmatpush2.msra.mxu0 0.0
    %2191 = vmatprep.subr.mxu0 0.0
    %2192 = vmatpush2.msra.mxu0 0.0
    %2193 = vmatprep.mubr.f32.mxu0 0.0
    %2194 = vmatmul.mubr.f32.gmra.mxu0 %v169
    %v2195 = vpop.f32.mrf.mxu0
    %v2196 = vadd.f32 0.0, %v2195
    %v2197 = vpop.f32.mrf.mxu0
    %2198 = vdwg.mxu0
    %v2199 = vrcp.pop %v2196
    %v2200 = vmul.f32 %v2199, 0.125
    %2201 = vmatprep.subr.mxu0 0.0
    %2202 = vmatpush1.msra.mxu0 0.0
    %2203 = vmatprep.subr.mxu0 0.0
    %2204 = vmatpush1.msra.mxu0 0.0
    %2205 = vmatprep.subr.mxu0 0.0
    %2206 = vmatpush1.msra.mxu0 0.0
    %2207 = vmatprep.subr.mxu0 0.0
    %2208 = vmatpush1.msra.mxu0 0.0
    %2209 = vmatprep.subr.mxu0 0.0
    %2210 = vmatpush1.msra.mxu0 0.0
    %2211 = vmatprep.subr.mxu0 0.0
    %2212 = vmatpush1.msra.mxu0 0.0
    %2213 = vmatprep.subr.mxu0 0.0
    %2214 = vmatpush1.msra.mxu0 0.0
    %2215 = vmatprep.subr.mxu0 0.0
    %2216 = vmatpush1.msra.mxu0 0.0
    %2217 = vmatprep.subr.mxu0 0.0
    %2218 = vmatpush1.msra.mxu0 0.0
    %2219 = vmatprep.subr.mxu0 0.0
    %2220 = vmatpush1.msra.mxu0 0.0
    %2221 = vmatprep.subr.mxu0 0.0
    %2222 = vmatpush1.msra.mxu0 0.0
    %2223 = vmatprep.subr.mxu0 0.0
    %2224 = vmatpush1.msra.mxu0 0.0
    %2225 = vmatprep.subr.mxu0 0.0
    %2226 = vmatpush1.msra.mxu0 0.0
    %2227 = vmatprep.subr.mxu0 0.0
    %2228 = vmatpush1.msra.mxu0 0.0
    %2229 = vmatprep.subr.mxu0 0.0
    %2230 = vmatpush1.msra.mxu0 0.0
    %2231 = vmatprep.subr.mxu0 0.0
    %2232 = vmatpush1.msra.mxu0 %v2200
    %2233 = vmatprep.subr.mxu0 0.0
    %2234 = vmatpush2.msra.mxu0 0.0
    %2235 = vmatprep.subr.mxu0 0.0
    %2236 = vmatpush2.msra.mxu0 0.0
    %2237 = vmatprep.subr.mxu0 0.0
    %2238 = vmatpush2.msra.mxu0 0.0
    %2239 = vmatprep.subr.mxu0 0.0
    %2240 = vmatpush2.msra.mxu0 0.0
    %2241 = vmatprep.subr.mxu0 0.0
    %2242 = vmatpush2.msra.mxu0 0.0
    %2243 = vmatprep.subr.mxu0 0.0
    %2244 = vmatpush2.msra.mxu0 0.0
    %2245 = vmatprep.subr.mxu0 0.0
    %2246 = vmatpush2.msra.mxu0 0.0
    %2247 = vmatprep.subr.mxu0 0.0
    %2248 = vmatpush2.msra.mxu0 0.0
    %2249 = vmatprep.subr.mxu0 0.0
    %2250 = vmatpush2.msra.mxu0 0.0
    %2251 = vmatprep.subr.mxu0 0.0
    %2252 = vmatpush2.msra.mxu0 0.0
    %2253 = vmatprep.subr.mxu0 0.0
    %2254 = vmatpush2.msra.mxu0 0.0
    %2255 = vmatprep.subr.mxu0 0.0
    %2256 = vmatpush2.msra.mxu0 0.0
    %2257 = vmatprep.subr.mxu0 0.0
    %2258 = vmatpush2.msra.mxu0 0.0
    %2259 = vmatprep.subr.mxu0 0.0
    %2260 = vmatpush2.msra.mxu0 0.0
    %2261 = vmatprep.subr.mxu0 0.0
    %2262 = vmatpush2.msra.mxu0 0.0
    %2263 = vmatprep.subr.mxu0 0.0
    %2264 = vmatpush2.msra.mxu0 0.0
    %2265 = vmatprep.mubr.f32.mxu0 0.0
    %2266 = vmatmul.mubr.f32.gmra.mxu0 %v244
    %v2267 = vpop.f32.mrf.mxu0
    %v2268 = vadd.f32 0.0, %v2267
    %v2269 = vpop.f32.mrf.mxu0
    %2270 = vdwg.mxu0
    %v2271 = vmul.f32 %v2128, %v2268
    %v2272 = vsub.f32 %v2271, 0.125
    %v2273 = vand.u32 2147483647, %v2272
    %v2274 = vsel %vm318, %v2273, -inf
    %2275 = vmax.xlane.f32.xlu0 %v2274
    %v2276 = vpop.xlane.xlu0 %2275
    %v2277 = vrot.slane %v2276, 4
    %v2278 = vmax.f32 %v2276, %v2277
    %v2279 = vrot.slane %v2278, 2
    %v2280 = vmax.f32 %v2278, %v2279
    %v2281 = vrot.slane %v2280, 1
    %v2282 = vmax.f32 %v2280, %v2281
    %s2283 = vtos %v2282
    %p2284 = scmp.le.f32.partialorder %s2283, 1e-06
    %p2285 = por %p2122, %p2284
    %v2286 = vrcp.pop %v2268
    %v2287 = vmul.f32 %v2286, 0.125
    %s2288 = scalar_select %p2285, 1, 0
    %v2289 = vstv %s2288
    %vm2290 = vcmp.eq.s32.totalorder %v2289, 1
    %v2291 = vsel %vm2290, %v2128, %v2287
    %2292 = vmatprep.subr.mxu0 0.0
    %2293 = vmatpush1.msra.mxu0 0.0
    %2294 = vmatprep.subr.mxu0 0.0
    %2295 = vmatpush1.msra.mxu0 0.0
    %2296 = vmatprep.subr.mxu0 0.0
    %2297 = vmatpush1.msra.mxu0 0.0
    %2298 = vmatprep.subr.mxu0 0.0
    %2299 = vmatpush1.msra.mxu0 0.0
    %2300 = vmatprep.subr.mxu0 0.0
    %2301 = vmatpush1.msra.mxu0 0.0
    %2302 = vmatprep.subr.mxu0 0.0
    %2303 = vmatpush1.msra.mxu0 0.0
    %2304 = vmatprep.subr.mxu0 0.0
    %2305 = vmatpush1.msra.mxu0 0.0
    %2306 = vmatprep.subr.mxu0 0.0
    %2307 = vmatpush1.msra.mxu0 0.0
    %2308 = vmatprep.subr.mxu0 0.0
    %2309 = vmatpush1.msra.mxu0 0.0
    %2310 = vmatprep.subr.mxu0 0.0
    %2311 = vmatpush1.msra.mxu0 0.0
    %2312 = vmatprep.subr.mxu0 0.0
    %2313 = vmatpush1.msra.mxu0 0.0
    %2314 = vmatprep.subr.mxu0 0.0
    %2315 = vmatpush1.msra.mxu0 0.0
    %2316 = vmatprep.subr.mxu0 0.0
    %2317 = vmatpush1.msra.mxu0 0.0
    %2318 = vmatprep.subr.mxu0 0.0
    %2319 = vmatpush1.msra.mxu0 0.0
    %2320 = vmatprep.subr.mxu0 0.0
    %2321 = vmatpush1.msra.mxu0 0.0
    %2322 = vmatprep.subr.mxu0 0.0
    %2323 = vmatpush1.msra.mxu0 %v2291
    %2324 = vmatprep.subr.mxu0 0.0
    %2325 = vmatpush2.msra.mxu0 0.0
    %2326 = vmatprep.subr.mxu0 0.0
    %2327 = vmatpush2.msra.mxu0 0.0
    %2328 = vmatprep.subr.mxu0 0.0
    %2329 = vmatpush2.msra.mxu0 0.0
    %2330 = vmatprep.subr.mxu0 0.0
    %2331 = vmatpush2.msra.mxu0 0.0
    %2332 = vmatprep.subr.mxu0 0.0
    %2333 = vmatpush2.msra.mxu0 0.0
    %2334 = vmatprep.subr.mxu0 0.0
    %2335 = vmatpush2.msra.mxu0 0.0
    %2336 = vmatprep.subr.mxu0 0.0
    %2337 = vmatpush2.msra.mxu0 0.0
    %2338 = vmatprep.subr.mxu0 0.0
    %2339 = vmatpush2.msra.mxu0 0.0
    %2340 = vmatprep.subr.mxu0 0.0
    %2341 = vmatpush2.msra.mxu0 0.0
    %2342 = vmatprep.subr.mxu0 0.0
    %2343 = vmatpush2.msra.mxu0 0.0
    %2344 = vmatprep.subr.mxu0 0.0
    %2345 = vmatpush2.msra.mxu0 0.0
    %2346 = vmatprep.subr.mxu0 0.0
    %2347 = vmatpush2.msra.mxu0 0.0
    %2348 = vmatprep.subr.mxu0 0.0
    %2349 = vmatpush2.msra.mxu0 0.0
    %2350 = vmatprep.subr.mxu0 0.0
    %2351 = vmatpush2.msra.mxu0 0.0
    %2352 = vmatprep.subr.mxu0 0.0
    %2353 = vmatpush2.msra.mxu0 0.0
    %2354 = vmatprep.subr.mxu0 0.0
    %2355 = vmatpush2.msra.mxu0 0.0
    %2356 = vmatprep.mubr.f32.mxu0 0.0
    %2357 = vmatmul.mubr.f32.gmra.mxu0 %v169
    %v2358 = vpop.f32.mrf.mxu0
    %v2359 = vadd.f32 0.0, %v2358
    %v2360 = vpop.f32.mrf.mxu0
    %2361 = vdwg.mxu0
    %v2362 = vrcp.pop %v2359
    %v2363 = vmul.f32 %v2362, 0.125
    %2364 = vmatprep.subr.mxu0 0.0
    %2365 = vmatpush1.msra.mxu0 0.0
    %2366 = vmatprep.subr.mxu0 0.0
    %2367 = vmatpush1.msra.mxu0 0.0
    %2368 = vmatprep.subr.mxu0 0.0
    %2369 = vmatpush1.msra.mxu0 0.0
    %2370 = vmatprep.subr.mxu0 0.0
    %2371 = vmatpush1.msra.mxu0 0.0
    %2372 = vmatprep.subr.mxu0 0.0
    %2373 = vmatpush1.msra.mxu0 0.0
    %2374 = vmatprep.subr.mxu0 0.0
    %2375 = vmatpush1.msra.mxu0 0.0
    %2376 = vmatprep.subr.mxu0 0.0
    %2377 = vmatpush1.msra.mxu0 0.0
    %2378 = vmatprep.subr.mxu0 0.0
    %2379 = vmatpush1.msra.mxu0 0.0
    %2380 = vmatprep.subr.mxu0 0.0
    %2381 = vmatpush1.msra.mxu0 0.0
    %2382 = vmatprep.subr.mxu0 0.0
    %2383 = vmatpush1.msra.mxu0 0.0
    %2384 = vmatprep.subr.mxu0 0.0
    %2385 = vmatpush1.msra.mxu0 0.0
    %2386 = vmatprep.subr.mxu0 0.0
    %2387 = vmatpush1.msra.mxu0 0.0
    %2388 = vmatprep.subr.mxu0 0.0
    %2389 = vmatpush1.msra.mxu0 0.0
    %2390 = vmatprep.subr.mxu0 0.0
    %2391 = vmatpush1.msra.mxu0 0.0
    %2392 = vmatprep.subr.mxu0 0.0
    %2393 = vmatpush1.msra.mxu0 0.0
    %2394 = vmatprep.subr.mxu0 0.0
    %2395 = vmatpush1.msra.mxu0 %v2363
    %2396 = vmatprep.subr.mxu0 0.0
    %2397 = vmatpush2.msra.mxu0 0.0
    %2398 = vmatprep.subr.mxu0 0.0
    %2399 = vmatpush2.msra.mxu0 0.0
    %2400 = vmatprep.subr.mxu0 0.0
    %2401 = vmatpush2.msra.mxu0 0.0
    %2402 = vmatprep.subr.mxu0 0.0
    %2403 = vmatpush2.msra.mxu0 0.0
    %2404 = vmatprep.subr.mxu0 0.0
    %2405 = vmatpush2.msra.mxu0 0.0
    %2406 = vmatprep.subr.mxu0 0.0
    %2407 = vmatpush2.msra.mxu0 0.0
    %2408 = vmatprep.subr.mxu0 0.0
    %2409 = vmatpush2.msra.mxu0 0.0
    %2410 = vmatprep.subr.mxu0 0.0
    %2411 = vmatpush2.msra.mxu0 0.0
    %2412 = vmatprep.subr.mxu0 0.0
    %2413 = vmatpush2.msra.mxu0 0.0
    %2414 = vmatprep.subr.mxu0 0.0
    %2415 = vmatpush2.msra.mxu0 0.0
    %2416 = vmatprep.subr.mxu0 0.0
    %2417 = vmatpush2.msra.mxu0 0.0
    %2418 = vmatprep.subr.mxu0 0.0
    %2419 = vmatpush2.msra.mxu0 0.0
    %2420 = vmatprep.subr.mxu0 0.0
    %2421 = vmatpush2.msra.mxu0 0.0
    %2422 = vmatprep.subr.mxu0 0.0
    %2423 = vmatpush2.msra.mxu0 0.0
    %2424 = vmatprep.subr.mxu0 0.0
    %2425 = vmatpush2.msra.mxu0 0.0
    %2426 = vmatprep.subr.mxu0 0.0
    %2427 = vmatpush2.msra.mxu0 0.0
    %2428 = vmatprep.mubr.f32.mxu0 0.0
    %2429 = vmatmul.mubr.f32.gmra.mxu0 %v244
    %v2430 = vpop.f32.mrf.mxu0
    %v2431 = vadd.f32 0.0, %v2430
    %v2432 = vpop.f32.mrf.mxu0
    %2433 = vdwg.mxu0
    %v2434 = vmul.f32 %v2291, %v2431
    %v2435 = vsub.f32 %v2434, 0.125
    %v2436 = vand.u32 2147483647, %v2435
    %v2437 = vsel %vm318, %v2436, -inf
    %2438 = vmax.xlane.f32.xlu0 %v2437
    %v2439 = vpop.xlane.xlu0 %2438
    %v2440 = vrot.slane %v2439, 4
    %v2441 = vmax.f32 %v2439, %v2440
    %v2442 = vrot.slane %v2441, 2
    %v2443 = vmax.f32 %v2441, %v2442
    %v2444 = vrot.slane %v2443, 1
    %v2445 = vmax.f32 %v2443, %v2444
    %s2446 = vtos %v2445
    %p2447 = scmp.le.f32.partialorder %s2446, 1e-06
    %p2448 = por %p2285, %p2447
    %v2449 = vrcp.pop %v2431
    %v2450 = vmul.f32 %v2449, 0.125
    %s2451 = scalar_select %p2448, 1, 0
    %v2452 = vstv %s2451
    %vm2453 = vcmp.eq.s32.totalorder %v2452, 1
    %v2454 = vsel %vm2453, %v2291, %v2450
    %2455 = vmatprep.subr.mxu0 0.0
    %2456 = vmatpush1.msra.mxu0 0.0
    %2457 = vmatprep.subr.mxu0 0.0
    %2458 = vmatpush1.msra.mxu0 0.0
    %2459 = vmatprep.subr.mxu0 0.0
    %2460 = vmatpush1.msra.mxu0 0.0
    %2461 = vmatprep.subr.mxu0 0.0
    %2462 = vmatpush1.msra.mxu0 0.0
    %2463 = vmatprep.subr.mxu0 0.0
    %2464 = vmatpush1.msra.mxu0 0.0
    %2465 = vmatprep.subr.mxu0 0.0
    %2466 = vmatpush1.msra.mxu0 0.0
    %2467 = vmatprep.subr.mxu0 0.0
    %2468 = vmatpush1.msra.mxu0 0.0
    %2469 = vmatprep.subr.mxu0 0.0
    %2470 = vmatpush1.msra.mxu0 0.0
    %2471 = vmatprep.subr.mxu0 0.0
    %2472 = vmatpush1.msra.mxu0 0.0
    %2473 = vmatprep.subr.mxu0 0.0
    %2474 = vmatpush1.msra.mxu0 0.0
    %2475 = vmatprep.subr.mxu0 0.0
    %2476 = vmatpush1.msra.mxu0 0.0
    %2477 = vmatprep.subr.mxu0 0.0
    %2478 = vmatpush1.msra.mxu0 0.0
    %2479 = vmatprep.subr.mxu0 0.0
    %2480 = vmatpush1.msra.mxu0 0.0
    %2481 = vmatprep.subr.mxu0 0.0
    %2482 = vmatpush1.msra.mxu0 0.0
    %2483 = vmatprep.subr.mxu0 0.0
    %2484 = vmatpush1.msra.mxu0 0.0
    %2485 = vmatprep.subr.mxu0 0.0
    %2486 = vmatpush1.msra.mxu0 %v2454
    %2487 = vmatprep.subr.mxu0 0.0
    %2488 = vmatpush2.msra.mxu0 0.0
    %2489 = vmatprep.subr.mxu0 0.0
    %2490 = vmatpush2.msra.mxu0 0.0
    %2491 = vmatprep.subr.mxu0 0.0
    %2492 = vmatpush2.msra.mxu0 0.0
    %2493 = vmatprep.subr.mxu0 0.0
    %2494 = vmatpush2.msra.mxu0 0.0
    %2495 = vmatprep.subr.mxu0 0.0
    %2496 = vmatpush2.msra.mxu0 0.0
    %2497 = vmatprep.subr.mxu0 0.0
    %2498 = vmatpush2.msra.mxu0 0.0
    %2499 = vmatprep.subr.mxu0 0.0
    %2500 = vmatpush2.msra.mxu0 0.0
    %2501 = vmatprep.subr.mxu0 0.0
    %2502 = vmatpush2.msra.mxu0 0.0
    %2503 = vmatprep.subr.mxu0 0.0
    %2504 = vmatpush2.msra.mxu0 0.0
    %2505 = vmatprep.subr.mxu0 0.0
    %2506 = vmatpush2.msra.mxu0 0.0
    %2507 = vmatprep.subr.mxu0 0.0
    %2508 = vmatpush2.msra.mxu0 0.0
    %2509 = vmatprep.subr.mxu0 0.0
    %2510 = vmatpush2.msra.mxu0 0.0
    %2511 = vmatprep.subr.mxu0 0.0
    %2512 = vmatpush2.msra.mxu0 0.0
    %2513 = vmatprep.subr.mxu0 0.0
    %2514 = vmatpush2.msra.mxu0 0.0
    %2515 = vmatprep.subr.mxu0 0.0
    %2516 = vmatpush2.msra.mxu0 0.0
    %2517 = vmatprep.subr.mxu0 0.0
    %2518 = vmatpush2.msra.mxu0 0.0
    %2519 = vmatprep.mubr.f32.mxu0 0.0
    %2520 = vmatmul.mubr.f32.gmra.mxu0 %v169
    %v2521 = vpop.f32.mrf.mxu0
    %v2522 = vadd.f32 0.0, %v2521
    %v2523 = vpop.f32.mrf.mxu0
    %2524 = vdwg.mxu0
    %v2525 = vrcp.pop %v2522
    %v2526 = vmul.f32 %v2525, 0.125
    %2527 = vmatprep.subr.mxu0 0.0
    %2528 = vmatpush1.msra.mxu0 0.0
    %2529 = vmatprep.subr.mxu0 0.0
    %2530 = vmatpush1.msra.mxu0 0.0
    %2531 = vmatprep.subr.mxu0 0.0
    %2532 = vmatpush1.msra.mxu0 0.0
    %2533 = vmatprep.subr.mxu0 0.0
    %2534 = vmatpush1.msra.mxu0 0.0
    %2535 = vmatprep.subr.mxu0 0.0
    %2536 = vmatpush1.msra.mxu0 0.0
    %2537 = vmatprep.subr.mxu0 0.0
    %2538 = vmatpush1.msra.mxu0 0.0
    %2539 = vmatprep.subr.mxu0 0.0
    %2540 = vmatpush1.msra.mxu0 0.0
    %2541 = vmatprep.subr.mxu0 0.0
    %2542 = vmatpush1.msra.mxu0 0.0
    %2543 = vmatprep.subr.mxu0 0.0
    %2544 = vmatpush1.msra.mxu0 0.0
    %2545 = vmatprep.subr.mxu0 0.0
    %2546 = vmatpush1.msra.mxu0 0.0
    %2547 = vmatprep.subr.mxu0 0.0
    %2548 = vmatpush1.msra.mxu0 0.0
    %2549 = vmatprep.subr.mxu0 0.0
    %2550 = vmatpush1.msra.mxu0 0.0
    %2551 = vmatprep.subr.mxu0 0.0
    %2552 = vmatpush1.msra.mxu0 0.0
    %2553 = vmatprep.subr.mxu0 0.0
    %2554 = vmatpush1.msra.mxu0 0.0
    %2555 = vmatprep.subr.mxu0 0.0
    %2556 = vmatpush1.msra.mxu0 0.0
    %2557 = vmatprep.subr.mxu0 0.0
    %2558 = vmatpush1.msra.mxu0 %v2526
    %2559 = vmatprep.subr.mxu0 0.0
    %2560 = vmatpush2.msra.mxu0 0.0
    %2561 = vmatprep.subr.mxu0 0.0
    %2562 = vmatpush2.msra.mxu0 0.0
    %2563 = vmatprep.subr.mxu0 0.0
    %2564 = vmatpush2.msra.mxu0 0.0
    %2565 = vmatprep.subr.mxu0 0.0
    %2566 = vmatpush2.msra.mxu0 0.0
    %2567 = vmatprep.subr.mxu0 0.0
    %2568 = vmatpush2.msra.mxu0 0.0
    %2569 = vmatprep.subr.mxu0 0.0
    %2570 = vmatpush2.msra.mxu0 0.0
    %2571 = vmatprep.subr.mxu0 0.0
    %2572 = vmatpush2.msra.mxu0 0.0
    %2573 = vmatprep.subr.mxu0 0.0
    %2574 = vmatpush2.msra.mxu0 0.0
    %2575 = vmatprep.subr.mxu0 0.0
    %2576 = vmatpush2.msra.mxu0 0.0
    %2577 = vmatprep.subr.mxu0 0.0
    %2578 = vmatpush2.msra.mxu0 0.0
    %2579 = vmatprep.subr.mxu0 0.0
    %2580 = vmatpush2.msra.mxu0 0.0
    %2581 = vmatprep.subr.mxu0 0.0
    %2582 = vmatpush2.msra.mxu0 0.0
    %2583 = vmatprep.subr.mxu0 0.0
    %2584 = vmatpush2.msra.mxu0 0.0
    %2585 = vmatprep.subr.mxu0 0.0
    %2586 = vmatpush2.msra.mxu0 0.0
    %2587 = vmatprep.subr.mxu0 0.0
    %2588 = vmatpush2.msra.mxu0 0.0
    %2589 = vmatprep.subr.mxu0 0.0
    %2590 = vmatpush2.msra.mxu0 0.0
    %2591 = vmatprep.mubr.f32.mxu0 0.0
    %2592 = vmatmul.mubr.f32.gmra.mxu0 %v244
    %v2593 = vpop.f32.mrf.mxu0
    %v2594 = vadd.f32 0.0, %v2593
    %v2595 = vpop.f32.mrf.mxu0
    %2596 = vdwg.mxu0
    %v2597 = vmul.f32 %v2454, %v2594
    %v2598 = vsub.f32 %v2597, 0.125
    %v2599 = vand.u32 2147483647, %v2598
    %v2600 = vsel %vm318, %v2599, -inf
    %2601 = vmax.xlane.f32.xlu0 %v2600
    %v2602 = vpop.xlane.xlu0 %2601
    %v2603 = vrot.slane %v2602, 4
    %v2604 = vmax.f32 %v2602, %v2603
    %v2605 = vrot.slane %v2604, 2
    %v2606 = vmax.f32 %v2604, %v2605
    %v2607 = vrot.slane %v2606, 1
    %v2608 = vmax.f32 %v2606, %v2607
    %s2609 = vtos %v2608
    %p2610 = scmp.le.f32.partialorder %s2609, 1e-06
    %p2611 = por %p2448, %p2610
    %v2612 = vrcp.pop %v2594
    %v2613 = vmul.f32 %v2612, 0.125
    %s2614 = scalar_select %p2611, 1, 0
    %v2615 = vstv %s2614
    %vm2616 = vcmp.eq.s32.totalorder %v2615, 1
    %v2617 = vsel %vm2616, %v2454, %v2613
    %2618 = vmatprep.subr.mxu0 0.0
    %2619 = vmatpush1.msra.mxu0 0.0
    %2620 = vmatprep.subr.mxu0 0.0
    %2621 = vmatpush1.msra.mxu0 0.0
    %2622 = vmatprep.subr.mxu0 0.0
    %2623 = vmatpush1.msra.mxu0 0.0
    %2624 = vmatprep.subr.mxu0 0.0
    %2625 = vmatpush1.msra.mxu0 0.0
    %2626 = vmatprep.subr.mxu0 0.0
    %2627 = vmatpush1.msra.mxu0 0.0
    %2628 = vmatprep.subr.mxu0 0.0
    %2629 = vmatpush1.msra.mxu0 0.0
    %2630 = vmatprep.subr.mxu0 0.0
    %2631 = vmatpush1.msra.mxu0 0.0
    %2632 = vmatprep.subr.mxu0 0.0
    %2633 = vmatpush1.msra.mxu0 0.0
    %2634 = vmatprep.subr.mxu0 0.0
    %2635 = vmatpush1.msra.mxu0 0.0
    %2636 = vmatprep.subr.mxu0 0.0
    %2637 = vmatpush1.msra.mxu0 0.0
    %2638 = vmatprep.subr.mxu0 0.0
    %2639 = vmatpush1.msra.mxu0 0.0
    %2640 = vmatprep.subr.mxu0 0.0
    %2641 = vmatpush1.msra.mxu0 0.0
    %2642 = vmatprep.subr.mxu0 0.0
    %2643 = vmatpush1.msra.mxu0 0.0
    %2644 = vmatprep.subr.mxu0 0.0
    %2645 = vmatpush1.msra.mxu0 0.0
    %2646 = vmatprep.subr.mxu0 0.0
    %2647 = vmatpush1.msra.mxu0 0.0
    %2648 = vmatprep.subr.mxu0 0.0
    %2649 = vmatpush1.msra.mxu0 %v2617
    %2650 = vmatprep.subr.mxu0 0.0
    %2651 = vmatpush2.msra.mxu0 0.0
    %2652 = vmatprep.subr.mxu0 0.0
    %2653 = vmatpush2.msra.mxu0 0.0
    %2654 = vmatprep.subr.mxu0 0.0
    %2655 = vmatpush2.msra.mxu0 0.0
    %2656 = vmatprep.subr.mxu0 0.0
    %2657 = vmatpush2.msra.mxu0 0.0
    %2658 = vmatprep.subr.mxu0 0.0
    %2659 = vmatpush2.msra.mxu0 0.0
    %2660 = vmatprep.subr.mxu0 0.0
    %2661 = vmatpush2.msra.mxu0 0.0
    %2662 = vmatprep.subr.mxu0 0.0
    %2663 = vmatpush2.msra.mxu0 0.0
    %2664 = vmatprep.subr.mxu0 0.0
    %2665 = vmatpush2.msra.mxu0 0.0
    %2666 = vmatprep.subr.mxu0 0.0
    %2667 = vmatpush2.msra.mxu0 0.0
    %2668 = vmatprep.subr.mxu0 0.0
    %2669 = vmatpush2.msra.mxu0 0.0
    %2670 = vmatprep.subr.mxu0 0.0
    %2671 = vmatpush2.msra.mxu0 0.0
    %2672 = vmatprep.subr.mxu0 0.0
    %2673 = vmatpush2.msra.mxu0 0.0
    %2674 = vmatprep.subr.mxu0 0.0
    %2675 = vmatpush2.msra.mxu0 0.0
    %2676 = vmatprep.subr.mxu0 0.0
    %2677 = vmatpush2.msra.mxu0 0.0
    %2678 = vmatprep.subr.mxu0 0.0
    %2679 = vmatpush2.msra.mxu0 0.0
    %2680 = vmatprep.subr.mxu0 0.0
    %2681 = vmatpush2.msra.mxu0 0.0
    %2682 = vmatprep.mubr.f32.mxu0 0.0
    %2683 = vmatmul.mubr.f32.gmra.mxu0 %v169
    %v2684 = vpop.f32.mrf.mxu0
    %v2685 = vadd.f32 0.0, %v2684
    %v2686 = vpop.f32.mrf.mxu0
    %2687 = vdwg.mxu0
    %v2688 = vrcp.pop %v2685
    %v2689 = vmul.f32 %v2688, 0.125
    %2690 = vmatprep.subr.mxu0 0.0
    %2691 = vmatpush1.msra.mxu0 0.0
    %2692 = vmatprep.subr.mxu0 0.0
    %2693 = vmatpush1.msra.mxu0 0.0
    %2694 = vmatprep.subr.mxu0 0.0
    %2695 = vmatpush1.msra.mxu0 0.0
    %2696 = vmatprep.subr.mxu0 0.0
    %2697 = vmatpush1.msra.mxu0 0.0
    %2698 = vmatprep.subr.mxu0 0.0
    %2699 = vmatpush1.msra.mxu0 0.0
    %2700 = vmatprep.subr.mxu0 0.0
    %2701 = vmatpush1.msra.mxu0 0.0
    %2702 = vmatprep.subr.mxu0 0.0
    %2703 = vmatpush1.msra.mxu0 0.0
    %2704 = vmatprep.subr.mxu0 0.0
    %2705 = vmatpush1.msra.mxu0 0.0
    %2706 = vmatprep.subr.mxu0 0.0
    %2707 = vmatpush1.msra.mxu0 0.0
    %2708 = vmatprep.subr.mxu0 0.0
    %2709 = vmatpush1.msra.mxu0 0.0
    %2710 = vmatprep.subr.mxu0 0.0
    %2711 = vmatpush1.msra.mxu0 0.0
    %2712 = vmatprep.subr.mxu0 0.0
    %2713 = vmatpush1.msra.mxu0 0.0
    %2714 = vmatprep.subr.mxu0 0.0
    %2715 = vmatpush1.msra.mxu0 0.0
    %2716 = vmatprep.subr.mxu0 0.0
    %2717 = vmatpush1.msra.mxu0 0.0
    %2718 = vmatprep.subr.mxu0 0.0
    %2719 = vmatpush1.msra.mxu0 0.0
    %2720 = vmatprep.subr.mxu0 0.0
    %2721 = vmatpush1.msra.mxu0 %v2689
    %2722 = vmatprep.subr.mxu0 0.0
    %2723 = vmatpush2.msra.mxu0 0.0
    %2724 = vmatprep.subr.mxu0 0.0
    %2725 = vmatpush2.msra.mxu0 0.0
    %2726 = vmatprep.subr.mxu0 0.0
    %2727 = vmatpush2.msra.mxu0 0.0
    %2728 = vmatprep.subr.mxu0 0.0
    %2729 = vmatpush2.msra.mxu0 0.0
    %2730 = vmatprep.subr.mxu0 0.0
    %2731 = vmatpush2.msra.mxu0 0.0
    %2732 = vmatprep.subr.mxu0 0.0
    %2733 = vmatpush2.msra.mxu0 0.0
    %2734 = vmatprep.subr.mxu0 0.0
    %2735 = vmatpush2.msra.mxu0 0.0
    %2736 = vmatprep.subr.mxu0 0.0
    %2737 = vmatpush2.msra.mxu0 0.0
    %2738 = vmatprep.subr.mxu0 0.0
    %2739 = vmatpush2.msra.mxu0 0.0
    %2740 = vmatprep.subr.mxu0 0.0
    %2741 = vmatpush2.msra.mxu0 0.0
    %2742 = vmatprep.subr.mxu0 0.0
    %2743 = vmatpush2.msra.mxu0 0.0
    %2744 = vmatprep.subr.mxu0 0.0
    %2745 = vmatpush2.msra.mxu0 0.0
    %2746 = vmatprep.subr.mxu0 0.0
    %2747 = vmatpush2.msra.mxu0 0.0
    %2748 = vmatprep.subr.mxu0 0.0
    %2749 = vmatpush2.msra.mxu0 0.0
    %2750 = vmatprep.subr.mxu0 0.0
    %2751 = vmatpush2.msra.mxu0 0.0
    %2752 = vmatprep.subr.mxu0 0.0
    %2753 = vmatpush2.msra.mxu0 0.0
    %2754 = vmatprep.mubr.f32.mxu0 0.0
    %2755 = vmatmul.mubr.f32.gmra.mxu0 %v244
    %v2756 = vpop.f32.mrf.mxu0
    %v2757 = vadd.f32 0.0, %v2756
    %v2758 = vpop.f32.mrf.mxu0
    %2759 = vdwg.mxu0
    %v2760 = vmul.f32 %v2617, %v2757
    %v2761 = vsub.f32 %v2760, 0.125
    %v2762 = vand.u32 2147483647, %v2761
    %v2763 = vsel %vm318, %v2762, -inf
    %2764 = vmax.xlane.f32.xlu0 %v2763
    %v2765 = vpop.xlane.xlu0 %2764
    %v2766 = vrot.slane %v2765, 4
    %v2767 = vmax.f32 %v2765, %v2766
    %v2768 = vrot.slane %v2767, 2
    %v2769 = vmax.f32 %v2767, %v2768
    %v2770 = vrot.slane %v2769, 1
    %v2771 = vmax.f32 %v2769, %v2770
    %s2772 = vtos %v2771
    %p2773 = scmp.le.f32.partialorder %s2772, 1e-06
    %p2774 = por %p2611, %p2773
    %v2775 = vrcp.pop %v2757
    %v2776 = vmul.f32 %v2775, 0.125
    %s2777 = scalar_select %p2774, 1, 0
    %v2778 = vstv %s2777
    %vm2779 = vcmp.eq.s32.totalorder %v2778, 1
    %v2780 = vsel %vm2779, %v2617, %v2776
    %2781 = vmatprep.subr.mxu0 0.0
    %2782 = vmatpush1.msra.mxu0 0.0
    %2783 = vmatprep.subr.mxu0 0.0
    %2784 = vmatpush1.msra.mxu0 0.0
    %2785 = vmatprep.subr.mxu0 0.0
    %2786 = vmatpush1.msra.mxu0 0.0
    %2787 = vmatprep.subr.mxu0 0.0
    %2788 = vmatpush1.msra.mxu0 0.0
    %2789 = vmatprep.subr.mxu0 0.0
    %2790 = vmatpush1.msra.mxu0 0.0
    %2791 = vmatprep.subr.mxu0 0.0
    %2792 = vmatpush1.msra.mxu0 0.0
    %2793 = vmatprep.subr.mxu0 0.0
    %2794 = vmatpush1.msra.mxu0 0.0
    %2795 = vmatprep.subr.mxu0 0.0
    %2796 = vmatpush1.msra.mxu0 0.0
    %2797 = vmatprep.subr.mxu0 0.0
    %2798 = vmatpush1.msra.mxu0 0.0
    %2799 = vmatprep.subr.mxu0 0.0
    %2800 = vmatpush1.msra.mxu0 0.0
    %2801 = vmatprep.subr.mxu0 0.0
    %2802 = vmatpush1.msra.mxu0 0.0
    %2803 = vmatprep.subr.mxu0 0.0
    %2804 = vmatpush1.msra.mxu0 0.0
    %2805 = vmatprep.subr.mxu0 0.0
    %2806 = vmatpush1.msra.mxu0 0.0
    %2807 = vmatprep.subr.mxu0 0.0
    %2808 = vmatpush1.msra.mxu0 0.0
    %2809 = vmatprep.subr.mxu0 0.0
    %2810 = vmatpush1.msra.mxu0 0.0
    %2811 = vmatprep.subr.mxu0 0.0
    %2812 = vmatpush1.msra.mxu0 %v2780
    %2813 = vmatprep.subr.mxu0 0.0
    %2814 = vmatpush2.msra.mxu0 0.0
    %2815 = vmatprep.subr.mxu0 0.0
    %2816 = vmatpush2.msra.mxu0 0.0
    %2817 = vmatprep.subr.mxu0 0.0
    %2818 = vmatpush2.msra.mxu0 0.0
    %2819 = vmatprep.subr.mxu0 0.0
    %2820 = vmatpush2.msra.mxu0 0.0
    %2821 = vmatprep.subr.mxu0 0.0
    %2822 = vmatpush2.msra.mxu0 0.0
    %2823 = vmatprep.subr.mxu0 0.0
    %2824 = vmatpush2.msra.mxu0 0.0
    %2825 = vmatprep.subr.mxu0 0.0
    %2826 = vmatpush2.msra.mxu0 0.0
    %2827 = vmatprep.subr.mxu0 0.0
    %2828 = vmatpush2.msra.mxu0 0.0
    %2829 = vmatprep.subr.mxu0 0.0
    %2830 = vmatpush2.msra.mxu0 0.0
    %2831 = vmatprep.subr.mxu0 0.0
    %2832 = vmatpush2.msra.mxu0 0.0
    %2833 = vmatprep.subr.mxu0 0.0
    %2834 = vmatpush2.msra.mxu0 0.0
    %2835 = vmatprep.subr.mxu0 0.0
    %2836 = vmatpush2.msra.mxu0 0.0
    %2837 = vmatprep.subr.mxu0 0.0
    %2838 = vmatpush2.msra.mxu0 0.0
    %2839 = vmatprep.subr.mxu0 0.0
    %2840 = vmatpush2.msra.mxu0 0.0
    %2841 = vmatprep.subr.mxu0 0.0
    %2842 = vmatpush2.msra.mxu0 0.0
    %2843 = vmatprep.subr.mxu0 0.0
    %2844 = vmatpush2.msra.mxu0 0.0
    %2845 = vmatprep.mubr.f32.mxu0 0.0
    %2846 = vmatmul.mubr.f32.gmra.mxu0 %v169
    %v2847 = vpop.f32.mrf.mxu0
    %v2848 = vadd.f32 0.0, %v2847
    %v2849 = vpop.f32.mrf.mxu0
    %2850 = vdwg.mxu0
    %v2851 = vrcp.pop %v2848
    %v2852 = vmul.f32 %v2851, 0.125
    %2853 = vmatprep.subr.mxu0 0.0
    %2854 = vmatpush1.msra.mxu0 0.0
    %2855 = vmatprep.subr.mxu0 0.0
    %2856 = vmatpush1.msra.mxu0 0.0
    %2857 = vmatprep.subr.mxu0 0.0
    %2858 = vmatpush1.msra.mxu0 0.0
    %2859 = vmatprep.subr.mxu0 0.0
    %2860 = vmatpush1.msra.mxu0 0.0
    %2861 = vmatprep.subr.mxu0 0.0
    %2862 = vmatpush1.msra.mxu0 0.0
    %2863 = vmatprep.subr.mxu0 0.0
    %2864 = vmatpush1.msra.mxu0 0.0
    %2865 = vmatprep.subr.mxu0 0.0
    %2866 = vmatpush1.msra.mxu0 0.0
    %2867 = vmatprep.subr.mxu0 0.0
    %2868 = vmatpush1.msra.mxu0 0.0
    %2869 = vmatprep.subr.mxu0 0.0
    %2870 = vmatpush1.msra.mxu0 0.0
    %2871 = vmatprep.subr.mxu0 0.0
    %2872 = vmatpush1.msra.mxu0 0.0
    %2873 = vmatprep.subr.mxu0 0.0
    %2874 = vmatpush1.msra.mxu0 0.0
    %2875 = vmatprep.subr.mxu0 0.0
    %2876 = vmatpush1.msra.mxu0 0.0
    %2877 = vmatprep.subr.mxu0 0.0
    %2878 = vmatpush1.msra.mxu0 0.0
    %2879 = vmatprep.subr.mxu0 0.0
    %2880 = vmatpush1.msra.mxu0 0.0
    %2881 = vmatprep.subr.mxu0 0.0
    %2882 = vmatpush1.msra.mxu0 0.0
    %2883 = vmatprep.subr.mxu0 0.0
    %2884 = vmatpush1.msra.mxu0 %v2852
    %2885 = vmatprep.subr.mxu0 0.0
    %2886 = vmatpush2.msra.mxu0 0.0
    %2887 = vmatprep.subr.mxu0 0.0
    %2888 = vmatpush2.msra.mxu0 0.0
    %2889 = vmatprep.subr.mxu0 0.0
    %2890 = vmatpush2.msra.mxu0 0.0
    %2891 = vmatprep.subr.mxu0 0.0
    %2892 = vmatpush2.msra.mxu0 0.0
    %2893 = vmatprep.subr.mxu0 0.0
    %2894 = vmatpush2.msra.mxu0 0.0
    %2895 = vmatprep.subr.mxu0 0.0
    %2896 = vmatpush2.msra.mxu0 0.0
    %2897 = vmatprep.subr.mxu0 0.0
    %2898 = vmatpush2.msra.mxu0 0.0
    %2899 = vmatprep.subr.mxu0 0.0
    %2900 = vmatpush2.msra.mxu0 0.0
    %2901 = vmatprep.subr.mxu0 0.0
    %2902 = vmatpush2.msra.mxu0 0.0
    %2903 = vmatprep.subr.mxu0 0.0
    %2904 = vmatpush2.msra.mxu0 0.0
    %2905 = vmatprep.subr.mxu0 0.0
    %2906 = vmatpush2.msra.mxu0 0.0
    %2907 = vmatprep.subr.mxu0 0.0
    %2908 = vmatpush2.msra.mxu0 0.0
    %2909 = vmatprep.subr.mxu0 0.0
    %2910 = vmatpush2.msra.mxu0 0.0
    %2911 = vmatprep.subr.mxu0 0.0
    %2912 = vmatpush2.msra.mxu0 0.0
    %2913 = vmatprep.subr.mxu0 0.0
    %2914 = vmatpush2.msra.mxu0 0.0
    %2915 = vmatprep.subr.mxu0 0.0
    %2916 = vmatpush2.msra.mxu0 0.0
    %2917 = vmatprep.mubr.f32.mxu0 0.0
    %2918 = vmatmul.mubr.f32.gmra.mxu0 %v244
    %v2919 = vpop.f32.mrf.mxu0
    %v2920 = vadd.f32 0.0, %v2919
    %v2921 = vpop.f32.mrf.mxu0
    %2922 = vdwg.mxu0
    %v2923 = vmul.f32 %v2780, %v2920
    %v2924 = vsub.f32 %v2923, 0.125
    %v2925 = vand.u32 2147483647, %v2924
    %v2926 = vsel %vm318, %v2925, -inf
    %2927 = vmax.xlane.f32.xlu0 %v2926
    %v2928 = vpop.xlane.xlu0 %2927
    %v2929 = vrot.slane %v2928, 4
    %v2930 = vmax.f32 %v2928, %v2929
    %v2931 = vrot.slane %v2930, 2
    %v2932 = vmax.f32 %v2930, %v2931
    %v2933 = vrot.slane %v2932, 1
    %v2934 = vmax.f32 %v2932, %v2933
    %s2935 = vtos %v2934
    %p2936 = scmp.le.f32.partialorder %s2935, 1e-06
    %p2937 = por %p2774, %p2936
    %v2938 = vrcp.pop %v2920
    %v2939 = vmul.f32 %v2938, 0.125
    %s2940 = scalar_select %p2937, 1, 0
    %v2941 = vstv %s2940
    %vm2942 = vcmp.eq.s32.totalorder %v2941, 1
    %v2943 = vsel %vm2942, %v2780, %v2939
    %2944 = vmatprep.subr.mxu0 0.0
    %2945 = vmatpush1.msra.mxu0 0.0
    %2946 = vmatprep.subr.mxu0 0.0
    %2947 = vmatpush1.msra.mxu0 0.0
    %2948 = vmatprep.subr.mxu0 0.0
    %2949 = vmatpush1.msra.mxu0 0.0
    %2950 = vmatprep.subr.mxu0 0.0
    %2951 = vmatpush1.msra.mxu0 0.0
    %2952 = vmatprep.subr.mxu0 0.0
    %2953 = vmatpush1.msra.mxu0 0.0
    %2954 = vmatprep.subr.mxu0 0.0
    %2955 = vmatpush1.msra.mxu0 0.0
    %2956 = vmatprep.subr.mxu0 0.0
    %2957 = vmatpush1.msra.mxu0 0.0
    %2958 = vmatprep.subr.mxu0 0.0
    %2959 = vmatpush1.msra.mxu0 0.0
    %2960 = vmatprep.subr.mxu0 0.0
    %2961 = vmatpush1.msra.mxu0 0.0
    %2962 = vmatprep.subr.mxu0 0.0
    %2963 = vmatpush1.msra.mxu0 0.0
    %2964 = vmatprep.subr.mxu0 0.0
    %2965 = vmatpush1.msra.mxu0 0.0
    %2966 = vmatprep.subr.mxu0 0.0
    %2967 = vmatpush1.msra.mxu0 0.0
    %2968 = vmatprep.subr.mxu0 0.0
    %2969 = vmatpush1.msra.mxu0 0.0
    %2970 = vmatprep.subr.mxu0 0.0
    %2971 = vmatpush1.msra.mxu0 0.0
    %2972 = vmatprep.subr.mxu0 0.0
    %2973 = vmatpush1.msra.mxu0 0.0
    %2974 = vmatprep.subr.mxu0 0.0
    %2975 = vmatpush1.msra.mxu0 %v2943
    %2976 = vmatprep.subr.mxu0 0.0
    %2977 = vmatpush2.msra.mxu0 0.0
    %2978 = vmatprep.subr.mxu0 0.0
    %2979 = vmatpush2.msra.mxu0 0.0
    %2980 = vmatprep.subr.mxu0 0.0
    %2981 = vmatpush2.msra.mxu0 0.0
    %2982 = vmatprep.subr.mxu0 0.0
    %2983 = vmatpush2.msra.mxu0 0.0
    %2984 = vmatprep.subr.mxu0 0.0
    %2985 = vmatpush2.msra.mxu0 0.0
    %2986 = vmatprep.subr.mxu0 0.0
    %2987 = vmatpush2.msra.mxu0 0.0
    %2988 = vmatprep.subr.mxu0 0.0
    %2989 = vmatpush2.msra.mxu0 0.0
    %2990 = vmatprep.subr.mxu0 0.0
    %2991 = vmatpush2.msra.mxu0 0.0
    %2992 = vmatprep.subr.mxu0 0.0
    %2993 = vmatpush2.msra.mxu0 0.0
    %2994 = vmatprep.subr.mxu0 0.0
    %2995 = vmatpush2.msra.mxu0 0.0
    %2996 = vmatprep.subr.mxu0 0.0
    %2997 = vmatpush2.msra.mxu0 0.0
    %2998 = vmatprep.subr.mxu0 0.0
    %2999 = vmatpush2.msra.mxu0 0.0
    %3000 = vmatprep.subr.mxu0 0.0
    %3001 = vmatpush2.msra.mxu0 0.0
    %3002 = vmatprep.subr.mxu0 0.0
    %3003 = vmatpush2.msra.mxu0 0.0
    %3004 = vmatprep.subr.mxu0 0.0
    %3005 = vmatpush2.msra.mxu0 0.0
    %3006 = vmatprep.subr.mxu0 0.0
    %3007 = vmatpush2.msra.mxu0 0.0
    %3008 = vmatprep.mubr.f32.mxu0 0.0
    %3009 = vmatmul.mubr.f32.gmra.mxu0 %v169
    %v3010 = vpop.f32.mrf.mxu0
    %v3011 = vadd.f32 0.0, %v3010
    %v3012 = vpop.f32.mrf.mxu0
    %3013 = vdwg.mxu0
    %v3014 = vrcp.pop %v3011
    %v3015 = vmul.f32 %v3014, 0.125
    %3016 = vmatprep.subr.mxu0 0.0
    %3017 = vmatpush1.msra.mxu0 0.0
    %3018 = vmatprep.subr.mxu0 0.0
    %3019 = vmatpush1.msra.mxu0 0.0
    %3020 = vmatprep.subr.mxu0 0.0
    %3021 = vmatpush1.msra.mxu0 0.0
    %3022 = vmatprep.subr.mxu0 0.0
    %3023 = vmatpush1.msra.mxu0 0.0
    %3024 = vmatprep.subr.mxu0 0.0
    %3025 = vmatpush1.msra.mxu0 0.0
    %3026 = vmatprep.subr.mxu0 0.0
    %3027 = vmatpush1.msra.mxu0 0.0
    %3028 = vmatprep.subr.mxu0 0.0
    %3029 = vmatpush1.msra.mxu0 0.0
    %3030 = vmatprep.subr.mxu0 0.0
    %3031 = vmatpush1.msra.mxu0 0.0
    %3032 = vmatprep.subr.mxu0 0.0
    %3033 = vmatpush1.msra.mxu0 0.0
    %3034 = vmatprep.subr.mxu0 0.0
    %3035 = vmatpush1.msra.mxu0 0.0
    %3036 = vmatprep.subr.mxu0 0.0
    %3037 = vmatpush1.msra.mxu0 0.0
    %3038 = vmatprep.subr.mxu0 0.0
    %3039 = vmatpush1.msra.mxu0 0.0
    %3040 = vmatprep.subr.mxu0 0.0
    %3041 = vmatpush1.msra.mxu0 0.0
    %3042 = vmatprep.subr.mxu0 0.0
    %3043 = vmatpush1.msra.mxu0 0.0
    %3044 = vmatprep.subr.mxu0 0.0
    %3045 = vmatpush1.msra.mxu0 0.0
    %3046 = vmatprep.subr.mxu0 0.0
    %3047 = vmatpush1.msra.mxu0 %v3015
    %3048 = vmatprep.subr.mxu0 0.0
    %3049 = vmatpush2.msra.mxu0 0.0
    %3050 = vmatprep.subr.mxu0 0.0
    %3051 = vmatpush2.msra.mxu0 0.0
    %3052 = vmatprep.subr.mxu0 0.0
    %3053 = vmatpush2.msra.mxu0 0.0
    %3054 = vmatprep.subr.mxu0 0.0
    %3055 = vmatpush2.msra.mxu0 0.0
    %3056 = vmatprep.subr.mxu0 0.0
    %3057 = vmatpush2.msra.mxu0 0.0
    %3058 = vmatprep.subr.mxu0 0.0
    %3059 = vmatpush2.msra.mxu0 0.0
    %3060 = vmatprep.subr.mxu0 0.0
    %3061 = vmatpush2.msra.mxu0 0.0
    %3062 = vmatprep.subr.mxu0 0.0
    %3063 = vmatpush2.msra.mxu0 0.0
    %3064 = vmatprep.subr.mxu0 0.0
    %3065 = vmatpush2.msra.mxu0 0.0
    %3066 = vmatprep.subr.mxu0 0.0
    %3067 = vmatpush2.msra.mxu0 0.0
    %3068 = vmatprep.subr.mxu0 0.0
    %3069 = vmatpush2.msra.mxu0 0.0
    %3070 = vmatprep.subr.mxu0 0.0
    %3071 = vmatpush2.msra.mxu0 0.0
    %3072 = vmatprep.subr.mxu0 0.0
    %3073 = vmatpush2.msra.mxu0 0.0
    %3074 = vmatprep.subr.mxu0 0.0
    %3075 = vmatpush2.msra.mxu0 0.0
    %3076 = vmatprep.subr.mxu0 0.0
    %3077 = vmatpush2.msra.mxu0 0.0
    %3078 = vmatprep.subr.mxu0 0.0
    %3079 = vmatpush2.msra.mxu0 0.0
    %3080 = vmatprep.mubr.f32.mxu0 0.0
    %3081 = vmatmul.mubr.f32.gmra.mxu0 %v244
    %v3082 = vpop.f32.mrf.mxu0
    %v3083 = vadd.f32 0.0, %v3082
    %v3084 = vpop.f32.mrf.mxu0
    %3085 = vdwg.mxu0
    %v3086 = vmul.f32 %v2943, %v3083
    %v3087 = vsub.f32 %v3086, 0.125
    %v3088 = vand.u32 2147483647, %v3087
    %v3089 = vsel %vm318, %v3088, -inf
    %3090 = vmax.xlane.f32.xlu0 %v3089
    %v3091 = vpop.xlane.xlu0 %3090
    %v3092 = vrot.slane %v3091, 4
    %v3093 = vmax.f32 %v3091, %v3092
    %v3094 = vrot.slane %v3093, 2
    %v3095 = vmax.f32 %v3093, %v3094
    %v3096 = vrot.slane %v3095, 1
    %v3097 = vmax.f32 %v3095, %v3096
    %s3098 = vtos %v3097
    %p3099 = scmp.le.f32.partialorder %s3098, 1e-06
    %p3100 = por %p2937, %p3099
    %v3101 = vrcp.pop %v3083
    %v3102 = vmul.f32 %v3101, 0.125
    %s3103 = scalar_select %p3100, 1, 0
    %v3104 = vstv %s3103
    %vm3105 = vcmp.eq.s32.totalorder %v3104, 1
    %v3106 = vsel %vm3105, %v2943, %v3102
    %3107 = vmatprep.subr.mxu0 0.0
    %3108 = vmatpush1.msra.mxu0 0.0
    %3109 = vmatprep.subr.mxu0 0.0
    %3110 = vmatpush1.msra.mxu0 0.0
    %3111 = vmatprep.subr.mxu0 0.0
    %3112 = vmatpush1.msra.mxu0 0.0
    %3113 = vmatprep.subr.mxu0 0.0
    %3114 = vmatpush1.msra.mxu0 0.0
    %3115 = vmatprep.subr.mxu0 0.0
    %3116 = vmatpush1.msra.mxu0 0.0
    %3117 = vmatprep.subr.mxu0 0.0
    %3118 = vmatpush1.msra.mxu0 0.0
    %3119 = vmatprep.subr.mxu0 0.0
    %3120 = vmatpush1.msra.mxu0 0.0
    %3121 = vmatprep.subr.mxu0 0.0
    %3122 = vmatpush1.msra.mxu0 0.0
    %3123 = vmatprep.subr.mxu0 0.0
    %3124 = vmatpush1.msra.mxu0 0.0
    %3125 = vmatprep.subr.mxu0 0.0
    %3126 = vmatpush1.msra.mxu0 0.0
    %3127 = vmatprep.subr.mxu0 0.0
    %3128 = vmatpush1.msra.mxu0 0.0
    %3129 = vmatprep.subr.mxu0 0.0
    %3130 = vmatpush1.msra.mxu0 0.0
    %3131 = vmatprep.subr.mxu0 0.0
    %3132 = vmatpush1.msra.mxu0 0.0
    %3133 = vmatprep.subr.mxu0 0.0
    %3134 = vmatpush1.msra.mxu0 0.0
    %3135 = vmatprep.subr.mxu0 0.0
    %3136 = vmatpush1.msra.mxu0 0.0
    %3137 = vmatprep.subr.mxu0 0.0
    %3138 = vmatpush1.msra.mxu0 %v3106
    %3139 = vmatprep.subr.mxu0 0.0
    %3140 = vmatpush2.msra.mxu0 0.0
    %3141 = vmatprep.subr.mxu0 0.0
    %3142 = vmatpush2.msra.mxu0 0.0
    %3143 = vmatprep.subr.mxu0 0.0
    %3144 = vmatpush2.msra.mxu0 0.0
    %3145 = vmatprep.subr.mxu0 0.0
    %3146 = vmatpush2.msra.mxu0 0.0
    %3147 = vmatprep.subr.mxu0 0.0
    %3148 = vmatpush2.msra.mxu0 0.0
    %3149 = vmatprep.subr.mxu0 0.0
    %3150 = vmatpush2.msra.mxu0 0.0
    %3151 = vmatprep.subr.mxu0 0.0
    %3152 = vmatpush2.msra.mxu0 0.0
    %3153 = vmatprep.subr.mxu0 0.0
    %3154 = vmatpush2.msra.mxu0 0.0
    %3155 = vmatprep.subr.mxu0 0.0
    %3156 = vmatpush2.msra.mxu0 0.0
    %3157 = vmatprep.subr.mxu0 0.0
    %3158 = vmatpush2.msra.mxu0 0.0
    %3159 = vmatprep.subr.mxu0 0.0
    %3160 = vmatpush2.msra.mxu0 0.0
    %3161 = vmatprep.subr.mxu0 0.0
    %3162 = vmatpush2.msra.mxu0 0.0
    %3163 = vmatprep.subr.mxu0 0.0
    %3164 = vmatpush2.msra.mxu0 0.0
    %3165 = vmatprep.subr.mxu0 0.0
    %3166 = vmatpush2.msra.mxu0 0.0
    %3167 = vmatprep.subr.mxu0 0.0
    %3168 = vmatpush2.msra.mxu0 0.0
    %3169 = vmatprep.subr.mxu0 0.0
    %3170 = vmatpush2.msra.mxu0 0.0
    %3171 = vmatprep.mubr.f32.mxu0 0.0
    %3172 = vmatmul.mubr.f32.gmra.mxu0 %v169
    %v3173 = vpop.f32.mrf.mxu0
    %v3174 = vadd.f32 0.0, %v3173
    %v3175 = vpop.f32.mrf.mxu0
    %3176 = vdwg.mxu0
    %v3177 = vrcp.pop %v3174
    %v3178 = vmul.f32 %v3177, 0.125
    %3179 = vmatprep.subr.mxu0 0.0
    %3180 = vmatpush1.msra.mxu0 0.0
    %3181 = vmatprep.subr.mxu0 0.0
    %3182 = vmatpush1.msra.mxu0 0.0
    %3183 = vmatprep.subr.mxu0 0.0
    %3184 = vmatpush1.msra.mxu0 0.0
    %3185 = vmatprep.subr.mxu0 0.0
    %3186 = vmatpush1.msra.mxu0 0.0
    %3187 = vmatprep.subr.mxu0 0.0
    %3188 = vmatpush1.msra.mxu0 0.0
    %3189 = vmatprep.subr.mxu0 0.0
    %3190 = vmatpush1.msra.mxu0 0.0
    %3191 = vmatprep.subr.mxu0 0.0
    %3192 = vmatpush1.msra.mxu0 0.0
    %3193 = vmatprep.subr.mxu0 0.0
    %3194 = vmatpush1.msra.mxu0 0.0
    %3195 = vmatprep.subr.mxu0 0.0
    %3196 = vmatpush1.msra.mxu0 0.0
    %3197 = vmatprep.subr.mxu0 0.0
    %3198 = vmatpush1.msra.mxu0 0.0
    %3199 = vmatprep.subr.mxu0 0.0
    %3200 = vmatpush1.msra.mxu0 0.0
    %3201 = vmatprep.subr.mxu0 0.0
    %3202 = vmatpush1.msra.mxu0 0.0
    %3203 = vmatprep.subr.mxu0 0.0
    %3204 = vmatpush1.msra.mxu0 0.0
    %3205 = vmatprep.subr.mxu0 0.0
    %3206 = vmatpush1.msra.mxu0 0.0
    %3207 = vmatprep.subr.mxu0 0.0
    %3208 = vmatpush1.msra.mxu0 0.0
    %3209 = vmatprep.subr.mxu0 0.0
    %3210 = vmatpush1.msra.mxu0 %v3178
    %3211 = vmatprep.subr.mxu0 0.0
    %3212 = vmatpush2.msra.mxu0 0.0
    %3213 = vmatprep.subr.mxu0 0.0
    %3214 = vmatpush2.msra.mxu0 0.0
    %3215 = vmatprep.subr.mxu0 0.0
    %3216 = vmatpush2.msra.mxu0 0.0
    %3217 = vmatprep.subr.mxu0 0.0
    %3218 = vmatpush2.msra.mxu0 0.0
    %3219 = vmatprep.subr.mxu0 0.0
    %3220 = vmatpush2.msra.mxu0 0.0
    %3221 = vmatprep.subr.mxu0 0.0
    %3222 = vmatpush2.msra.mxu0 0.0
    %3223 = vmatprep.subr.mxu0 0.0
    %3224 = vmatpush2.msra.mxu0 0.0
    %3225 = vmatprep.subr.mxu0 0.0
    %3226 = vmatpush2.msra.mxu0 0.0
    %3227 = vmatprep.subr.mxu0 0.0
    %3228 = vmatpush2.msra.mxu0 0.0
    %3229 = vmatprep.subr.mxu0 0.0
    %3230 = vmatpush2.msra.mxu0 0.0
    %3231 = vmatprep.subr.mxu0 0.0
    %3232 = vmatpush2.msra.mxu0 0.0
    %3233 = vmatprep.subr.mxu0 0.0
    %3234 = vmatpush2.msra.mxu0 0.0
    %3235 = vmatprep.subr.mxu0 0.0
    %3236 = vmatpush2.msra.mxu0 0.0
    %3237 = vmatprep.subr.mxu0 0.0
    %3238 = vmatpush2.msra.mxu0 0.0
    %3239 = vmatprep.subr.mxu0 0.0
    %3240 = vmatpush2.msra.mxu0 0.0
    %3241 = vmatprep.subr.mxu0 0.0
    %3242 = vmatpush2.msra.mxu0 0.0
    %3243 = vmatprep.mubr.f32.mxu0 0.0
    %3244 = vmatmul.mubr.f32.gmra.mxu0 %v244
    %v3245 = vpop.f32.mrf.mxu0
    %v3246 = vadd.f32 0.0, %v3245
    %v3247 = vpop.f32.mrf.mxu0
    %3248 = vdwg.mxu0
    %v3249 = vmul.f32 %v3106, %v3246
    %v3250 = vsub.f32 %v3249, 0.125
    %v3251 = vand.u32 2147483647, %v3250
    %v3252 = vsel %vm318, %v3251, -inf
    %3253 = vmax.xlane.f32.xlu0 %v3252
    %v3254 = vpop.xlane.xlu0 %3253
    %v3255 = vrot.slane %v3254, 4
    %v3256 = vmax.f32 %v3254, %v3255
    %v3257 = vrot.slane %v3256, 2
    %v3258 = vmax.f32 %v3256, %v3257
    %v3259 = vrot.slane %v3258, 1
    %v3260 = vmax.f32 %v3258, %v3259
    %s3261 = vtos %v3260
    %p3262 = scmp.le.f32.partialorder %s3261, 1e-06
    %p3263 = por %p3100, %p3262
    %v3264 = vrcp.pop %v3246
    %v3265 = vmul.f32 %v3264, 0.125
    %s3266 = scalar_select %p3263, 1, 0
    %v3267 = vstv %s3266
    %vm3268 = vcmp.eq.s32.totalorder %v3267, 1
    %v3269 = vsel %vm3268, %v3106, %v3265
    %3270 = vmatprep.subr.mxu0 0.0
    %3271 = vmatpush1.msra.mxu0 0.0
    %3272 = vmatprep.subr.mxu0 0.0
    %3273 = vmatpush1.msra.mxu0 0.0
    %3274 = vmatprep.subr.mxu0 0.0
    %3275 = vmatpush1.msra.mxu0 0.0
    %3276 = vmatprep.subr.mxu0 0.0
    %3277 = vmatpush1.msra.mxu0 0.0
    %3278 = vmatprep.subr.mxu0 0.0
    %3279 = vmatpush1.msra.mxu0 0.0
    %3280 = vmatprep.subr.mxu0 0.0
    %3281 = vmatpush1.msra.mxu0 0.0
    %3282 = vmatprep.subr.mxu0 0.0
    %3283 = vmatpush1.msra.mxu0 0.0
    %3284 = vmatprep.subr.mxu0 0.0
    %3285 = vmatpush1.msra.mxu0 0.0
    %3286 = vmatprep.subr.mxu0 0.0
    %3287 = vmatpush1.msra.mxu0 0.0
    %3288 = vmatprep.subr.mxu0 0.0
    %3289 = vmatpush1.msra.mxu0 0.0
    %3290 = vmatprep.subr.mxu0 0.0
    %3291 = vmatpush1.msra.mxu0 0.0
    %3292 = vmatprep.subr.mxu0 0.0
    %3293 = vmatpush1.msra.mxu0 0.0
    %3294 = vmatprep.subr.mxu0 0.0
    %3295 = vmatpush1.msra.mxu0 0.0
    %3296 = vmatprep.subr.mxu0 0.0
    %3297 = vmatpush1.msra.mxu0 0.0
    %3298 = vmatprep.subr.mxu0 0.0
    %3299 = vmatpush1.msra.mxu0 0.0
    %3300 = vmatprep.subr.mxu0 0.0
    %3301 = vmatpush1.msra.mxu0 %v3269
    %3302 = vmatprep.subr.mxu0 0.0
    %3303 = vmatpush2.msra.mxu0 0.0
    %3304 = vmatprep.subr.mxu0 0.0
    %3305 = vmatpush2.msra.mxu0 0.0
    %3306 = vmatprep.subr.mxu0 0.0
    %3307 = vmatpush2.msra.mxu0 0.0
    %3308 = vmatprep.subr.mxu0 0.0
    %3309 = vmatpush2.msra.mxu0 0.0
    %3310 = vmatprep.subr.mxu0 0.0
    %3311 = vmatpush2.msra.mxu0 0.0
    %3312 = vmatprep.subr.mxu0 0.0
    %3313 = vmatpush2.msra.mxu0 0.0
    %3314 = vmatprep.subr.mxu0 0.0
    %3315 = vmatpush2.msra.mxu0 0.0
    %3316 = vmatprep.subr.mxu0 0.0
    %3317 = vmatpush2.msra.mxu0 0.0
    %3318 = vmatprep.subr.mxu0 0.0
    %3319 = vmatpush2.msra.mxu0 0.0
    %3320 = vmatprep.subr.mxu0 0.0
    %3321 = vmatpush2.msra.mxu0 0.0
    %3322 = vmatprep.subr.mxu0 0.0
    %3323 = vmatpush2.msra.mxu0 0.0
    %3324 = vmatprep.subr.mxu0 0.0
    %3325 = vmatpush2.msra.mxu0 0.0
    %3326 = vmatprep.subr.mxu0 0.0
    %3327 = vmatpush2.msra.mxu0 0.0
    %3328 = vmatprep.subr.mxu0 0.0
    %3329 = vmatpush2.msra.mxu0 0.0
    %3330 = vmatprep.subr.mxu0 0.0
    %3331 = vmatpush2.msra.mxu0 0.0
    %3332 = vmatprep.subr.mxu0 0.0
    %3333 = vmatpush2.msra.mxu0 0.0
    %3334 = vmatprep.mubr.f32.mxu0 0.0
    %3335 = vmatmul.mubr.f32.gmra.mxu0 %v169
    %v3336 = vpop.f32.mrf.mxu0
    %v3337 = vadd.f32 0.0, %v3336
    %v3338 = vpop.f32.mrf.mxu0
    %3339 = vdwg.mxu0
    %v3340 = vrcp.pop %v3337
    %v3341 = vmul.f32 %v3340, 0.125
    %3342 = vmatprep.subr.mxu0 0.0
    %3343 = vmatpush1.msra.mxu0 0.0
    %3344 = vmatprep.subr.mxu0 0.0
    %3345 = vmatpush1.msra.mxu0 0.0
    %3346 = vmatprep.subr.mxu0 0.0
    %3347 = vmatpush1.msra.mxu0 0.0
    %3348 = vmatprep.subr.mxu0 0.0
    %3349 = vmatpush1.msra.mxu0 0.0
    %3350 = vmatprep.subr.mxu0 0.0
    %3351 = vmatpush1.msra.mxu0 0.0
    %3352 = vmatprep.subr.mxu0 0.0
    %3353 = vmatpush1.msra.mxu0 0.0
    %3354 = vmatprep.subr.mxu0 0.0
    %3355 = vmatpush1.msra.mxu0 0.0
    %3356 = vmatprep.subr.mxu0 0.0
    %3357 = vmatpush1.msra.mxu0 0.0
    %3358 = vmatprep.subr.mxu0 0.0
    %3359 = vmatpush1.msra.mxu0 0.0
    %3360 = vmatprep.subr.mxu0 0.0
    %3361 = vmatpush1.msra.mxu0 0.0
    %3362 = vmatprep.subr.mxu0 0.0
    %3363 = vmatpush1.msra.mxu0 0.0
    %3364 = vmatprep.subr.mxu0 0.0
    %3365 = vmatpush1.msra.mxu0 0.0
    %3366 = vmatprep.subr.mxu0 0.0
    %3367 = vmatpush1.msra.mxu0 0.0
    %3368 = vmatprep.subr.mxu0 0.0
    %3369 = vmatpush1.msra.mxu0 0.0
    %3370 = vmatprep.subr.mxu0 0.0
    %3371 = vmatpush1.msra.mxu0 0.0
    %3372 = vmatprep.subr.mxu0 0.0
    %3373 = vmatpush1.msra.mxu0 %v3341
    %3374 = vmatprep.subr.mxu0 0.0
    %3375 = vmatpush2.msra.mxu0 0.0
    %3376 = vmatprep.subr.mxu0 0.0
    %3377 = vmatpush2.msra.mxu0 0.0
    %3378 = vmatprep.subr.mxu0 0.0
    %3379 = vmatpush2.msra.mxu0 0.0
    %3380 = vmatprep.subr.mxu0 0.0
    %3381 = vmatpush2.msra.mxu0 0.0
    %3382 = vmatprep.subr.mxu0 0.0
    %3383 = vmatpush2.msra.mxu0 0.0
    %3384 = vmatprep.subr.mxu0 0.0
    %3385 = vmatpush2.msra.mxu0 0.0
    %3386 = vmatprep.subr.mxu0 0.0
    %3387 = vmatpush2.msra.mxu0 0.0
    %3388 = vmatprep.subr.mxu0 0.0
    %3389 = vmatpush2.msra.mxu0 0.0
    %3390 = vmatprep.subr.mxu0 0.0
    %3391 = vmatpush2.msra.mxu0 0.0
    %3392 = vmatprep.subr.mxu0 0.0
    %3393 = vmatpush2.msra.mxu0 0.0
    %3394 = vmatprep.subr.mxu0 0.0
    %3395 = vmatpush2.msra.mxu0 0.0
    %3396 = vmatprep.subr.mxu0 0.0
    %3397 = vmatpush2.msra.mxu0 0.0
    %3398 = vmatprep.subr.mxu0 0.0
    %3399 = vmatpush2.msra.mxu0 0.0
    %3400 = vmatprep.subr.mxu0 0.0
    %3401 = vmatpush2.msra.mxu0 0.0
    %3402 = vmatprep.subr.mxu0 0.0
    %3403 = vmatpush2.msra.mxu0 0.0
    %3404 = vmatprep.subr.mxu0 0.0
    %3405 = vmatpush2.msra.mxu0 0.0
    %3406 = vmatprep.mubr.f32.mxu0 0.0
    %3407 = vmatmul.mubr.f32.gmra.mxu0 %v244
    %v3408 = vpop.f32.mrf.mxu0
    %v3409 = vadd.f32 0.0, %v3408
    %v3410 = vpop.f32.mrf.mxu0
    %3411 = vdwg.mxu0
    %v3412 = vmul.f32 %v3269, %v3409
    %v3413 = vsub.f32 %v3412, 0.125
    %v3414 = vand.u32 2147483647, %v3413
    %v3415 = vsel %vm318, %v3414, -inf
    %3416 = vmax.xlane.f32.xlu0 %v3415
    %v3417 = vpop.xlane.xlu0 %3416
    %v3418 = vrot.slane %v3417, 4
    %v3419 = vmax.f32 %v3417, %v3418
    %v3420 = vrot.slane %v3419, 2
    %v3421 = vmax.f32 %v3419, %v3420
    %v3422 = vrot.slane %v3421, 1
    %v3423 = vmax.f32 %v3421, %v3422
    %s3424 = vtos %v3423
    %p3425 = scmp.le.f32.partialorder %s3424, 1e-06
    %p3426 = por %p3263, %p3425
    %v3427 = vrcp.pop %v3409
    %v3428 = vmul.f32 %v3427, 0.125
    %s3429 = scalar_select %p3426, 1, 0
    %v3430 = vstv %s3429
    %vm3431 = vcmp.eq.s32.totalorder %v3430, 1
    %v3432 = vsel %vm3431, %v3269, %v3428
    %3434 = vset.pattern.permute.xlu0 0
    %3435 = vperm.xlu0 %3434, %v3341
    %v3436 = vpop.permute.xlu0 %3435
    %v3438 = vmul.f32 %v3436, %v135
    %3439 = vxpose.xlu0.b32.start [1/16] %v3432, 128
    %3440 = vxpose.xlu0.b32.cont [2/16] 0.0, 128
    %3441 = vxpose.xlu0.b32.cont [3/16] 0.0, 128
    %3442 = vxpose.xlu0.b32.cont [4/16] 0.0, 128
    %3443 = vxpose.xlu0.b32.cont [5/16] 0.0, 128
    %3444 = vxpose.xlu0.b32.cont [6/16] 0.0, 128
    %3445 = vxpose.xlu0.b32.cont [7/16] 0.0, 128
    %3446 = vxpose.xlu0.b32.cont [8/16] 0.0, 128
    %3447 = vxpose.xlu0.b32.cont [9/16] 0.0, 128
    %3448 = vxpose.xlu0.b32.cont [10/16] 0.0, 128
    %3449 = vxpose.xlu0.b32.cont [11/16] 0.0, 128
    %3450 = vxpose.xlu0.b32.cont [12/16] 0.0, 128
    %3451 = vxpose.xlu0.b32.cont [13/16] 0.0, 128
    %3452 = vxpose.xlu0.b32.cont [14/16] 0.0, 128
    %3453 = vxpose.xlu0.b32.cont [15/16] 0.0, 128
    %3454 = vxpose.xlu0.b32.end [16/16] 0.0, 128
    %v3455 = vpop.trf.xlu0
    %v3456 = vpop.trf.xlu0
    %v3457 = vpop.trf.xlu0
    %v3458 = vpop.trf.xlu0
    %v3459 = vpop.trf.xlu0
    %v3460 = vpop.trf.xlu0
    %v3461 = vpop.trf.xlu0
    %v3462 = vpop.trf.xlu0
    %v3463 = vpop.trf.xlu0
    %v3464 = vpop.trf.xlu0
    %v3465 = vpop.trf.xlu0
    %v3466 = vpop.trf.xlu0
    %v3467 = vpop.trf.xlu0
    %v3468 = vpop.trf.xlu0
    %v3469 = vpop.trf.xlu0
    %v3470 = vpop.trf.xlu0
    %v3471 = vlaneseq
    %v3472 = vshrl.u32 %v3471, 7
    %v3473 = vsub.s32 0, %v3472
    %v3474 = vrot.slane %v3455, %v3473
    %v3475 = vmul.f32 %v3438, %v3474
    %3476 = vst.msk [vmem:[#allocation8] sm:$0xff] %vm121, %v3475
    %v3477 = vmul.f32 %v3475, %v130
    %v3478 = vsel %vm121, %v3477, 0.0
    %3479 = vadd.xlane.f32.xlu0 %v3478
    %v3480 = vpop.xlane.xlu0 %3479
    %v3481 = vrot.slane %v3480, 4
    %v3482 = vadd.f32 %v3480, %v3481
    %v3483 = vrot.slane %v3482, 2
    %v3484 = vadd.f32 %v3482, %v3483
    %v3485 = vrot.slane %v3484, 1
    %v3486 = vadd.f32 %v3484, %v3485
    %s3487 = vtos %v3486
    %v3488 = vstv %s3487
    %vm3489 = vcmask 0
    %3490 = vst.msk [vmem:[#allocation7] sm:$0x1] %vm3489, %v3488
    // Predicated region
    $region18: #{tpu_custom_call.1} parent=1 // pred_check
      _
    $region19: #{tpu_custom_call.1} parent=1 // pred_check_branch
      %3492 = sbr.rel (0) target = $region21
    $region20: #{tpu_custom_call.1} parent=1 // pred_region
      %s3494 = ssub.s32 16, 16
      %3495 = vsyncadd [#allocation4], %s3494
      %s3497 = sshll.u32 [#allocation7], 4
      %s3498 = int_to_ptr.vmem [resolvable:$true] %s3497
      %3500 = dma.vmem_to_hbm [thread:$0]  %s3498, 16, %s2, [#allocation4]
    $region21: #{tpu_custom_call.1} parent=1 // pred_fallthru
      _
    // Predicated region
    $region22: #{tpu_custom_call.1} parent=1 // pred_check
      _
    $region23: #{tpu_custom_call.1} parent=1 // pred_check_branch
      %3502 = sbr.rel (0) target = $region25
    $region24: #{tpu_custom_call.1} parent=1 // pred_region
      %s3504 = ssub.s32 128, 128
      %3505 = vsyncadd [#allocation9], %s3504
      %s3507 = sshll.u32 [#allocation8], 4
      %s3508 = int_to_ptr.vmem [resolvable:$true] %s3507
      %3510 = dma.vmem_to_hbm [thread:$0]  %s3508, 128, %s3, [#allocation9]
    $region25: #{tpu_custom_call.1} parent=1 // pred_fallthru
      _
    // Predicated region
    $region26: #{tpu_custom_call.1} parent=1 // pred_check
      _
    $region27: #{tpu_custom_call.1} parent=1 // pred_check_branch
      %3512 = sbr.rel (0) target = $region29
    $region28: #{tpu_custom_call.1} parent=1 // pred_region
      %s3514 = ssub.s32 128, 128
      %3515 = vsyncadd [#allocation9], %s3514
      %s3517 = sshll.u32 [#allocation10], 4
      %s3518 = int_to_ptr.vmem [resolvable:$true] %s3517
      %3520 = dma.vmem_to_hbm [thread:$0]  %s3518, 128, %s4, [#allocation9]
    $region29: #{tpu_custom_call.1} parent=1 // pred_fallthru
      _
    // Predicated region
    $region30: #{tpu_custom_call.1} parent=1 // pred_check
      _
    $region31: #{tpu_custom_call.1} parent=1 // pred_check_branch
      %3522 = sbr.rel (0) target = $region33
    $region32: #{tpu_custom_call.1} parent=1 // pred_region
      %3523 = dma.done [#allocation4], 16
    $region33: #{tpu_custom_call.1} parent=1 // pred_fallthru
      _
    // Predicated region
    $region34: #{tpu_custom_call.1} parent=1 // pred_check
      _
    $region35: #{tpu_custom_call.1} parent=1 // pred_check_branch
      %3525 = sbr.rel (0) target = $region37
    $region36: #{tpu_custom_call.1} parent=1 // pred_region
      %3526 = dma.done [#allocation9], 128
    $region37: #{tpu_custom_call.1} parent=1 // pred_fallthru
      _
    // Predicated region
    $region38: #{tpu_custom_call.1} parent=1 // pred_check
      _
    $region39: #{tpu_custom_call.1} parent=1 // pred_check_branch
      %3528 = sbr.rel (0) target = $region41
    $region40: #{tpu_custom_call.1} parent=1 // pred_region
      %3529 = dma.done [#allocation9], 128
    $region41: #{tpu_custom_call.1} parent=1 // pred_fallthru
      _
    %3530 = vsyncpa [#allocation3], 1
    %3531 = vsyncpa [#allocation6], 1
    %3532 = vsyncpa [#allocation4], 1
    %3533 = vsyncpa [#allocation9], 1

</llo_original>
